<compile_context>
chip_gen: v7x
topology: tpu7x:2x2x1
jax: 0.10.0
libtpu: 0.0.40
codegen_flags: <defaults>
</compile_context>

<pallas_src>
import functools

import jax
import jax.numpy as jnp
from jax.experimental import pallas as pl
from jax.experimental.pallas import tpu as pltpu


def _round_up(n, m):
    return (n + m - 1) // m * m


# ---------------------------------------------------------------------------
# Kernel
# ---------------------------------------------------------------------------
def _msff_kernel(x_ref, w_ref, b_ref, out_ref, col_ref, cat_ref,
                 *, H, W, Cp, Mp, layers):
    """Fused MSFF forward for one grid step (Bblk images packed along lanes).

    x_ref   : (1, Cp, L)  f32   activations, L = Bblk*H*W lanes
    w_ref   : (Rtot, Wmax) f32  packed folded weights (static row offsets)
    b_ref   : (Rtot, 1)   f32   packed biases (same row offsets)
    out_ref : (1, Cp, L)  f32
    col_ref : (col_rows, L) bf16  im2col scratch (reused by every KxK conv)
    cat_ref : (4*Cp, L)   f32   branch-concat scratch for convmix 1x1
    layers  : static tuple of (row_off, rows, cols, k) per logical layer
    """
    L = x_ref.shape[-1]
    HW = H * W

    lane = jax.lax.broadcasted_iota(jnp.int32, (1, L), 1)
    li = lane & (HW - 1) if HW & (HW - 1) == 0 else lane % HW   # per-image idx
    if W & (W - 1) == 0:
        hh = li >> (W.bit_length() - 1)
        ww = li & (W - 1)
    else:
        hh = li // W
        ww = li - hh * W

    def wb(idx):
        off, rows, cols, k = layers[idx]
        w = w_ref[off:off + rows, 0:cols].astype(jnp.bfloat16)
        b = b_ref[off:off + rows, :]
        return w, b, k

    def dot_bias_relu(w_bf16, rhs_bf16, b):
        y = jnp.dot(w_bf16, rhs_bf16, preferred_element_type=jnp.float32)
        return jnp.maximum(y + b, 0.0)

    def conv1x1(v, idx):
        w, b, _ = wb(idx)
        return dot_bias_relu(w, v.astype(jnp.bfloat16), b)

    def convkxk(v, idx, cin):
        """'SAME' k x k conv via roll+mask im2col written into col_ref."""
        w, b, k = wb(idx)
        pad = (k - 1) // 2

        # Hoisted per-offset boundary masks (computed k+k times, not k*k).
        row_m = [(hh >= -(t - pad)) & (hh < H - (t - pad)) for t in range(k)]
        col_m = [(ww >= -(t - pad)) & (ww < W - (t - pad)) for t in range(k)]

        taps = [(kh - pad, kw - pad) for kh in range(k) for kw in range(k)]
        # Pair taps so every bf16 scratch store is a full 16-sublane tile.
        group = 1 if cin % 16 == 0 else 2
        for g0 in range(0, len(taps), group):
            chunk = taps[g0:g0 + group]
            pieces = []
            for dh, dw in chunk:
                s = dh * W + dw
                shifted = v if s == 0 else pltpu.roll(v, (-s) % L, axis=1)
                pieces.append(jnp.where(row_m[dh + pad] & col_m[dw + pad],
                                        shifted, 0.0))
            if group == 2 and len(chunk) == 1:       # keep the last store full
                pieces.append(jnp.zeros_like(pieces[0]))
            blk = pieces[0] if len(pieces) == 1 else jnp.concatenate(pieces, 0)
            col_ref[g0 * cin:g0 * cin + blk.shape[0], :] = blk.astype(jnp.bfloat16)

        im = col_ref[0:k * k * cin, :]               # (k*k*cin, L) bf16
        return dot_bias_relu(w, im, b)

    x = x_ref[0]                                     # (Cp, L) f32, lane-dense

    # Merged branch-entry 1x1 (conv1 + first 1x1 of conv2/3/4): one matmul.
    w0, b0, _ = wb(0)
    ent = dot_bias_relu(w0, x.astype(jnp.bfloat16), b0)   # (Cp + 3*Mp, L)

    cat_ref[0:Cp, :] = ent[0:Cp]                                    # y1
    y2 = conv1x1(convkxk(ent[Cp:Cp + Mp], 1, Mp), 2)                # 3x3 branch
    cat_ref[Cp:2 * Cp, :] = y2
    y3 = conv1x1(convkxk(ent[Cp + Mp:Cp + 2 * Mp], 3, Mp), 4)       # 5x5 branch
    cat_ref[2 * Cp:3 * Cp, :] = y3
    y4 = conv1x1(convkxk(ent[Cp + 2 * Mp:Cp + 3 * Mp], 5, Mp), 6)   # 7x7 branch
    cat_ref[3 * Cp:4 * Cp, :] = y4

    # convmix 1x1 over the channel-concat of the branches: ONE K=4*Cp matmul.
    w7, b7, _ = wb(7)
    z = dot_bias_relu(w7, cat_ref[...].astype(jnp.bfloat16), b7)    # (Cp, L)

    # convmix 3x3.
    out_ref[0] = convkxk(z, 8, Cp)


# ---------------------------------------------------------------------------
# Parameter construction / folding (wrapper side)
# ---------------------------------------------------------------------------
def make_conv_bn(key, k, cin, cout, eps=1e-5):
    """Conv2d(bias=False) weight (OIHW) + folded eval-mode BatchNorm affine."""
    kw_, kg, kb, km, kv = jax.random.split(key, 5)
    w = jax.random.normal(kw_, (cout, cin, k, k), jnp.float32) * 0.1
    gamma = jax.random.uniform(kg, (cout,), jnp.float32, 0.5, 1.5)
    beta = jax.random.normal(kb, (cout,), jnp.float32) * 0.1
    mean = jax.random.normal(km, (cout,), jnp.float32) * 0.1
    var = jax.random.uniform(kv, (cout,), jnp.float32, 0.5, 1.5)
    scale = gamma / jnp.sqrt(var + eps)
    bias = beta - mean * scale
    return {"w": w, "scale": scale, "bias": bias}


def init_msff_params(key, inchannel, mid_channel):
    keys = jax.random.split(key, 12)
    p = {}
    p["conv1"] = [make_conv_bn(keys[0], 1, inchannel, inchannel)]
    p["conv2"] = [make_conv_bn(keys[1], 1, inchannel, mid_channel),
                  make_conv_bn(keys[2], 3, mid_channel, mid_channel),
                  make_conv_bn(keys[3], 1, mid_channel, inchannel)]
    p["conv3"] = [make_conv_bn(keys[4], 1, inchannel, mid_channel),
                  make_conv_bn(keys[5], 5, mid_channel, mid_channel),
                  make_conv_bn(keys[6], 1, mid_channel, inchannel)]
    p["conv4"] = [make_conv_bn(keys[7], 1, inchannel, mid_channel),
                  make_conv_bn(keys[8], 7, mid_channel, mid_channel),
                  make_conv_bn(keys[9], 1, mid_channel, inchannel)]
    p["convmix"] = [make_conv_bn(keys[10], 1, 4 * inchannel, inchannel),
                    make_conv_bn(keys[11], 3, inchannel, inchannel)]
    return p


def _fold2d(lyr, cin_pad, cout_pad):
    """Fold BN scale into the conv weight; pad Cin (per tap) and Cout; flatten.

    Returns (w2d (cout_pad, k*k*cin_pad), b2d (cout_pad, 1), k); column order is
    tap-major (kh, kw) with Cin innermost, matching the in-kernel im2col.
    """
    w, scale, bias = lyr["w"], lyr["scale"], lyr["bias"]
    cout, cin, k, _ = w.shape
    wf = jnp.transpose(w, (0, 2, 3, 1))                       # (cout, k, k, cin)
    wf = jnp.pad(wf, ((0, cout_pad - cout), (0, 0), (0, 0), (0, cin_pad - cin)))
    scale_p = jnp.pad(scale, (0, cout_pad - cout))
    w2d = wf.reshape(cout_pad, k * k * cin_pad) * scale_p[:, None]
    b2d = jnp.pad(bias, (0, cout_pad - cout)).reshape(cout_pad, 1)
    return w2d.astype(jnp.float32), b2d.astype(jnp.float32), k


def _fold_mix1(lyr, C, Cp):
    """convmix 1x1: per-branch column blocks padded C->Cp (zero pad columns)."""
    w, scale, bias = lyr["w"], lyr["scale"], lyr["bias"]      # w: (C, 4C, 1, 1)
    w = w.reshape(C, 4 * C)
    blocks = [jnp.pad(w[:, i * C:(i + 1) * C], ((0, Cp - C), (0, Cp - C)))
              for i in range(4)]
    w2d = jnp.concatenate(blocks, axis=1) * jnp.pad(scale, (0, Cp - C))[:, None]
    b2d = jnp.pad(bias, (0, Cp - C)).reshape(Cp, 1)
    return w2d.astype(jnp.float32), b2d.astype(jnp.float32), 1


# ---------------------------------------------------------------------------
# Forward pass (single fused pallas_call)
# ---------------------------------------------------------------------------
def msff_forward(x_nchw, params, block_batch=None):
    B, C, H, W = x_nchw.shape
    HW = H * W
    mid = params["conv2"][0]["w"].shape[0]
    Cp = _round_up(C, 8)
    Mp = _round_up(mid, 8)

    # Images per grid step (batched along lanes); keep >=2 parallel steps
    # when possible (v7x megacore) and cap VMEM (v7x: 64 MiB physical).
    if block_batch is None:
        block_batch = max(1, B // 2)
        while B % block_batch:
            block_batch -= 1

    def _vmem_est(bb):
        l = bb * HW
        col = max(_round_up(49 * Mp, 16), _round_up(9 * Cp, 16)) * l * 2
        cat = 4 * Cp * l * 4
        io = 4 * Cp * l * 4                 # double-buffered in + out blocks
        return col + cat + io

    while block_batch > 1 and _vmem_est(block_batch) > 24 * 1024 * 1024:
        block_batch //= 2
    S = B // block_batch
    L = block_batch * HW

    # Input: pad channels to Cp, pack block_batch images along lanes.
    x2 = x_nchw.reshape(B, C, HW).astype(jnp.float32)
    x2 = jnp.pad(x2, ((0, 0), (0, Cp - C), (0, 0)))
    x2 = x2.reshape(S, block_batch, Cp, HW).transpose(0, 2, 1, 3)
    x2 = x2.reshape(S, Cp, L)

    # Pack all folded weights / biases into one weight slab + one bias slab.
    c1, = params["conv1"]
    c2a, c2b, c2c = params["conv2"]
    c3a, c3b, c3c = params["conv3"]
    c4a, c4b, c4c = params["conv4"]
    m1, m2 = params["convmix"]

    entry_parts = [_fold2d(c1, Cp, Cp), _fold2d(c2a, Cp, Mp),
                   _fold2d(c3a, Cp, Mp), _fold2d(c4a, Cp, Mp)]
    w_entry = jnp.concatenate([p[0] for p in entry_parts], axis=0)
    b_entry = jnp.concatenate([p[1] for p in entry_parts], axis=0)

    mats = [(w_entry, b_entry, 1),                 # 0: merged entry 1x1s
            _fold2d(c2b, Mp, Mp), _fold2d(c2c, Mp, Cp),   # 1,2: 3x3 branch
            _fold2d(c3b, Mp, Mp), _fold2d(c3c, Mp, Cp),   # 3,4: 5x5 branch
            _fold2d(c4b, Mp, Mp), _fold2d(c4c, Mp, Cp),   # 5,6: 7x7 branch
            _fold_mix1(m1, C, Cp),                        # 7 : convmix 1x1
            _fold2d(m2, Cp, Cp)]                          # 8 : convmix 3x3

    wmax = _round_up(max(int(w.shape[1]) for w, _, _ in mats), 128)
    layers, off = [], 0
    for w, _, k in mats:
        layers.append((off, int(w.shape[0]), int(w.shape[1]), int(k)))
        off += int(w.shape[0])
    rtot = off
    w_slab = jnp.concatenate(
        [jnp.pad(w, ((0, 0), (0, wmax - w.shape[1]))) for w, _, _ in mats], axis=0)
    b_slab = jnp.concatenate([b for _, b, _ in mats], axis=0)

    col_rows = max(_round_up(49 * Mp, 16), _round_up(9 * Cp, 16))

    kern = functools.partial(_msff_kernel, H=H, W=W, Cp=Cp, Mp=Mp,
                             layers=tuple(layers))
    out = pl.pallas_call(
        kern,
        out_shape=jax.ShapeDtypeStruct((S, Cp, L), jnp.float32),
        grid_spec=pltpu.PrefetchScalarGridSpec(
            num_scalar_prefetch=0,
            grid=(S,),
            in_specs=[
                pl.BlockSpec((1, Cp, L), lambda s: (s, 0, 0)),
                pl.BlockSpec((rtot, wmax), lambda s: (0, 0)),
                pl.BlockSpec((rtot, 1), lambda s: (0, 0)),
            ],
            out_specs=pl.BlockSpec((1, Cp, L), lambda s: (s, 0, 0)),
            scratch_shapes=[
                pltpu.VMEM((col_rows, L), jnp.bfloat16),   # im2col taps
                pltpu.VMEM((4 * Cp, L), jnp.float32),      # branch concat
            ],
        ),
        compiler_params=pltpu.CompilerParams(
            dimension_semantics=("parallel",),
            vmem_limit_bytes=48 * 1024 * 1024,   # 75% of v7x's 64 MiB
        ),
    )(x2, w_slab, b_slab)

    out = out.reshape(S, Cp, block_batch, HW).transpose(0, 2, 1, 3)
    return out.reshape(B, Cp, H, W)[:, :C]


# ---------------------------------------------------------------------------
# Pure-JAX reference (same eval-mode BN fold) for a correctness check
# ---------------------------------------------------------------------------
def msff_reference(x_nchw, params):
    def layer(x, lyr):
        y = jax.lax.conv_general_dilated(
            x, lyr["w"], window_strides=(1, 1), padding="SAME",
            dimension_numbers=("NCHW", "OIHW", "NCHW"),
            precision=jax.lax.Precision.HIGHEST)
        y = (y * lyr["scale"][None, :, None, None]
             + lyr["bias"][None, :, None, None])
        return jnp.maximum(y, 0.0)

    def chain(x, layers):
        for lyr in layers:
            x = layer(x, lyr)
        return x

    x = x_nchw.astype(jnp.float32)
    x1 = chain(x, params["conv1"])
    x2 = chain(x, params["conv2"])
    x3 = chain(x, params["conv3"])
    x4 = chain(x, params["conv4"])
    xf = jnp.concatenate([x1, x2, x3, x4], axis=1)
    return chain(xf, params["convmix"])


if __name__ == "__main__":
    B, C, H, W = 2, 4, 16, 16          # inchannel = 4
    MID = 8                            # mid_channel = 8

    key = jax.random.PRNGKey(0)
    kx, kp = jax.random.split(key)
    x = jax.random.normal(kx, (B, C, H, W), jnp.float32)
    params = init_msff_params(kp, C, MID)

    msff = jax.jit(msff_forward)
    out = jax.block_until_ready(msff(x, params))

    assert out.shape == (B, C, H, W), out.shape
    assert bool(jnp.all(jnp.isfinite(out)))

    ref = jax.block_until_ready(msff_reference(x, params))
    rel = float(jnp.linalg.norm(out - ref) / (jnp.linalg.norm(ref) + 1e-6))
    assert rel < 5e-2, f"relative error vs reference: {rel}"

    print("KERNEL_OK")
</pallas_src>

<mosaic_0001>
module attributes {stable_mosaic.version = 11 : i64} {
  func.func @_msff_kernel(%arg0: i32, %arg1: memref<1x8x256xf32, #tpu.memory_space<vmem>>, %arg2: memref<96x512xf32, #tpu.memory_space<vmem>>, %arg3: memref<96x1xf32, #tpu.memory_space<vmem>>, %arg4: memref<1x8x256xf32, #tpu.memory_space<vmem>>, %arg5: memref<400x256xbf16, #tpu.memory_space<vmem>>, %arg6: memref<32x256xf32, #tpu.memory_space<vmem>>) attributes {dimension_semantics = [#tpu.dimension_semantics<parallel>], iteration_bounds = array<i64: 2>, scalar_prefetch = 0 : i64, scratch_operands = 2 : i64, tpu.core_type = #tpu.core_type<tc>, window_params = [{transform_indices = @transform_0, window_bounds = array<i64: 1, 8, 256>}, {pipeline_mode = #tpu.pipeline_mode<synchronous>, transform_indices = @transform_1, window_bounds = array<i64: 96, 512>}, {pipeline_mode = #tpu.pipeline_mode<synchronous>, transform_indices = @transform_2, window_bounds = array<i64: 96, 1>}, {transform_indices = @transform_3, window_bounds = array<i64: 1, 8, 256>}]} {
    %0 = tpu.iota {dimensions = array<i32: 1>} : vector<1x256xi32>
    %c255_i32 = arith.constant 255 : i32
    %1 = vector.broadcast %c255_i32 : i32 to vector<1x256xi32>
    %2 = arith.andi %0, %1 : vector<1x256xi32>
    %c4_i32 = arith.constant 4 : i32
    %3 = vector.broadcast %c4_i32 : i32 to vector<1x256xi32>
    %4 = arith.shrsi %2, %3 : vector<1x256xi32>
    %c15_i32 = arith.constant 15 : i32
    %5 = vector.broadcast %c15_i32 : i32 to vector<1x256xi32>
    %6 = arith.andi %2, %5 : vector<1x256xi32>
    %c0 = arith.constant 0 : index
    %c0_0 = arith.constant 0 : index
    %c0_1 = arith.constant 0 : index
    %7 = vector.load %arg1[%c0, %c0_0, %c0_1] : memref<1x8x256xf32, #tpu.memory_space<vmem>>, vector<1x8x256xf32>
    %8 = vector.shape_cast %7 : vector<1x8x256xf32> to vector<8x256xf32>
    %c0_2 = arith.constant 0 : index
    %c0_3 = arith.constant 0 : index
    %9 = vector.load %arg2[%c0_2, %c0_3] : memref<96x512xf32, #tpu.memory_space<vmem>>, vector<32x8xf32>
    %10 = arith.truncf %9 : vector<32x8xf32> to vector<32x8xbf16>
    %c0_4 = arith.constant 0 : index
    %c0_5 = arith.constant 0 : index
    %11 = vector.load %arg3[%c0_4, %c0_5] : memref<96x1xf32, #tpu.memory_space<vmem>>, vector<32x1xf32>
    %12 = arith.truncf %8 : vector<8x256xf32> to vector<8x256xbf16>
    %cst = arith.constant dense<0.000000e+00> : vector<32x256xf32>
    %13 = tpu.matmul %10, %12, %cst {dimension_numbers = #tpu.dot_dimension_numbers<[1], [0], [0], [1], [0, 0, 1, 1], [], []>} : vector<32x8xbf16>, vector<8x256xbf16>, vector<32x256xf32> -> vector<32x256xf32>
    %14 = vector.broadcast %11 : vector<32x1xf32> to vector<32x256xf32>
    %15 = arith.addf %13, %14 : vector<32x256xf32>
    %cst_6 = arith.constant 0.000000e+00 : f32
    %16 = vector.broadcast %cst_6 : f32 to vector<32x256xf32>
    %17 = arith.maximumf %15, %16 : vector<32x256xf32>
    %18 = vector.extract_strided_slice %17 {offsets = [0, 0], sizes = [8, 256], strides = [1, 1]} : vector<32x256xf32> to vector<8x256xf32>
    %c0_7 = arith.constant 0 : index
    %c0_8 = arith.constant 0 : index
    %19 = vector.load %arg6[%c0_7, %c0_8] : memref<32x256xf32, #tpu.memory_space<vmem>>, vector<8x256xf32>
    tpu.vector_store %arg6[%c0_7, %c0_8], %18 {strides = array<i32>} : memref<32x256xf32, #tpu.memory_space<vmem>>, vector<8x256xf32>,
    %20 = vector.extract_strided_slice %17 {offsets = [8, 0], sizes = [8, 256], strides = [1, 1]} : vector<32x256xf32> to vector<8x256xf32>
    %c32 = arith.constant 32 : index
    %c0_9 = arith.constant 0 : index
    %21 = vector.load %arg2[%c32, %c0_9] : memref<96x512xf32, #tpu.memory_space<vmem>>, vector<8x72xf32>
    %22 = arith.truncf %21 : vector<8x72xf32> to vector<8x72xbf16>
    %c32_10 = arith.constant 32 : index
    %c0_11 = arith.constant 0 : index
    %23 = vector.load %arg3[%c32_10, %c0_11] : memref<96x1xf32, #tpu.memory_space<vmem>>, vector<8x1xf32>
    %c1_i32 = arith.constant 1 : i32
    %24 = vector.broadcast %c1_i32 : i32 to vector<1x256xi32>
    %25 = arith.cmpi sge, %4, %24 : vector<1x256xi32>
    %c17_i32 = arith.constant 17 : i32
    %26 = vector.broadcast %c17_i32 : i32 to vector<1x256xi32>
    %27 = arith.cmpi slt, %4, %26 : vector<1x256xi32>
    %28 = arith.andi %25, %27 : vector<1x256xi1>
    %c0_i32 = arith.constant 0 : i32
    %29 = vector.broadcast %c0_i32 : i32 to vector<1x256xi32>
    %30 = arith.cmpi sge, %4, %29 : vector<1x256xi32>
    %c16_i32 = arith.constant 16 : i32
    %31 = vector.broadcast %c16_i32 : i32 to vector<1x256xi32>
    %32 = arith.cmpi slt, %4, %31 : vector<1x256xi32>
    %33 = arith.andi %30, %32 : vector<1x256xi1>
    %c-1_i32 = arith.constant -1 : i32
    %34 = vector.broadcast %c-1_i32 : i32 to vector<1x256xi32>
    %35 = arith.cmpi sge, %4, %34 : vector<1x256xi32>
    %c15_i32_12 = arith.constant 15 : i32
    %36 = vector.broadcast %c15_i32_12 : i32 to vector<1x256xi32>
    %37 = arith.cmpi slt, %4, %36 : vector<1x256xi32>
    %38 = arith.andi %35, %37 : vector<1x256xi1>
    %c1_i32_13 = arith.constant 1 : i32
    %39 = vector.broadcast %c1_i32_13 : i32 to vector<1x256xi32>
    %40 = arith.cmpi sge, %6, %39 : vector<1x256xi32>
    %c17_i32_14 = arith.constant 17 : i32
    %41 = vector.broadcast %c17_i32_14 : i32 to vector<1x256xi32>
    %42 = arith.cmpi slt, %6, %41 : vector<1x256xi32>
    %43 = arith.andi %40, %42 : vector<1x256xi1>
    %c0_i32_15 = arith.constant 0 : i32
    %44 = vector.broadcast %c0_i32_15 : i32 to vector<1x256xi32>
    %45 = arith.cmpi sge, %6, %44 : vector<1x256xi32>
    %c16_i32_16 = arith.constant 16 : i32
    %46 = vector.broadcast %c16_i32_16 : i32 to vector<1x256xi32>
    %47 = arith.cmpi slt, %6, %46 : vector<1x256xi32>
    %48 = arith.andi %45, %47 : vector<1x256xi1>
    %c-1_i32_17 = arith.constant -1 : i32
    %49 = vector.broadcast %c-1_i32_17 : i32 to vector<1x256xi32>
    %50 = arith.cmpi sge, %6, %49 : vector<1x256xi32>
    %c15_i32_18 = arith.constant 15 : i32
    %51 = vector.broadcast %c15_i32_18 : i32 to vector<1x256xi32>
    %52 = arith.cmpi slt, %6, %51 : vector<1x256xi32>
    %53 = arith.andi %50, %52 : vector<1x256xi1>
    %c17_i32_19 = arith.constant 17 : i32
    %54 = tpu.dynamic_rotate %20 by %c17_i32_19 dim 1 : vector<8x256xf32>, i32 -> vector<8x256xf32>
    %55 = arith.andi %28, %43 : vector<1x256xi1>
    %cst_20 = arith.constant 0.000000e+00 : f32
    %56 = vector.shape_cast %55 : vector<1x256xi1> to vector<1x256xi1>
    %57 = vector.broadcast %56 : vector<1x256xi1> to vector<8x256xi1>
    %58 = vector.broadcast %cst_20 : f32 to vector<8x256xf32>
    %59 = arith.select %57, %54, %58 : vector<8x256xi1>, vector<8x256xf32>
    %c16_i32_21 = arith.constant 16 : i32
    %60 = tpu.dynamic_rotate %20 by %c16_i32_21 dim 1 : vector<8x256xf32>, i32 -> vector<8x256xf32>
    %61 = arith.andi %28, %48 : vector<1x256xi1>
    %cst_22 = arith.constant 0.000000e+00 : f32
    %62 = vector.shape_cast %61 : vector<1x256xi1> to vector<1x256xi1>
    %63 = vector.broadcast %62 : vector<1x256xi1> to vector<8x256xi1>
    %64 = vector.broadcast %cst_22 : f32 to vector<8x256xf32>
    %65 = arith.select %63, %60, %64 : vector<8x256xi1>, vector<8x256xf32>
    %66 = tpu.concatenate %59, %65 in 0 : vector<8x256xf32>, vector<8x256xf32> -> vector<16x256xf32>
    %67 = arith.truncf %66 : vector<16x256xf32> to vector<16x256xbf16>
    %c0_23 = arith.constant 0 : index
    %c0_24 = arith.constant 0 : index
    %68 = vector.load %arg5[%c0_23, %c0_24] : memref<400x256xbf16, #tpu.memory_space<vmem>>, vector<16x256xbf16>
    tpu.vector_store %arg5[%c0_23, %c0_24], %67 {strides = array<i32>} : memref<400x256xbf16, #tpu.memory_space<vmem>>, vector<16x256xbf16>,
    %c15_i32_25 = arith.constant 15 : i32
    %69 = tpu.dynamic_rotate %20 by %c15_i32_25 dim 1 : vector<8x256xf32>, i32 -> vector<8x256xf32>
    %70 = arith.andi %28, %53 : vector<1x256xi1>
    %cst_26 = arith.constant 0.000000e+00 : f32
    %71 = vector.shape_cast %70 : vector<1x256xi1> to vector<1x256xi1>
    %72 = vector.broadcast %71 : vector<1x256xi1> to vector<8x256xi1>
    %73 = vector.broadcast %cst_26 : f32 to vector<8x256xf32>
    %74 = arith.select %72, %69, %73 : vector<8x256xi1>, vector<8x256xf32>
    %c1_i32_27 = arith.constant 1 : i32
    %75 = tpu.dynamic_rotate %20 by %c1_i32_27 dim 1 : vector<8x256xf32>, i32 -> vector<8x256xf32>
    %76 = arith.andi %33, %43 : vector<1x256xi1>
    %cst_28 = arith.constant 0.000000e+00 : f32
    %77 = vector.shape_cast %76 : vector<1x256xi1> to vector<1x256xi1>
    %78 = vector.broadcast %77 : vector<1x256xi1> to vector<8x256xi1>
    %79 = vector.broadcast %cst_28 : f32 to vector<8x256xf32>
    %80 = arith.select %78, %75, %79 : vector<8x256xi1>, vector<8x256xf32>
    %81 = tpu.concatenate %74, %80 in 0 : vector<8x256xf32>, vector<8x256xf32> -> vector<16x256xf32>
    %82 = arith.truncf %81 : vector<16x256xf32> to vector<16x256xbf16>
    %c16 = arith.constant 16 : index
    %c0_29 = arith.constant 0 : index
    %83 = vector.load %arg5[%c16, %c0_29] : memref<400x256xbf16, #tpu.memory_space<vmem>>, vector<16x256xbf16>
    tpu.vector_store %arg5[%c16, %c0_29], %82 {strides = array<i32>} : memref<400x256xbf16, #tpu.memory_space<vmem>>, vector<16x256xbf16>,
    %84 = arith.andi %33, %48 : vector<1x256xi1>
    %cst_30 = arith.constant 0.000000e+00 : f32
    %85 = vector.shape_cast %84 : vector<1x256xi1> to vector<1x256xi1>
    %86 = vector.broadcast %85 : vector<1x256xi1> to vector<8x256xi1>
    %87 = vector.broadcast %cst_30 : f32 to vector<8x256xf32>
    %88 = arith.select %86, %20, %87 : vector<8x256xi1>, vector<8x256xf32>
    %c255_i32_31 = arith.constant 255 : i32
    %89 = tpu.dynamic_rotate %20 by %c255_i32_31 dim 1 : vector<8x256xf32>, i32 -> vector<8x256xf32>
    %90 = arith.andi %33, %53 : vector<1x256xi1>
    %cst_32 = arith.constant 0.000000e+00 : f32
    %91 = vector.shape_cast %90 : vector<1x256xi1> to vector<1x256xi1>
    %92 = vector.broadcast %91 : vector<1x256xi1> to vector<8x256xi1>
    %93 = vector.broadcast %cst_32 : f32 to vector<8x256xf32>
    %94 = arith.select %92, %89, %93 : vector<8x256xi1>, vector<8x256xf32>
    %95 = tpu.concatenate %88, %94 in 0 : vector<8x256xf32>, vector<8x256xf32> -> vector<16x256xf32>
    %96 = arith.truncf %95 : vector<16x256xf32> to vector<16x256xbf16>
    %c32_33 = arith.constant 32 : index
    %c0_34 = arith.constant 0 : index
    %97 = vector.load %arg5[%c32_33, %c0_34] : memref<400x256xbf16, #tpu.memory_space<vmem>>, vector<16x256xbf16>
    tpu.vector_store %arg5[%c32_33, %c0_34], %96 {strides = array<i32>} : memref<400x256xbf16, #tpu.memory_space<vmem>>, vector<16x256xbf16>,
    %c241_i32 = arith.constant 241 : i32
    %98 = tpu.dynamic_rotate %20 by %c241_i32 dim 1 : vector<8x256xf32>, i32 -> vector<8x256xf32>
    %99 = arith.andi %38, %43 : vector<1x256xi1>
    %cst_35 = arith.constant 0.000000e+00 : f32
    %100 = vector.shape_cast %99 : vector<1x256xi1> to vector<1x256xi1>
    %101 = vector.broadcast %100 : vector<1x256xi1> to vector<8x256xi1>
    %102 = vector.broadcast %cst_35 : f32 to vector<8x256xf32>
    %103 = arith.select %101, %98, %102 : vector<8x256xi1>, vector<8x256xf32>
    %c240_i32 = arith.constant 240 : i32
    %104 = tpu.dynamic_rotate %20 by %c240_i32 dim 1 : vector<8x256xf32>, i32 -> vector<8x256xf32>
    %105 = arith.andi %38, %48 : vector<1x256xi1>
    %cst_36 = arith.constant 0.000000e+00 : f32
    %106 = vector.shape_cast %105 : vector<1x256xi1> to vector<1x256xi1>
    %107 = vector.broadcast %106 : vector<1x256xi1> to vector<8x256xi1>
    %108 = vector.broadcast %cst_36 : f32 to vector<8x256xf32>
    %109 = arith.select %107, %104, %108 : vector<8x256xi1>, vector<8x256xf32>
    %110 = tpu.concatenate %103, %109 in 0 : vector<8x256xf32>, vector<8x256xf32> -> vector<16x256xf32>
    %111 = arith.truncf %110 : vector<16x256xf32> to vector<16x256xbf16>
    %c48 = arith.constant 48 : index
    %c0_37 = arith.constant 0 : index
    %112 = vector.load %arg5[%c48, %c0_37] : memref<400x256xbf16, #tpu.memory_space<vmem>>, vector<16x256xbf16>
    tpu.vector_store %arg5[%c48, %c0_37], %111 {strides = array<i32>} : memref<400x256xbf16, #tpu.memory_space<vmem>>, vector<16x256xbf16>,
    %c239_i32 = arith.constant 239 : i32
    %113 = tpu.dynamic_rotate %20 by %c239_i32 dim 1 : vector<8x256xf32>, i32 -> vector<8x256xf32>
    %114 = arith.andi %38, %53 : vector<1x256xi1>
    %cst_38 = arith.constant 0.000000e+00 : f32
    %115 = vector.shape_cast %114 : vector<1x256xi1> to vector<1x256xi1>
    %116 = vector.broadcast %115 : vector<1x256xi1> to vector<8x256xi1>
    %117 = vector.broadcast %cst_38 : f32 to vector<8x256xf32>
    %118 = arith.select %116, %113, %117 : vector<8x256xi1>, vector<8x256xf32>
    %cst_39 = arith.constant 0.000000e+00 : f32
    %119 = vector.broadcast %cst_39 : f32 to vector<8x256xf32>
    %120 = tpu.concatenate %118, %119 in 0 : vector<8x256xf32>, vector<8x256xf32> -> vector<16x256xf32>
    %121 = arith.truncf %120 : vector<16x256xf32> to vector<16x256xbf16>
    %c64 = arith.constant 64 : index
    %c0_40 = arith.constant 0 : index
    %122 = vector.load %arg5[%c64, %c0_40] : memref<400x256xbf16, #tpu.memory_space<vmem>>, vector<16x256xbf16>
    tpu.vector_store %arg5[%c64, %c0_40], %121 {strides = array<i32>} : memref<400x256xbf16, #tpu.memory_space<vmem>>, vector<16x256xbf16>,
    %c0_41 = arith.constant 0 : index
    %c0_42 = arith.constant 0 : index
    %123 = vector.load %arg5[%c0_41, %c0_42] : memref<400x256xbf16, #tpu.memory_space<vmem>>, vector<72x256xbf16>
    %cst_43 = arith.constant dense<0.000000e+00> : vector<8x256xf32>
    %124 = tpu.matmul %22, %123, %cst_43 {dimension_numbers = #tpu.dot_dimension_numbers<[1], [0], [0], [1], [0, 0, 1, 1], [], []>} : vector<8x72xbf16>, vector<72x256xbf16>, vector<8x256xf32> -> vector<8x256xf32>
    %125 = vector.broadcast %23 : vector<8x1xf32> to vector<8x256xf32>
    %126 = arith.addf %124, %125 : vector<8x256xf32>
    %cst_44 = arith.constant 0.000000e+00 : f32
    %127 = vector.broadcast %cst_44 : f32 to vector<8x256xf32>
    %128 = arith.maximumf %126, %127 : vector<8x256xf32>
    %c40 = arith.constant 40 : index
    %c0_45 = arith.constant 0 : index
    %129 = vector.load %arg2[%c40, %c0_45] : memref<96x512xf32, #tpu.memory_space<vmem>>, vector<8x8xf32>
    %130 = arith.truncf %129 : vector<8x8xf32> to vector<8x8xbf16>
    %c40_46 = arith.constant 40 : index
    %c0_47 = arith.constant 0 : index
    %131 = vector.load %arg3[%c40_46, %c0_47] : memref<96x1xf32, #tpu.memory_space<vmem>>, vector<8x1xf32>
    %132 = arith.truncf %128 : vector<8x256xf32> to vector<8x256xbf16>
    %cst_48 = arith.constant dense<0.000000e+00> : vector<8x256xf32>
    %133 = tpu.matmul %130, %132, %cst_48 {dimension_numbers = #tpu.dot_dimension_numbers<[1], [0], [0], [1], [0, 0, 1, 1], [], []>} : vector<8x8xbf16>, vector<8x256xbf16>, vector<8x256xf32> -> vector<8x256xf32>
    %134 = vector.broadcast %131 : vector<8x1xf32> to vector<8x256xf32>
    %135 = arith.addf %133, %134 : vector<8x256xf32>
    %cst_49 = arith.constant 0.000000e+00 : f32
    %136 = vector.broadcast %cst_49 : f32 to vector<8x256xf32>
    %137 = arith.maximumf %135, %136 : vector<8x256xf32>
    %c8 = arith.constant 8 : index
    %c0_50 = arith.constant 0 : index
    %138 = vector.load %arg6[%c8, %c0_50] : memref<32x256xf32, #tpu.memory_space<vmem>>, vector<8x256xf32>
    tpu.vector_store %arg6[%c8, %c0_50], %137 {strides = array<i32>} : memref<32x256xf32, #tpu.memory_space<vmem>>, vector<8x256xf32>,
    %139 = vector.extract_strided_slice %17 {offsets = [16, 0], sizes = [8, 256], strides = [1, 1]} : vector<32x256xf32> to vector<8x256xf32>
    %c48_51 = arith.constant 48 : index
    %c0_52 = arith.constant 0 : index
    %140 = vector.load %arg2[%c48_51, %c0_52] : memref<96x512xf32, #tpu.memory_space<vmem>>, vector<8x200xf32>
    %141 = arith.truncf %140 : vector<8x200xf32> to vector<8x200xbf16>
    %c48_53 = arith.constant 48 : index
    %c0_54 = arith.constant 0 : index
    %142 = vector.load %arg3[%c48_53, %c0_54] : memref<96x1xf32, #tpu.memory_space<vmem>>, vector<8x1xf32>
    %c2_i32 = arith.constant 2 : i32
    %143 = vector.broadcast %c2_i32 : i32 to vector<1x256xi32>
    %144 = arith.cmpi sge, %4, %143 : vector<1x256xi32>
    %c18_i32 = arith.constant 18 : i32
    %145 = vector.broadcast %c18_i32 : i32 to vector<1x256xi32>
    %146 = arith.cmpi slt, %4, %145 : vector<1x256xi32>
    %147 = arith.andi %144, %146 : vector<1x256xi1>
    %c1_i32_55 = arith.constant 1 : i32
    %148 = vector.broadcast %c1_i32_55 : i32 to vector<1x256xi32>
    %149 = arith.cmpi sge, %4, %148 : vector<1x256xi32>
    %c17_i32_56 = arith.constant 17 : i32
    %150 = vector.broadcast %c17_i32_56 : i32 to vector<1x256xi32>
    %151 = arith.cmpi slt, %4, %150 : vector<1x256xi32>
    %152 = arith.andi %149, %151 : vector<1x256xi1>
    %c0_i32_57 = arith.constant 0 : i32
    %153 = vector.broadcast %c0_i32_57 : i32 to vector<1x256xi32>
    %154 = arith.cmpi sge, %4, %153 : vector<1x256xi32>
    %c16_i32_58 = arith.constant 16 : i32
    %155 = vector.broadcast %c16_i32_58 : i32 to vector<1x256xi32>
    %156 = arith.cmpi slt, %4, %155 : vector<1x256xi32>
    %157 = arith.andi %154, %156 : vector<1x256xi1>
    %c-1_i32_59 = arith.constant -1 : i32
    %158 = vector.broadcast %c-1_i32_59 : i32 to vector<1x256xi32>
    %159 = arith.cmpi sge, %4, %158 : vector<1x256xi32>
    %c15_i32_60 = arith.constant 15 : i32
    %160 = vector.broadcast %c15_i32_60 : i32 to vector<1x256xi32>
    %161 = arith.cmpi slt, %4, %160 : vector<1x256xi32>
    %162 = arith.andi %159, %161 : vector<1x256xi1>
    %c-2_i32 = arith.constant -2 : i32
    %163 = vector.broadcast %c-2_i32 : i32 to vector<1x256xi32>
    %164 = arith.cmpi sge, %4, %163 : vector<1x256xi32>
    %c14_i32 = arith.constant 14 : i32
    %165 = vector.broadcast %c14_i32 : i32 to vector<1x256xi32>
    %166 = arith.cmpi slt, %4, %165 : vector<1x256xi32>
    %167 = arith.andi %164, %166 : vector<1x256xi1>
    %c2_i32_61 = arith.constant 2 : i32
    %168 = vector.broadcast %c2_i32_61 : i32 to vector<1x256xi32>
    %169 = arith.cmpi sge, %6, %168 : vector<1x256xi32>
    %c18_i32_62 = arith.constant 18 : i32
    %170 = vector.broadcast %c18_i32_62 : i32 to vector<1x256xi32>
    %171 = arith.cmpi slt, %6, %170 : vector<1x256xi32>
    %172 = arith.andi %169, %171 : vector<1x256xi1>
    %c1_i32_63 = arith.constant 1 : i32
    %173 = vector.broadcast %c1_i32_63 : i32 to vector<1x256xi32>
    %174 = arith.cmpi sge, %6, %173 : vector<1x256xi32>
    %c17_i32_64 = arith.constant 17 : i32
    %175 = vector.broadcast %c17_i32_64 : i32 to vector<1x256xi32>
    %176 = arith.cmpi slt, %6, %175 : vector<1x256xi32>
    %177 = arith.andi %174, %176 : vector<1x256xi1>
    %c0_i32_65 = arith.constant 0 : i32
    %178 = vector.broadcast %c0_i32_65 : i32 to vector<1x256xi32>
    %179 = arith.cmpi sge, %6, %178 : vector<1x256xi32>
    %c16_i32_66 = arith.constant 16 : i32
    %180 = vector.broadcast %c16_i32_66 : i32 to vector<1x256xi32>
    %181 = arith.cmpi slt, %6, %180 : vector<1x256xi32>
    %182 = arith.andi %179, %181 : vector<1x256xi1>
    %c-1_i32_67 = arith.constant -1 : i32
    %183 = vector.broadcast %c-1_i32_67 : i32 to vector<1x256xi32>
    %184 = arith.cmpi sge, %6, %183 : vector<1x256xi32>
    %c15_i32_68 = arith.constant 15 : i32
    %185 = vector.broadcast %c15_i32_68 : i32 to vector<1x256xi32>
    %186 = arith.cmpi slt, %6, %185 : vector<1x256xi32>
    %187 = arith.andi %184, %186 : vector<1x256xi1>
    %c-2_i32_69 = arith.constant -2 : i32
    %188 = vector.broadcast %c-2_i32_69 : i32 to vector<1x256xi32>
    %189 = arith.cmpi sge, %6, %188 : vector<1x256xi32>
    %c14_i32_70 = arith.constant 14 : i32
    %190 = vector.broadcast %c14_i32_70 : i32 to vector<1x256xi32>
    %191 = arith.cmpi slt, %6, %190 : vector<1x256xi32>
    %192 = arith.andi %189, %191 : vector<1x256xi1>
    %c34_i32 = arith.constant 34 : i32
    %193 = tpu.dynamic_rotate %139 by %c34_i32 dim 1 : vector<8x256xf32>, i32 -> vector<8x256xf32>
    %194 = arith.andi %147, %172 : vector<1x256xi1>
    %cst_71 = arith.constant 0.000000e+00 : f32
    %195 = vector.shape_cast %194 : vector<1x256xi1> to vector<1x256xi1>
    %196 = vector.broadcast %195 : vector<1x256xi1> to vector<8x256xi1>
    %197 = vector.broadcast %cst_71 : f32 to vector<8x256xf32>
    %198 = arith.select %196, %193, %197 : vector<8x256xi1>, vector<8x256xf32>
    %c33_i32 = arith.constant 33 : i32
    %199 = tpu.dynamic_rotate %139 by %c33_i32 dim 1 : vector<8x256xf32>, i32 -> vector<8x256xf32>
    %200 = arith.andi %147, %177 : vector<1x256xi1>
    %cst_72 = arith.constant 0.000000e+00 : f32
    %201 = vector.shape_cast %200 : vector<1x256xi1> to vector<1x256xi1>
    %202 = vector.broadcast %201 : vector<1x256xi1> to vector<8x256xi1>
    %203 = vector.broadcast %cst_72 : f32 to vector<8x256xf32>
    %204 = arith.select %202, %199, %203 : vector<8x256xi1>, vector<8x256xf32>
    %205 = tpu.concatenate %198, %204 in 0 : vector<8x256xf32>, vector<8x256xf32> -> vector<16x256xf32>
    %206 = arith.truncf %205 : vector<16x256xf32> to vector<16x256xbf16>
    %c0_73 = arith.constant 0 : index
    %c0_74 = arith.constant 0 : index
    %207 = vector.load %arg5[%c0_73, %c0_74] : memref<400x256xbf16, #tpu.memory_space<vmem>>, vector<16x256xbf16>
    tpu.vector_store %arg5[%c0_73, %c0_74], %206 {strides = array<i32>} : memref<400x256xbf16, #tpu.memory_space<vmem>>, vector<16x256xbf16>,
    %c32_i32 = arith.constant 32 : i32
    %208 = tpu.dynamic_rotate %139 by %c32_i32 dim 1 : vector<8x256xf32>, i32 -> vector<8x256xf32>
    %209 = arith.andi %147, %182 : vector<1x256xi1>
    %cst_75 = arith.constant 0.000000e+00 : f32
    %210 = vector.shape_cast %209 : vector<1x256xi1> to vector<1x256xi1>
    %211 = vector.broadcast %210 : vector<1x256xi1> to vector<8x256xi1>
    %212 = vector.broadcast %cst_75 : f32 to vector<8x256xf32>
    %213 = arith.select %211, %208, %212 : vector<8x256xi1>, vector<8x256xf32>
    %c31_i32 = arith.constant 31 : i32
    %214 = tpu.dynamic_rotate %139 by %c31_i32 dim 1 : vector<8x256xf32>, i32 -> vector<8x256xf32>
    %215 = arith.andi %147, %187 : vector<1x256xi1>
    %cst_76 = arith.constant 0.000000e+00 : f32
    %216 = vector.shape_cast %215 : vector<1x256xi1> to vector<1x256xi1>
    %217 = vector.broadcast %216 : vector<1x256xi1> to vector<8x256xi1>
    %218 = vector.broadcast %cst_76 : f32 to vector<8x256xf32>
    %219 = arith.select %217, %214, %218 : vector<8x256xi1>, vector<8x256xf32>
    %220 = tpu.concatenate %213, %219 in 0 : vector<8x256xf32>, vector<8x256xf32> -> vector<16x256xf32>
    %221 = arith.truncf %220 : vector<16x256xf32> to vector<16x256xbf16>
    %c16_77 = arith.constant 16 : index
    %c0_78 = arith.constant 0 : index
    %222 = vector.load %arg5[%c16_77, %c0_78] : memref<400x256xbf16, #tpu.memory_space<vmem>>, vector<16x256xbf16>
    tpu.vector_store %arg5[%c16_77, %c0_78], %221 {strides = array<i32>} : memref<400x256xbf16, #tpu.memory_space<vmem>>, vector<16x256xbf16>,
    %c30_i32 = arith.constant 30 : i32
    %223 = tpu.dynamic_rotate %139 by %c30_i32 dim 1 : vector<8x256xf32>, i32 -> vector<8x256xf32>
    %224 = arith.andi %147, %192 : vector<1x256xi1>
    %cst_79 = arith.constant 0.000000e+00 : f32
    %225 = vector.shape_cast %224 : vector<1x256xi1> to vector<1x256xi1>
    %226 = vector.broadcast %225 : vector<1x256xi1> to vector<8x256xi1>
    %227 = vector.broadcast %cst_79 : f32 to vector<8x256xf32>
    %228 = arith.select %226, %223, %227 : vector<8x256xi1>, vector<8x256xf32>
    %c18_i32_80 = arith.constant 18 : i32
    %229 = tpu.dynamic_rotate %139 by %c18_i32_80 dim 1 : vector<8x256xf32>, i32 -> vector<8x256xf32>
    %230 = arith.andi %152, %172 : vector<1x256xi1>
    %cst_81 = arith.constant 0.000000e+00 : f32
    %231 = vector.shape_cast %230 : vector<1x256xi1> to vector<1x256xi1>
    %232 = vector.broadcast %231 : vector<1x256xi1> to vector<8x256xi1>
    %233 = vector.broadcast %cst_81 : f32 to vector<8x256xf32>
    %234 = arith.select %232, %229, %233 : vector<8x256xi1>, vector<8x256xf32>
    %235 = tpu.concatenate %228, %234 in 0 : vector<8x256xf32>, vector<8x256xf32> -> vector<16x256xf32>
    %236 = arith.truncf %235 : vector<16x256xf32> to vector<16x256xbf16>
    %c32_82 = arith.constant 32 : index
    %c0_83 = arith.constant 0 : index
    %237 = vector.load %arg5[%c32_82, %c0_83] : memref<400x256xbf16, #tpu.memory_space<vmem>>, vector<16x256xbf16>
    tpu.vector_store %arg5[%c32_82, %c0_83], %236 {strides = array<i32>} : memref<400x256xbf16, #tpu.memory_space<vmem>>, vector<16x256xbf16>,
    %c17_i32_84 = arith.constant 17 : i32
    %238 = tpu.dynamic_rotate %139 by %c17_i32_84 dim 1 : vector<8x256xf32>, i32 -> vector<8x256xf32>
    %239 = arith.andi %152, %177 : vector<1x256xi1>
    %cst_85 = arith.constant 0.000000e+00 : f32
    %240 = vector.shape_cast %239 : vector<1x256xi1> to vector<1x256xi1>
    %241 = vector.broadcast %240 : vector<1x256xi1> to vector<8x256xi1>
    %242 = vector.broadcast %cst_85 : f32 to vector<8x256xf32>
    %243 = arith.select %241, %238, %242 : vector<8x256xi1>, vector<8x256xf32>
    %c16_i32_86 = arith.constant 16 : i32
    %244 = tpu.dynamic_rotate %139 by %c16_i32_86 dim 1 : vector<8x256xf32>, i32 -> vector<8x256xf32>
    %245 = arith.andi %152, %182 : vector<1x256xi1>
    %cst_87 = arith.constant 0.000000e+00 : f32
    %246 = vector.shape_cast %245 : vector<1x256xi1> to vector<1x256xi1>
    %247 = vector.broadcast %246 : vector<1x256xi1> to vector<8x256xi1>
    %248 = vector.broadcast %cst_87 : f32 to vector<8x256xf32>
    %249 = arith.select %247, %244, %248 : vector<8x256xi1>, vector<8x256xf32>
    %250 = tpu.concatenate %243, %249 in 0 : vector<8x256xf32>, vector<8x256xf32> -> vector<16x256xf32>
    %251 = arith.truncf %250 : vector<16x256xf32> to vector<16x256xbf16>
    %c48_88 = arith.constant 48 : index
    %c0_89 = arith.constant 0 : index
    %252 = vector.load %arg5[%c48_88, %c0_89] : memref<400x256xbf16, #tpu.memory_space<vmem>>, vector<16x256xbf16>
    tpu.vector_store %arg5[%c48_88, %c0_89], %251 {strides = array<i32>} : memref<400x256xbf16, #tpu.memory_space<vmem>>, vector<16x256xbf16>,
    %c15_i32_90 = arith.constant 15 : i32
    %253 = tpu.dynamic_rotate %139 by %c15_i32_90 dim 1 : vector<8x256xf32>, i32 -> vector<8x256xf32>
    %254 = arith.andi %152, %187 : vector<1x256xi1>
    %cst_91 = arith.constant 0.000000e+00 : f32
    %255 = vector.shape_cast %254 : vector<1x256xi1> to vector<1x256xi1>
    %256 = vector.broadcast %255 : vector<1x256xi1> to vector<8x256xi1>
    %257 = vector.broadcast %cst_91 : f32 to vector<8x256xf32>
    %258 = arith.select %256, %253, %257 : vector<8x256xi1>, vector<8x256xf32>
    %c14_i32_92 = arith.constant 14 : i32
    %259 = tpu.dynamic_rotate %139 by %c14_i32_92 dim 1 : vector<8x256xf32>, i32 -> vector<8x256xf32>
    %260 = arith.andi %152, %192 : vector<1x256xi1>
    %cst_93 = arith.constant 0.000000e+00 : f32
    %261 = vector.shape_cast %260 : vector<1x256xi1> to vector<1x256xi1>
    %262 = vector.broadcast %261 : vector<1x256xi1> to vector<8x256xi1>
    %263 = vector.broadcast %cst_93 : f32 to vector<8x256xf32>
    %264 = arith.select %262, %259, %263 : vector<8x256xi1>, vector<8x256xf32>
    %265 = tpu.concatenate %258, %264 in 0 : vector<8x256xf32>, vector<8x256xf32> -> vector<16x256xf32>
    %266 = arith.truncf %265 : vector<16x256xf32> to vector<16x256xbf16>
    %c64_94 = arith.constant 64 : index
    %c0_95 = arith.constant 0 : index
    %267 = vector.load %arg5[%c64_94, %c0_95] : memref<400x256xbf16, #tpu.memory_space<vmem>>, vector<16x256xbf16>
    tpu.vector_store %arg5[%c64_94, %c0_95], %266 {strides = array<i32>} : memref<400x256xbf16, #tpu.memory_space<vmem>>, vector<16x256xbf16>,
    %c2_i32_96 = arith.constant 2 : i32
    %268 = tpu.dynamic_rotate %139 by %c2_i32_96 dim 1 : vector<8x256xf32>, i32 -> vector<8x256xf32>
    %269 = arith.andi %157, %172 : vector<1x256xi1>
    %cst_97 = arith.constant 0.000000e+00 : f32
    %270 = vector.shape_cast %269 : vector<1x256xi1> to vector<1x256xi1>
    %271 = vector.broadcast %270 : vector<1x256xi1> to vector<8x256xi1>
    %272 = vector.broadcast %cst_97 : f32 to vector<8x256xf32>
    %273 = arith.select %271, %268, %272 : vector<8x256xi1>, vector<8x256xf32>
    %c1_i32_98 = arith.constant 1 : i32
    %274 = tpu.dynamic_rotate %139 by %c1_i32_98 dim 1 : vector<8x256xf32>, i32 -> vector<8x256xf32>
    %275 = arith.andi %157, %177 : vector<1x256xi1>
    %cst_99 = arith.constant 0.000000e+00 : f32
    %276 = vector.shape_cast %275 : vector<1x256xi1> to vector<1x256xi1>
    %277 = vector.broadcast %276 : vector<1x256xi1> to vector<8x256xi1>
    %278 = vector.broadcast %cst_99 : f32 to vector<8x256xf32>
    %279 = arith.select %277, %274, %278 : vector<8x256xi1>, vector<8x256xf32>
    %280 = tpu.concatenate %273, %279 in 0 : vector<8x256xf32>, vector<8x256xf32> -> vector<16x256xf32>
    %281 = arith.truncf %280 : vector<16x256xf32> to vector<16x256xbf16>
    %c80 = arith.constant 80 : index
    %c0_100 = arith.constant 0 : index
    %282 = vector.load %arg5[%c80, %c0_100] : memref<400x256xbf16, #tpu.memory_space<vmem>>, vector<16x256xbf16>
    tpu.vector_store %arg5[%c80, %c0_100], %281 {strides = array<i32>} : memref<400x256xbf16, #tpu.memory_space<vmem>>, vector<16x256xbf16>,
    %283 = arith.andi %157, %182 : vector<1x256xi1>
    %cst_101 = arith.constant 0.000000e+00 : f32
    %284 = vector.shape_cast %283 : vector<1x256xi1> to vector<1x256xi1>
    %285 = vector.broadcast %284 : vector<1x256xi1> to vector<8x256xi1>
    %286 = vector.broadcast %cst_101 : f32 to vector<8x256xf32>
    %287 = arith.select %285, %139, %286 : vector<8x256xi1>, vector<8x256xf32>
    %c255_i32_102 = arith.constant 255 : i32
    %288 = tpu.dynamic_rotate %139 by %c255_i32_102 dim 1 : vector<8x256xf32>, i32 -> vector<8x256xf32>
    %289 = arith.andi %157, %187 : vector<1x256xi1>
    %cst_103 = arith.constant 0.000000e+00 : f32
    %290 = vector.shape_cast %289 : vector<1x256xi1> to vector<1x256xi1>
    %291 = vector.broadcast %290 : vector<1x256xi1> to vector<8x256xi1>
    %292 = vector.broadcast %cst_103 : f32 to vector<8x256xf32>
    %293 = arith.select %291, %288, %292 : vector<8x256xi1>, vector<8x256xf32>
    %294 = tpu.concatenate %287, %293 in 0 : vector<8x256xf32>, vector<8x256xf32> -> vector<16x256xf32>
    %295 = arith.truncf %294 : vector<16x256xf32> to vector<16x256xbf16>
    %c96 = arith.constant 96 : index
    %c0_104 = arith.constant 0 : index
    %296 = vector.load %arg5[%c96, %c0_104] : memref<400x256xbf16, #tpu.memory_space<vmem>>, vector<16x256xbf16>
    tpu.vector_store %arg5[%c96, %c0_104], %295 {strides = array<i32>} : memref<400x256xbf16, #tpu.memory_space<vmem>>, vector<16x256xbf16>,
    %c254_i32 = arith.constant 254 : i32
    %297 = tpu.dynamic_rotate %139 by %c254_i32 dim 1 : vector<8x256xf32>, i32 -> vector<8x256xf32>
    %298 = arith.andi %157, %192 : vector<1x256xi1>
    %cst_105 = arith.constant 0.000000e+00 : f32
    %299 = vector.shape_cast %298 : vector<1x256xi1> to vector<1x256xi1>
    %300 = vector.broadcast %299 : vector<1x256xi1> to vector<8x256xi1>
    %301 = vector.broadcast %cst_105 : f32 to vector<8x256xf32>
    %302 = arith.select %300, %297, %301 : vector<8x256xi1>, vector<8x256xf32>
    %c242_i32 = arith.constant 242 : i32
    %303 = tpu.dynamic_rotate %139 by %c242_i32 dim 1 : vector<8x256xf32>, i32 -> vector<8x256xf32>
    %304 = arith.andi %162, %172 : vector<1x256xi1>
    %cst_106 = arith.constant 0.000000e+00 : f32
    %305 = vector.shape_cast %304 : vector<1x256xi1> to vector<1x256xi1>
    %306 = vector.broadcast %305 : vector<1x256xi1> to vector<8x256xi1>
    %307 = vector.broadcast %cst_106 : f32 to vector<8x256xf32>
    %308 = arith.select %306, %303, %307 : vector<8x256xi1>, vector<8x256xf32>
    %309 = tpu.concatenate %302, %308 in 0 : vector<8x256xf32>, vector<8x256xf32> -> vector<16x256xf32>
    %310 = arith.truncf %309 : vector<16x256xf32> to vector<16x256xbf16>
    %c112 = arith.constant 112 : index
    %c0_107 = arith.constant 0 : index
    %311 = vector.load %arg5[%c112, %c0_107] : memref<400x256xbf16, #tpu.memory_space<vmem>>, vector<16x256xbf16>
    tpu.vector_store %arg5[%c112, %c0_107], %310 {strides = array<i32>} : memref<400x256xbf16, #tpu.memory_space<vmem>>, vector<16x256xbf16>,
    %c241_i32_108 = arith.constant 241 : i32
    %312 = tpu.dynamic_rotate %139 by %c241_i32_108 dim 1 : vector<8x256xf32>, i32 -> vector<8x256xf32>
    %313 = arith.andi %162, %177 : vector<1x256xi1>
    %cst_109 = arith.constant 0.000000e+00 : f32
    %314 = vector.shape_cast %313 : vector<1x256xi1> to vector<1x256xi1>
    %315 = vector.broadcast %314 : vector<1x256xi1> to vector<8x256xi1>
    %316 = vector.broadcast %cst_109 : f32 to vector<8x256xf32>
    %317 = arith.select %315, %312, %316 : vector<8x256xi1>, vector<8x256xf32>
    %c240_i32_110 = arith.constant 240 : i32
    %318 = tpu.dynamic_rotate %139 by %c240_i32_110 dim 1 : vector<8x256xf32>, i32 -> vector<8x256xf32>
    %319 = arith.andi %162, %182 : vector<1x256xi1>
    %cst_111 = arith.constant 0.000000e+00 : f32
    %320 = vector.shape_cast %319 : vector<1x256xi1> to vector<1x256xi1>
    %321 = vector.broadcast %320 : vector<1x256xi1> to vector<8x256xi1>
    %322 = vector.broadcast %cst_111 : f32 to vector<8x256xf32>
    %323 = arith.select %321, %318, %322 : vector<8x256xi1>, vector<8x256xf32>
    %324 = tpu.concatenate %317, %323 in 0 : vector<8x256xf32>, vector<8x256xf32> -> vector<16x256xf32>
    %325 = arith.truncf %324 : vector<16x256xf32> to vector<16x256xbf16>
    %c128 = arith.constant 128 : index
    %c0_112 = arith.constant 0 : index
    %326 = vector.load %arg5[%c128, %c0_112] : memref<400x256xbf16, #tpu.memory_space<vmem>>, vector<16x256xbf16>
    tpu.vector_store %arg5[%c128, %c0_112], %325 {strides = array<i32>} : memref<400x256xbf16, #tpu.memory_space<vmem>>, vector<16x256xbf16>,
    %c239_i32_113 = arith.constant 239 : i32
    %327 = tpu.dynamic_rotate %139 by %c239_i32_113 dim 1 : vector<8x256xf32>, i32 -> vector<8x256xf32>
    %328 = arith.andi %162, %187 : vector<1x256xi1>
    %cst_114 = arith.constant 0.000000e+00 : f32
    %329 = vector.shape_cast %328 : vector<1x256xi1> to vector<1x256xi1>
    %330 = vector.broadcast %329 : vector<1x256xi1> to vector<8x256xi1>
    %331 = vector.broadcast %cst_114 : f32 to vector<8x256xf32>
    %332 = arith.select %330, %327, %331 : vector<8x256xi1>, vector<8x256xf32>
    %c238_i32 = arith.constant 238 : i32
    %333 = tpu.dynamic_rotate %139 by %c238_i32 dim 1 : vector<8x256xf32>, i32 -> vector<8x256xf32>
    %334 = arith.andi %162, %192 : vector<1x256xi1>
    %cst_115 = arith.constant 0.000000e+00 : f32
    %335 = vector.shape_cast %334 : vector<1x256xi1> to vector<1x256xi1>
    %336 = vector.broadcast %335 : vector<1x256xi1> to vector<8x256xi1>
    %337 = vector.broadcast %cst_115 : f32 to vector<8x256xf32>
    %338 = arith.select %336, %333, %337 : vector<8x256xi1>, vector<8x256xf32>
    %339 = tpu.concatenate %332, %338 in 0 : vector<8x256xf32>, vector<8x256xf32> -> vector<16x256xf32>
    %340 = arith.truncf %339 : vector<16x256xf32> to vector<16x256xbf16>
    %c144 = arith.constant 144 : index
    %c0_116 = arith.constant 0 : index
    %341 = vector.load %arg5[%c144, %c0_116] : memref<400x256xbf16, #tpu.memory_space<vmem>>, vector<16x256xbf16>
    tpu.vector_store %arg5[%c144, %c0_116], %340 {strides = array<i32>} : memref<400x256xbf16, #tpu.memory_space<vmem>>, vector<16x256xbf16>,
    %c226_i32 = arith.constant 226 : i32
    %342 = tpu.dynamic_rotate %139 by %c226_i32 dim 1 : vector<8x256xf32>, i32 -> vector<8x256xf32>
    %343 = arith.andi %167, %172 : vector<1x256xi1>
    %cst_117 = arith.constant 0.000000e+00 : f32
    %344 = vector.shape_cast %343 : vector<1x256xi1> to vector<1x256xi1>
    %345 = vector.broadcast %344 : vector<1x256xi1> to vector<8x256xi1>
    %346 = vector.broadcast %cst_117 : f32 to vector<8x256xf32>
    %347 = arith.select %345, %342, %346 : vector<8x256xi1>, vector<8x256xf32>
    %c225_i32 = arith.constant 225 : i32
    %348 = tpu.dynamic_rotate %139 by %c225_i32 dim 1 : vector<8x256xf32>, i32 -> vector<8x256xf32>
    %349 = arith.andi %167, %177 : vector<1x256xi1>
    %cst_118 = arith.constant 0.000000e+00 : f32
    %350 = vector.shape_cast %349 : vector<1x256xi1> to vector<1x256xi1>
    %351 = vector.broadcast %350 : vector<1x256xi1> to vector<8x256xi1>
    %352 = vector.broadcast %cst_118 : f32 to vector<8x256xf32>
    %353 = arith.select %351, %348, %352 : vector<8x256xi1>, vector<8x256xf32>
    %354 = tpu.concatenate %347, %353 in 0 : vector<8x256xf32>, vector<8x256xf32> -> vector<16x256xf32>
    %355 = arith.truncf %354 : vector<16x256xf32> to vector<16x256xbf16>
    %c160 = arith.constant 160 : index
    %c0_119 = arith.constant 0 : index
    %356 = vector.load %arg5[%c160, %c0_119] : memref<400x256xbf16, #tpu.memory_space<vmem>>, vector<16x256xbf16>
    tpu.vector_store %arg5[%c160, %c0_119], %355 {strides = array<i32>} : memref<400x256xbf16, #tpu.memory_space<vmem>>, vector<16x256xbf16>,
    %c224_i32 = arith.constant 224 : i32
    %357 = tpu.dynamic_rotate %139 by %c224_i32 dim 1 : vector<8x256xf32>, i32 -> vector<8x256xf32>
    %358 = arith.andi %167, %182 : vector<1x256xi1>
    %cst_120 = arith.constant 0.000000e+00 : f32
    %359 = vector.shape_cast %358 : vector<1x256xi1> to vector<1x256xi1>
    %360 = vector.broadcast %359 : vector<1x256xi1> to vector<8x256xi1>
    %361 = vector.broadcast %cst_120 : f32 to vector<8x256xf32>
    %362 = arith.select %360, %357, %361 : vector<8x256xi1>, vector<8x256xf32>
    %c223_i32 = arith.constant 223 : i32
    %363 = tpu.dynamic_rotate %139 by %c223_i32 dim 1 : vector<8x256xf32>, i32 -> vector<8x256xf32>
    %364 = arith.andi %167, %187 : vector<1x256xi1>
    %cst_121 = arith.constant 0.000000e+00 : f32
    %365 = vector.shape_cast %364 : vector<1x256xi1> to vector<1x256xi1>
    %366 = vector.broadcast %365 : vector<1x256xi1> to vector<8x256xi1>
    %367 = vector.broadcast %cst_121 : f32 to vector<8x256xf32>
    %368 = arith.select %366, %363, %367 : vector<8x256xi1>, vector<8x256xf32>
    %369 = tpu.concatenate %362, %368 in 0 : vector<8x256xf32>, vector<8x256xf32> -> vector<16x256xf32>
    %370 = arith.truncf %369 : vector<16x256xf32> to vector<16x256xbf16>
    %c176 = arith.constant 176 : index
    %c0_122 = arith.constant 0 : index
    %371 = vector.load %arg5[%c176, %c0_122] : memref<400x256xbf16, #tpu.memory_space<vmem>>, vector<16x256xbf16>
    tpu.vector_store %arg5[%c176, %c0_122], %370 {strides = array<i32>} : memref<400x256xbf16, #tpu.memory_space<vmem>>, vector<16x256xbf16>,
    %c222_i32 = arith.constant 222 : i32
    %372 = tpu.dynamic_rotate %139 by %c222_i32 dim 1 : vector<8x256xf32>, i32 -> vector<8x256xf32>
    %373 = arith.andi %167, %192 : vector<1x256xi1>
    %cst_123 = arith.constant 0.000000e+00 : f32
    %374 = vector.shape_cast %373 : vector<1x256xi1> to vector<1x256xi1>
    %375 = vector.broadcast %374 : vector<1x256xi1> to vector<8x256xi1>
    %376 = vector.broadcast %cst_123 : f32 to vector<8x256xf32>
    %377 = arith.select %375, %372, %376 : vector<8x256xi1>, vector<8x256xf32>
    %cst_124 = arith.constant 0.000000e+00 : f32
    %378 = vector.broadcast %cst_124 : f32 to vector<8x256xf32>
    %379 = tpu.concatenate %377, %378 in 0 : vector<8x256xf32>, vector<8x256xf32> -> vector<16x256xf32>
    %380 = arith.truncf %379 : vector<16x256xf32> to vector<16x256xbf16>
    %c192 = arith.constant 192 : index
    %c0_125 = arith.constant 0 : index
    %381 = vector.load %arg5[%c192, %c0_125] : memref<400x256xbf16, #tpu.memory_space<vmem>>, vector<16x256xbf16>
    tpu.vector_store %arg5[%c192, %c0_125], %380 {strides = array<i32>} : memref<400x256xbf16, #tpu.memory_space<vmem>>, vector<16x256xbf16>,
    %c0_126 = arith.constant 0 : index
    %c0_127 = arith.constant 0 : index
    %382 = vector.load %arg5[%c0_126, %c0_127] : memref<400x256xbf16, #tpu.memory_space<vmem>>, vector<200x256xbf16>
    %cst_128 = arith.constant dense<0.000000e+00> : vector<8x256xf32>
    %383 = tpu.matmul %141, %382, %cst_128 {dimension_numbers = #tpu.dot_dimension_numbers<[1], [0], [0], [1], [0, 0, 1, 1], [], []>} : vector<8x200xbf16>, vector<200x256xbf16>, vector<8x256xf32> -> vector<8x256xf32>
    %384 = vector.broadcast %142 : vector<8x1xf32> to vector<8x256xf32>
    %385 = arith.addf %383, %384 : vector<8x256xf32>
    %cst_129 = arith.constant 0.000000e+00 : f32
    %386 = vector.broadcast %cst_129 : f32 to vector<8x256xf32>
    %387 = arith.maximumf %385, %386 : vector<8x256xf32>
    %c56 = arith.constant 56 : index
    %c0_130 = arith.constant 0 : index
    %388 = vector.load %arg2[%c56, %c0_130] : memref<96x512xf32, #tpu.memory_space<vmem>>, vector<8x8xf32>
    %389 = arith.truncf %388 : vector<8x8xf32> to vector<8x8xbf16>
    %c56_131 = arith.constant 56 : index
    %c0_132 = arith.constant 0 : index
    %390 = vector.load %arg3[%c56_131, %c0_132] : memref<96x1xf32, #tpu.memory_space<vmem>>, vector<8x1xf32>
    %391 = arith.truncf %387 : vector<8x256xf32> to vector<8x256xbf16>
    %cst_133 = arith.constant dense<0.000000e+00> : vector<8x256xf32>
    %392 = tpu.matmul %389, %391, %cst_133 {dimension_numbers = #tpu.dot_dimension_numbers<[1], [0], [0], [1], [0, 0, 1, 1], [], []>} : vector<8x8xbf16>, vector<8x256xbf16>, vector<8x256xf32> -> vector<8x256xf32>
    %393 = vector.broadcast %390 : vector<8x1xf32> to vector<8x256xf32>
    %394 = arith.addf %392, %393 : vector<8x256xf32>
    %cst_134 = arith.constant 0.000000e+00 : f32
    %395 = vector.broadcast %cst_134 : f32 to vector<8x256xf32>
    %396 = arith.maximumf %394, %395 : vector<8x256xf32>
    %c16_135 = arith.constant 16 : index
    %c0_136 = arith.constant 0 : index
    %397 = vector.load %arg6[%c16_135, %c0_136] : memref<32x256xf32, #tpu.memory_space<vmem>>, vector<8x256xf32>
    tpu.vector_store %arg6[%c16_135, %c0_136], %396 {strides = array<i32>} : memref<32x256xf32, #tpu.memory_space<vmem>>, vector<8x256xf32>,
    %398 = vector.extract_strided_slice %17 {offsets = [24, 0], sizes = [8, 256], strides = [1, 1]} : vector<32x256xf32> to vector<8x256xf32>
    %c64_137 = arith.constant 64 : index
    %c0_138 = arith.constant 0 : index
    %399 = vector.load %arg2[%c64_137, %c0_138] : memref<96x512xf32, #tpu.memory_space<vmem>>, vector<8x392xf32>
    %400 = arith.truncf %399 : vector<8x392xf32> to vector<8x392xbf16>
    %c64_139 = arith.constant 64 : index
    %c0_140 = arith.constant 0 : index
    %401 = vector.load %arg3[%c64_139, %c0_140] : memref<96x1xf32, #tpu.memory_space<vmem>>, vector<8x1xf32>
    %c3_i32 = arith.constant 3 : i32
    %402 = vector.broadcast %c3_i32 : i32 to vector<1x256xi32>
    %403 = arith.cmpi sge, %4, %402 : vector<1x256xi32>
    %c19_i32 = arith.constant 19 : i32
    %404 = vector.broadcast %c19_i32 : i32 to vector<1x256xi32>
    %405 = arith.cmpi slt, %4, %404 : vector<1x256xi32>
    %406 = arith.andi %403, %405 : vector<1x256xi1>
    %c2_i32_141 = arith.constant 2 : i32
    %407 = vector.broadcast %c2_i32_141 : i32 to vector<1x256xi32>
    %408 = arith.cmpi sge, %4, %407 : vector<1x256xi32>
    %c18_i32_142 = arith.constant 18 : i32
    %409 = vector.broadcast %c18_i32_142 : i32 to vector<1x256xi32>
    %410 = arith.cmpi slt, %4, %409 : vector<1x256xi32>
    %411 = arith.andi %408, %410 : vector<1x256xi1>
    %c1_i32_143 = arith.constant 1 : i32
    %412 = vector.broadcast %c1_i32_143 : i32 to vector<1x256xi32>
    %413 = arith.cmpi sge, %4, %412 : vector<1x256xi32>
    %c17_i32_144 = arith.constant 17 : i32
    %414 = vector.broadcast %c17_i32_144 : i32 to vector<1x256xi32>
    %415 = arith.cmpi slt, %4, %414 : vector<1x256xi32>
    %416 = arith.andi %413, %415 : vector<1x256xi1>
    %c0_i32_145 = arith.constant 0 : i32
    %417 = vector.broadcast %c0_i32_145 : i32 to vector<1x256xi32>
    %418 = arith.cmpi sge, %4, %417 : vector<1x256xi32>
    %c16_i32_146 = arith.constant 16 : i32
    %419 = vector.broadcast %c16_i32_146 : i32 to vector<1x256xi32>
    %420 = arith.cmpi slt, %4, %419 : vector<1x256xi32>
    %421 = arith.andi %418, %420 : vector<1x256xi1>
    %c-1_i32_147 = arith.constant -1 : i32
    %422 = vector.broadcast %c-1_i32_147 : i32 to vector<1x256xi32>
    %423 = arith.cmpi sge, %4, %422 : vector<1x256xi32>
    %c15_i32_148 = arith.constant 15 : i32
    %424 = vector.broadcast %c15_i32_148 : i32 to vector<1x256xi32>
    %425 = arith.cmpi slt, %4, %424 : vector<1x256xi32>
    %426 = arith.andi %423, %425 : vector<1x256xi1>
    %c-2_i32_149 = arith.constant -2 : i32
    %427 = vector.broadcast %c-2_i32_149 : i32 to vector<1x256xi32>
    %428 = arith.cmpi sge, %4, %427 : vector<1x256xi32>
    %c14_i32_150 = arith.constant 14 : i32
    %429 = vector.broadcast %c14_i32_150 : i32 to vector<1x256xi32>
    %430 = arith.cmpi slt, %4, %429 : vector<1x256xi32>
    %431 = arith.andi %428, %430 : vector<1x256xi1>
    %c-3_i32 = arith.constant -3 : i32
    %432 = vector.broadcast %c-3_i32 : i32 to vector<1x256xi32>
    %433 = arith.cmpi sge, %4, %432 : vector<1x256xi32>
    %c13_i32 = arith.constant 13 : i32
    %434 = vector.broadcast %c13_i32 : i32 to vector<1x256xi32>
    %435 = arith.cmpi slt, %4, %434 : vector<1x256xi32>
    %436 = arith.andi %433, %435 : vector<1x256xi1>
    %c3_i32_151 = arith.constant 3 : i32
    %437 = vector.broadcast %c3_i32_151 : i32 to vector<1x256xi32>
    %438 = arith.cmpi sge, %6, %437 : vector<1x256xi32>
    %c19_i32_152 = arith.constant 19 : i32
    %439 = vector.broadcast %c19_i32_152 : i32 to vector<1x256xi32>
    %440 = arith.cmpi slt, %6, %439 : vector<1x256xi32>
    %441 = arith.andi %438, %440 : vector<1x256xi1>
    %c2_i32_153 = arith.constant 2 : i32
    %442 = vector.broadcast %c2_i32_153 : i32 to vector<1x256xi32>
    %443 = arith.cmpi sge, %6, %442 : vector<1x256xi32>
    %c18_i32_154 = arith.constant 18 : i32
    %444 = vector.broadcast %c18_i32_154 : i32 to vector<1x256xi32>
    %445 = arith.cmpi slt, %6, %444 : vector<1x256xi32>
    %446 = arith.andi %443, %445 : vector<1x256xi1>
    %c1_i32_155 = arith.constant 1 : i32
    %447 = vector.broadcast %c1_i32_155 : i32 to vector<1x256xi32>
    %448 = arith.cmpi sge, %6, %447 : vector<1x256xi32>
    %c17_i32_156 = arith.constant 17 : i32
    %449 = vector.broadcast %c17_i32_156 : i32 to vector<1x256xi32>
    %450 = arith.cmpi slt, %6, %449 : vector<1x256xi32>
    %451 = arith.andi %448, %450 : vector<1x256xi1>
    %c0_i32_157 = arith.constant 0 : i32
    %452 = vector.broadcast %c0_i32_157 : i32 to vector<1x256xi32>
    %453 = arith.cmpi sge, %6, %452 : vector<1x256xi32>
    %c16_i32_158 = arith.constant 16 : i32
    %454 = vector.broadcast %c16_i32_158 : i32 to vector<1x256xi32>
    %455 = arith.cmpi slt, %6, %454 : vector<1x256xi32>
    %456 = arith.andi %453, %455 : vector<1x256xi1>
    %c-1_i32_159 = arith.constant -1 : i32
    %457 = vector.broadcast %c-1_i32_159 : i32 to vector<1x256xi32>
    %458 = arith.cmpi sge, %6, %457 : vector<1x256xi32>
    %c15_i32_160 = arith.constant 15 : i32
    %459 = vector.broadcast %c15_i32_160 : i32 to vector<1x256xi32>
    %460 = arith.cmpi slt, %6, %459 : vector<1x256xi32>
    %461 = arith.andi %458, %460 : vector<1x256xi1>
    %c-2_i32_161 = arith.constant -2 : i32
    %462 = vector.broadcast %c-2_i32_161 : i32 to vector<1x256xi32>
    %463 = arith.cmpi sge, %6, %462 : vector<1x256xi32>
    %c14_i32_162 = arith.constant 14 : i32
    %464 = vector.broadcast %c14_i32_162 : i32 to vector<1x256xi32>
    %465 = arith.cmpi slt, %6, %464 : vector<1x256xi32>
    %466 = arith.andi %463, %465 : vector<1x256xi1>
    %c-3_i32_163 = arith.constant -3 : i32
    %467 = vector.broadcast %c-3_i32_163 : i32 to vector<1x256xi32>
    %468 = arith.cmpi sge, %6, %467 : vector<1x256xi32>
    %c13_i32_164 = arith.constant 13 : i32
    %469 = vector.broadcast %c13_i32_164 : i32 to vector<1x256xi32>
    %470 = arith.cmpi slt, %6, %469 : vector<1x256xi32>
    %471 = arith.andi %468, %470 : vector<1x256xi1>
    %c51_i32 = arith.constant 51 : i32
    %472 = tpu.dynamic_rotate %398 by %c51_i32 dim 1 : vector<8x256xf32>, i32 -> vector<8x256xf32>
    %473 = arith.andi %406, %441 : vector<1x256xi1>
    %cst_165 = arith.constant 0.000000e+00 : f32
    %474 = vector.shape_cast %473 : vector<1x256xi1> to vector<1x256xi1>
    %475 = vector.broadcast %474 : vector<1x256xi1> to vector<8x256xi1>
    %476 = vector.broadcast %cst_165 : f32 to vector<8x256xf32>
    %477 = arith.select %475, %472, %476 : vector<8x256xi1>, vector<8x256xf32>
    %c50_i32 = arith.constant 50 : i32
    %478 = tpu.dynamic_rotate %398 by %c50_i32 dim 1 : vector<8x256xf32>, i32 -> vector<8x256xf32>
    %479 = arith.andi %406, %446 : vector<1x256xi1>
    %cst_166 = arith.constant 0.000000e+00 : f32
    %480 = vector.shape_cast %479 : vector<1x256xi1> to vector<1x256xi1>
    %481 = vector.broadcast %480 : vector<1x256xi1> to vector<8x256xi1>
    %482 = vector.broadcast %cst_166 : f32 to vector<8x256xf32>
    %483 = arith.select %481, %478, %482 : vector<8x256xi1>, vector<8x256xf32>
    %484 = tpu.concatenate %477, %483 in 0 : vector<8x256xf32>, vector<8x256xf32> -> vector<16x256xf32>
    %485 = arith.truncf %484 : vector<16x256xf32> to vector<16x256xbf16>
    %c0_167 = arith.constant 0 : index
    %c0_168 = arith.constant 0 : index
    %486 = vector.load %arg5[%c0_167, %c0_168] : memref<400x256xbf16, #tpu.memory_space<vmem>>, vector<16x256xbf16>
    tpu.vector_store %arg5[%c0_167, %c0_168], %485 {strides = array<i32>} : memref<400x256xbf16, #tpu.memory_space<vmem>>, vector<16x256xbf16>,
    %c49_i32 = arith.constant 49 : i32
    %487 = tpu.dynamic_rotate %398 by %c49_i32 dim 1 : vector<8x256xf32>, i32 -> vector<8x256xf32>
    %488 = arith.andi %406, %451 : vector<1x256xi1>
    %cst_169 = arith.constant 0.000000e+00 : f32
    %489 = vector.shape_cast %488 : vector<1x256xi1> to vector<1x256xi1>
    %490 = vector.broadcast %489 : vector<1x256xi1> to vector<8x256xi1>
    %491 = vector.broadcast %cst_169 : f32 to vector<8x256xf32>
    %492 = arith.select %490, %487, %491 : vector<8x256xi1>, vector<8x256xf32>
    %c48_i32 = arith.constant 48 : i32
    %493 = tpu.dynamic_rotate %398 by %c48_i32 dim 1 : vector<8x256xf32>, i32 -> vector<8x256xf32>
    %494 = arith.andi %406, %456 : vector<1x256xi1>
    %cst_170 = arith.constant 0.000000e+00 : f32
    %495 = vector.shape_cast %494 : vector<1x256xi1> to vector<1x256xi1>
    %496 = vector.broadcast %495 : vector<1x256xi1> to vector<8x256xi1>
    %497 = vector.broadcast %cst_170 : f32 to vector<8x256xf32>
    %498 = arith.select %496, %493, %497 : vector<8x256xi1>, vector<8x256xf32>
    %499 = tpu.concatenate %492, %498 in 0 : vector<8x256xf32>, vector<8x256xf32> -> vector<16x256xf32>
    %500 = arith.truncf %499 : vector<16x256xf32> to vector<16x256xbf16>
    %c16_171 = arith.constant 16 : index
    %c0_172 = arith.constant 0 : index
    %501 = vector.load %arg5[%c16_171, %c0_172] : memref<400x256xbf16, #tpu.memory_space<vmem>>, vector<16x256xbf16>
    tpu.vector_store %arg5[%c16_171, %c0_172], %500 {strides = array<i32>} : memref<400x256xbf16, #tpu.memory_space<vmem>>, vector<16x256xbf16>,
    %c47_i32 = arith.constant 47 : i32
    %502 = tpu.dynamic_rotate %398 by %c47_i32 dim 1 : vector<8x256xf32>, i32 -> vector<8x256xf32>
    %503 = arith.andi %406, %461 : vector<1x256xi1>
    %cst_173 = arith.constant 0.000000e+00 : f32
    %504 = vector.shape_cast %503 : vector<1x256xi1> to vector<1x256xi1>
    %505 = vector.broadcast %504 : vector<1x256xi1> to vector<8x256xi1>
    %506 = vector.broadcast %cst_173 : f32 to vector<8x256xf32>
    %507 = arith.select %505, %502, %506 : vector<8x256xi1>, vector<8x256xf32>
    %c46_i32 = arith.constant 46 : i32
    %508 = tpu.dynamic_rotate %398 by %c46_i32 dim 1 : vector<8x256xf32>, i32 -> vector<8x256xf32>
    %509 = arith.andi %406, %466 : vector<1x256xi1>
    %cst_174 = arith.constant 0.000000e+00 : f32
    %510 = vector.shape_cast %509 : vector<1x256xi1> to vector<1x256xi1>
    %511 = vector.broadcast %510 : vector<1x256xi1> to vector<8x256xi1>
    %512 = vector.broadcast %cst_174 : f32 to vector<8x256xf32>
    %513 = arith.select %511, %508, %512 : vector<8x256xi1>, vector<8x256xf32>
    %514 = tpu.concatenate %507, %513 in 0 : vector<8x256xf32>, vector<8x256xf32> -> vector<16x256xf32>
    %515 = arith.truncf %514 : vector<16x256xf32> to vector<16x256xbf16>
    %c32_175 = arith.constant 32 : index
    %c0_176 = arith.constant 0 : index
    %516 = vector.load %arg5[%c32_175, %c0_176] : memref<400x256xbf16, #tpu.memory_space<vmem>>, vector<16x256xbf16>
    tpu.vector_store %arg5[%c32_175, %c0_176], %515 {strides = array<i32>} : memref<400x256xbf16, #tpu.memory_space<vmem>>, vector<16x256xbf16>,
    %c45_i32 = arith.constant 45 : i32
    %517 = tpu.dynamic_rotate %398 by %c45_i32 dim 1 : vector<8x256xf32>, i32 -> vector<8x256xf32>
    %518 = arith.andi %406, %471 : vector<1x256xi1>
    %cst_177 = arith.constant 0.000000e+00 : f32
    %519 = vector.shape_cast %518 : vector<1x256xi1> to vector<1x256xi1>
    %520 = vector.broadcast %519 : vector<1x256xi1> to vector<8x256xi1>
    %521 = vector.broadcast %cst_177 : f32 to vector<8x256xf32>
    %522 = arith.select %520, %517, %521 : vector<8x256xi1>, vector<8x256xf32>
    %c35_i32 = arith.constant 35 : i32
    %523 = tpu.dynamic_rotate %398 by %c35_i32 dim 1 : vector<8x256xf32>, i32 -> vector<8x256xf32>
    %524 = arith.andi %411, %441 : vector<1x256xi1>
    %cst_178 = arith.constant 0.000000e+00 : f32
    %525 = vector.shape_cast %524 : vector<1x256xi1> to vector<1x256xi1>
    %526 = vector.broadcast %525 : vector<1x256xi1> to vector<8x256xi1>
    %527 = vector.broadcast %cst_178 : f32 to vector<8x256xf32>
    %528 = arith.select %526, %523, %527 : vector<8x256xi1>, vector<8x256xf32>
    %529 = tpu.concatenate %522, %528 in 0 : vector<8x256xf32>, vector<8x256xf32> -> vector<16x256xf32>
    %530 = arith.truncf %529 : vector<16x256xf32> to vector<16x256xbf16>
    %c48_179 = arith.constant 48 : index
    %c0_180 = arith.constant 0 : index
    %531 = vector.load %arg5[%c48_179, %c0_180] : memref<400x256xbf16, #tpu.memory_space<vmem>>, vector<16x256xbf16>
    tpu.vector_store %arg5[%c48_179, %c0_180], %530 {strides = array<i32>} : memref<400x256xbf16, #tpu.memory_space<vmem>>, vector<16x256xbf16>,
    %c34_i32_181 = arith.constant 34 : i32
    %532 = tpu.dynamic_rotate %398 by %c34_i32_181 dim 1 : vector<8x256xf32>, i32 -> vector<8x256xf32>
    %533 = arith.andi %411, %446 : vector<1x256xi1>
    %cst_182 = arith.constant 0.000000e+00 : f32
    %534 = vector.shape_cast %533 : vector<1x256xi1> to vector<1x256xi1>
    %535 = vector.broadcast %534 : vector<1x256xi1> to vector<8x256xi1>
    %536 = vector.broadcast %cst_182 : f32 to vector<8x256xf32>
    %537 = arith.select %535, %532, %536 : vector<8x256xi1>, vector<8x256xf32>
    %c33_i32_183 = arith.constant 33 : i32
    %538 = tpu.dynamic_rotate %398 by %c33_i32_183 dim 1 : vector<8x256xf32>, i32 -> vector<8x256xf32>
    %539 = arith.andi %411, %451 : vector<1x256xi1>
    %cst_184 = arith.constant 0.000000e+00 : f32
    %540 = vector.shape_cast %539 : vector<1x256xi1> to vector<1x256xi1>
    %541 = vector.broadcast %540 : vector<1x256xi1> to vector<8x256xi1>
    %542 = vector.broadcast %cst_184 : f32 to vector<8x256xf32>
    %543 = arith.select %541, %538, %542 : vector<8x256xi1>, vector<8x256xf32>
    %544 = tpu.concatenate %537, %543 in 0 : vector<8x256xf32>, vector<8x256xf32> -> vector<16x256xf32>
    %545 = arith.truncf %544 : vector<16x256xf32> to vector<16x256xbf16>
    %c64_185 = arith.constant 64 : index
    %c0_186 = arith.constant 0 : index
    %546 = vector.load %arg5[%c64_185, %c0_186] : memref<400x256xbf16, #tpu.memory_space<vmem>>, vector<16x256xbf16>
    tpu.vector_store %arg5[%c64_185, %c0_186], %545 {strides = array<i32>} : memref<400x256xbf16, #tpu.memory_space<vmem>>, vector<16x256xbf16>,
    %c32_i32_187 = arith.constant 32 : i32
    %547 = tpu.dynamic_rotate %398 by %c32_i32_187 dim 1 : vector<8x256xf32>, i32 -> vector<8x256xf32>
    %548 = arith.andi %411, %456 : vector<1x256xi1>
    %cst_188 = arith.constant 0.000000e+00 : f32
    %549 = vector.shape_cast %548 : vector<1x256xi1> to vector<1x256xi1>
    %550 = vector.broadcast %549 : vector<1x256xi1> to vector<8x256xi1>
    %551 = vector.broadcast %cst_188 : f32 to vector<8x256xf32>
    %552 = arith.select %550, %547, %551 : vector<8x256xi1>, vector<8x256xf32>
    %c31_i32_189 = arith.constant 31 : i32
    %553 = tpu.dynamic_rotate %398 by %c31_i32_189 dim 1 : vector<8x256xf32>, i32 -> vector<8x256xf32>
    %554 = arith.andi %411, %461 : vector<1x256xi1>
    %cst_190 = arith.constant 0.000000e+00 : f32
    %555 = vector.shape_cast %554 : vector<1x256xi1> to vector<1x256xi1>
    %556 = vector.broadcast %555 : vector<1x256xi1> to vector<8x256xi1>
    %557 = vector.broadcast %cst_190 : f32 to vector<8x256xf32>
    %558 = arith.select %556, %553, %557 : vector<8x256xi1>, vector<8x256xf32>
    %559 = tpu.concatenate %552, %558 in 0 : vector<8x256xf32>, vector<8x256xf32> -> vector<16x256xf32>
    %560 = arith.truncf %559 : vector<16x256xf32> to vector<16x256xbf16>
    %c80_191 = arith.constant 80 : index
    %c0_192 = arith.constant 0 : index
    %561 = vector.load %arg5[%c80_191, %c0_192] : memref<400x256xbf16, #tpu.memory_space<vmem>>, vector<16x256xbf16>
    tpu.vector_store %arg5[%c80_191, %c0_192], %560 {strides = array<i32>} : memref<400x256xbf16, #tpu.memory_space<vmem>>, vector<16x256xbf16>,
    %c30_i32_193 = arith.constant 30 : i32
    %562 = tpu.dynamic_rotate %398 by %c30_i32_193 dim 1 : vector<8x256xf32>, i32 -> vector<8x256xf32>
    %563 = arith.andi %411, %466 : vector<1x256xi1>
    %cst_194 = arith.constant 0.000000e+00 : f32
    %564 = vector.shape_cast %563 : vector<1x256xi1> to vector<1x256xi1>
    %565 = vector.broadcast %564 : vector<1x256xi1> to vector<8x256xi1>
    %566 = vector.broadcast %cst_194 : f32 to vector<8x256xf32>
    %567 = arith.select %565, %562, %566 : vector<8x256xi1>, vector<8x256xf32>
    %c29_i32 = arith.constant 29 : i32
    %568 = tpu.dynamic_rotate %398 by %c29_i32 dim 1 : vector<8x256xf32>, i32 -> vector<8x256xf32>
    %569 = arith.andi %411, %471 : vector<1x256xi1>
    %cst_195 = arith.constant 0.000000e+00 : f32
    %570 = vector.shape_cast %569 : vector<1x256xi1> to vector<1x256xi1>
    %571 = vector.broadcast %570 : vector<1x256xi1> to vector<8x256xi1>
    %572 = vector.broadcast %cst_195 : f32 to vector<8x256xf32>
    %573 = arith.select %571, %568, %572 : vector<8x256xi1>, vector<8x256xf32>
    %574 = tpu.concatenate %567, %573 in 0 : vector<8x256xf32>, vector<8x256xf32> -> vector<16x256xf32>
    %575 = arith.truncf %574 : vector<16x256xf32> to vector<16x256xbf16>
    %c96_196 = arith.constant 96 : index
    %c0_197 = arith.constant 0 : index
    %576 = vector.load %arg5[%c96_196, %c0_197] : memref<400x256xbf16, #tpu.memory_space<vmem>>, vector<16x256xbf16>
    tpu.vector_store %arg5[%c96_196, %c0_197], %575 {strides = array<i32>} : memref<400x256xbf16, #tpu.memory_space<vmem>>, vector<16x256xbf16>,
    %c19_i32_198 = arith.constant 19 : i32
    %577 = tpu.dynamic_rotate %398 by %c19_i32_198 dim 1 : vector<8x256xf32>, i32 -> vector<8x256xf32>
    %578 = arith.andi %416, %441 : vector<1x256xi1>
    %cst_199 = arith.constant 0.000000e+00 : f32
    %579 = vector.shape_cast %578 : vector<1x256xi1> to vector<1x256xi1>
    %580 = vector.broadcast %579 : vector<1x256xi1> to vector<8x256xi1>
    %581 = vector.broadcast %cst_199 : f32 to vector<8x256xf32>
    %582 = arith.select %580, %577, %581 : vector<8x256xi1>, vector<8x256xf32>
    %c18_i32_200 = arith.constant 18 : i32
    %583 = tpu.dynamic_rotate %398 by %c18_i32_200 dim 1 : vector<8x256xf32>, i32 -> vector<8x256xf32>
    %584 = arith.andi %416, %446 : vector<1x256xi1>
    %cst_201 = arith.constant 0.000000e+00 : f32
    %585 = vector.shape_cast %584 : vector<1x256xi1> to vector<1x256xi1>
    %586 = vector.broadcast %585 : vector<1x256xi1> to vector<8x256xi1>
    %587 = vector.broadcast %cst_201 : f32 to vector<8x256xf32>
    %588 = arith.select %586, %583, %587 : vector<8x256xi1>, vector<8x256xf32>
    %589 = tpu.concatenate %582, %588 in 0 : vector<8x256xf32>, vector<8x256xf32> -> vector<16x256xf32>
    %590 = arith.truncf %589 : vector<16x256xf32> to vector<16x256xbf16>
    %c112_202 = arith.constant 112 : index
    %c0_203 = arith.constant 0 : index
    %591 = vector.load %arg5[%c112_202, %c0_203] : memref<400x256xbf16, #tpu.memory_space<vmem>>, vector<16x256xbf16>
    tpu.vector_store %arg5[%c112_202, %c0_203], %590 {strides = array<i32>} : memref<400x256xbf16, #tpu.memory_space<vmem>>, vector<16x256xbf16>,
    %c17_i32_204 = arith.constant 17 : i32
    %592 = tpu.dynamic_rotate %398 by %c17_i32_204 dim 1 : vector<8x256xf32>, i32 -> vector<8x256xf32>
    %593 = arith.andi %416, %451 : vector<1x256xi1>
    %cst_205 = arith.constant 0.000000e+00 : f32
    %594 = vector.shape_cast %593 : vector<1x256xi1> to vector<1x256xi1>
    %595 = vector.broadcast %594 : vector<1x256xi1> to vector<8x256xi1>
    %596 = vector.broadcast %cst_205 : f32 to vector<8x256xf32>
    %597 = arith.select %595, %592, %596 : vector<8x256xi1>, vector<8x256xf32>
    %c16_i32_206 = arith.constant 16 : i32
    %598 = tpu.dynamic_rotate %398 by %c16_i32_206 dim 1 : vector<8x256xf32>, i32 -> vector<8x256xf32>
    %599 = arith.andi %416, %456 : vector<1x256xi1>
    %cst_207 = arith.constant 0.000000e+00 : f32
    %600 = vector.shape_cast %599 : vector<1x256xi1> to vector<1x256xi1>
    %601 = vector.broadcast %600 : vector<1x256xi1> to vector<8x256xi1>
    %602 = vector.broadcast %cst_207 : f32 to vector<8x256xf32>
    %603 = arith.select %601, %598, %602 : vector<8x256xi1>, vector<8x256xf32>
    %604 = tpu.concatenate %597, %603 in 0 : vector<8x256xf32>, vector<8x256xf32> -> vector<16x256xf32>
    %605 = arith.truncf %604 : vector<16x256xf32> to vector<16x256xbf16>
    %c128_208 = arith.constant 128 : index
    %c0_209 = arith.constant 0 : index
    %606 = vector.load %arg5[%c128_208, %c0_209] : memref<400x256xbf16, #tpu.memory_space<vmem>>, vector<16x256xbf16>
    tpu.vector_store %arg5[%c128_208, %c0_209], %605 {strides = array<i32>} : memref<400x256xbf16, #tpu.memory_space<vmem>>, vector<16x256xbf16>,
    %c15_i32_210 = arith.constant 15 : i32
    %607 = tpu.dynamic_rotate %398 by %c15_i32_210 dim 1 : vector<8x256xf32>, i32 -> vector<8x256xf32>
    %608 = arith.andi %416, %461 : vector<1x256xi1>
    %cst_211 = arith.constant 0.000000e+00 : f32
    %609 = vector.shape_cast %608 : vector<1x256xi1> to vector<1x256xi1>
    %610 = vector.broadcast %609 : vector<1x256xi1> to vector<8x256xi1>
    %611 = vector.broadcast %cst_211 : f32 to vector<8x256xf32>
    %612 = arith.select %610, %607, %611 : vector<8x256xi1>, vector<8x256xf32>
    %c14_i32_212 = arith.constant 14 : i32
    %613 = tpu.dynamic_rotate %398 by %c14_i32_212 dim 1 : vector<8x256xf32>, i32 -> vector<8x256xf32>
    %614 = arith.andi %416, %466 : vector<1x256xi1>
    %cst_213 = arith.constant 0.000000e+00 : f32
    %615 = vector.shape_cast %614 : vector<1x256xi1> to vector<1x256xi1>
    %616 = vector.broadcast %615 : vector<1x256xi1> to vector<8x256xi1>
    %617 = vector.broadcast %cst_213 : f32 to vector<8x256xf32>
    %618 = arith.select %616, %613, %617 : vector<8x256xi1>, vector<8x256xf32>
    %619 = tpu.concatenate %612, %618 in 0 : vector<8x256xf32>, vector<8x256xf32> -> vector<16x256xf32>
    %620 = arith.truncf %619 : vector<16x256xf32> to vector<16x256xbf16>
    %c144_214 = arith.constant 144 : index
    %c0_215 = arith.constant 0 : index
    %621 = vector.load %arg5[%c144_214, %c0_215] : memref<400x256xbf16, #tpu.memory_space<vmem>>, vector<16x256xbf16>
    tpu.vector_store %arg5[%c144_214, %c0_215], %620 {strides = array<i32>} : memref<400x256xbf16, #tpu.memory_space<vmem>>, vector<16x256xbf16>,
    %c13_i32_216 = arith.constant 13 : i32
    %622 = tpu.dynamic_rotate %398 by %c13_i32_216 dim 1 : vector<8x256xf32>, i32 -> vector<8x256xf32>
    %623 = arith.andi %416, %471 : vector<1x256xi1>
    %cst_217 = arith.constant 0.000000e+00 : f32
    %624 = vector.shape_cast %623 : vector<1x256xi1> to vector<1x256xi1>
    %625 = vector.broadcast %624 : vector<1x256xi1> to vector<8x256xi1>
    %626 = vector.broadcast %cst_217 : f32 to vector<8x256xf32>
    %627 = arith.select %625, %622, %626 : vector<8x256xi1>, vector<8x256xf32>
    %c3_i32_218 = arith.constant 3 : i32
    %628 = tpu.dynamic_rotate %398 by %c3_i32_218 dim 1 : vector<8x256xf32>, i32 -> vector<8x256xf32>
    %629 = arith.andi %421, %441 : vector<1x256xi1>
    %cst_219 = arith.constant 0.000000e+00 : f32
    %630 = vector.shape_cast %629 : vector<1x256xi1> to vector<1x256xi1>
    %631 = vector.broadcast %630 : vector<1x256xi1> to vector<8x256xi1>
    %632 = vector.broadcast %cst_219 : f32 to vector<8x256xf32>
    %633 = arith.select %631, %628, %632 : vector<8x256xi1>, vector<8x256xf32>
    %634 = tpu.concatenate %627, %633 in 0 : vector<8x256xf32>, vector<8x256xf32> -> vector<16x256xf32>
    %635 = arith.truncf %634 : vector<16x256xf32> to vector<16x256xbf16>
    %c160_220 = arith.constant 160 : index
    %c0_221 = arith.constant 0 : index
    %636 = vector.load %arg5[%c160_220, %c0_221] : memref<400x256xbf16, #tpu.memory_space<vmem>>, vector<16x256xbf16>
    tpu.vector_store %arg5[%c160_220, %c0_221], %635 {strides = array<i32>} : memref<400x256xbf16, #tpu.memory_space<vmem>>, vector<16x256xbf16>,
    %c2_i32_222 = arith.constant 2 : i32
    %637 = tpu.dynamic_rotate %398 by %c2_i32_222 dim 1 : vector<8x256xf32>, i32 -> vector<8x256xf32>
    %638 = arith.andi %421, %446 : vector<1x256xi1>
    %cst_223 = arith.constant 0.000000e+00 : f32
    %639 = vector.shape_cast %638 : vector<1x256xi1> to vector<1x256xi1>
    %640 = vector.broadcast %639 : vector<1x256xi1> to vector<8x256xi1>
    %641 = vector.broadcast %cst_223 : f32 to vector<8x256xf32>
    %642 = arith.select %640, %637, %641 : vector<8x256xi1>, vector<8x256xf32>
    %c1_i32_224 = arith.constant 1 : i32
    %643 = tpu.dynamic_rotate %398 by %c1_i32_224 dim 1 : vector<8x256xf32>, i32 -> vector<8x256xf32>
    %644 = arith.andi %421, %451 : vector<1x256xi1>
    %cst_225 = arith.constant 0.000000e+00 : f32
    %645 = vector.shape_cast %644 : vector<1x256xi1> to vector<1x256xi1>
    %646 = vector.broadcast %645 : vector<1x256xi1> to vector<8x256xi1>
    %647 = vector.broadcast %cst_225 : f32 to vector<8x256xf32>
    %648 = arith.select %646, %643, %647 : vector<8x256xi1>, vector<8x256xf32>
    %649 = tpu.concatenate %642, %648 in 0 : vector<8x256xf32>, vector<8x256xf32> -> vector<16x256xf32>
    %650 = arith.truncf %649 : vector<16x256xf32> to vector<16x256xbf16>
    %c176_226 = arith.constant 176 : index
    %c0_227 = arith.constant 0 : index
    %651 = vector.load %arg5[%c176_226, %c0_227] : memref<400x256xbf16, #tpu.memory_space<vmem>>, vector<16x256xbf16>
    tpu.vector_store %arg5[%c176_226, %c0_227], %650 {strides = array<i32>} : memref<400x256xbf16, #tpu.memory_space<vmem>>, vector<16x256xbf16>,
    %652 = arith.andi %421, %456 : vector<1x256xi1>
    %cst_228 = arith.constant 0.000000e+00 : f32
    %653 = vector.shape_cast %652 : vector<1x256xi1> to vector<1x256xi1>
    %654 = vector.broadcast %653 : vector<1x256xi1> to vector<8x256xi1>
    %655 = vector.broadcast %cst_228 : f32 to vector<8x256xf32>
    %656 = arith.select %654, %398, %655 : vector<8x256xi1>, vector<8x256xf32>
    %c255_i32_229 = arith.constant 255 : i32
    %657 = tpu.dynamic_rotate %398 by %c255_i32_229 dim 1 : vector<8x256xf32>, i32 -> vector<8x256xf32>
    %658 = arith.andi %421, %461 : vector<1x256xi1>
    %cst_230 = arith.constant 0.000000e+00 : f32
    %659 = vector.shape_cast %658 : vector<1x256xi1> to vector<1x256xi1>
    %660 = vector.broadcast %659 : vector<1x256xi1> to vector<8x256xi1>
    %661 = vector.broadcast %cst_230 : f32 to vector<8x256xf32>
    %662 = arith.select %660, %657, %661 : vector<8x256xi1>, vector<8x256xf32>
    %663 = tpu.concatenate %656, %662 in 0 : vector<8x256xf32>, vector<8x256xf32> -> vector<16x256xf32>
    %664 = arith.truncf %663 : vector<16x256xf32> to vector<16x256xbf16>
    %c192_231 = arith.constant 192 : index
    %c0_232 = arith.constant 0 : index
    %665 = vector.load %arg5[%c192_231, %c0_232] : memref<400x256xbf16, #tpu.memory_space<vmem>>, vector<16x256xbf16>
    tpu.vector_store %arg5[%c192_231, %c0_232], %664 {strides = array<i32>} : memref<400x256xbf16, #tpu.memory_space<vmem>>, vector<16x256xbf16>,
    %c254_i32_233 = arith.constant 254 : i32
    %666 = tpu.dynamic_rotate %398 by %c254_i32_233 dim 1 : vector<8x256xf32>, i32 -> vector<8x256xf32>
    %667 = arith.andi %421, %466 : vector<1x256xi1>
    %cst_234 = arith.constant 0.000000e+00 : f32
    %668 = vector.shape_cast %667 : vector<1x256xi1> to vector<1x256xi1>
    %669 = vector.broadcast %668 : vector<1x256xi1> to vector<8x256xi1>
    %670 = vector.broadcast %cst_234 : f32 to vector<8x256xf32>
    %671 = arith.select %669, %666, %670 : vector<8x256xi1>, vector<8x256xf32>
    %c253_i32 = arith.constant 253 : i32
    %672 = tpu.dynamic_rotate %398 by %c253_i32 dim 1 : vector<8x256xf32>, i32 -> vector<8x256xf32>
    %673 = arith.andi %421, %471 : vector<1x256xi1>
    %cst_235 = arith.constant 0.000000e+00 : f32
    %674 = vector.shape_cast %673 : vector<1x256xi1> to vector<1x256xi1>
    %675 = vector.broadcast %674 : vector<1x256xi1> to vector<8x256xi1>
    %676 = vector.broadcast %cst_235 : f32 to vector<8x256xf32>
    %677 = arith.select %675, %672, %676 : vector<8x256xi1>, vector<8x256xf32>
    %678 = tpu.concatenate %671, %677 in 0 : vector<8x256xf32>, vector<8x256xf32> -> vector<16x256xf32>
    %679 = arith.truncf %678 : vector<16x256xf32> to vector<16x256xbf16>
    %c208 = arith.constant 208 : index
    %c0_236 = arith.constant 0 : index
    %680 = vector.load %arg5[%c208, %c0_236] : memref<400x256xbf16, #tpu.memory_space<vmem>>, vector<16x256xbf16>
    tpu.vector_store %arg5[%c208, %c0_236], %679 {strides = array<i32>} : memref<400x256xbf16, #tpu.memory_space<vmem>>, vector<16x256xbf16>,
    %c243_i32 = arith.constant 243 : i32
    %681 = tpu.dynamic_rotate %398 by %c243_i32 dim 1 : vector<8x256xf32>, i32 -> vector<8x256xf32>
    %682 = arith.andi %426, %441 : vector<1x256xi1>
    %cst_237 = arith.constant 0.000000e+00 : f32
    %683 = vector.shape_cast %682 : vector<1x256xi1> to vector<1x256xi1>
    %684 = vector.broadcast %683 : vector<1x256xi1> to vector<8x256xi1>
    %685 = vector.broadcast %cst_237 : f32 to vector<8x256xf32>
    %686 = arith.select %684, %681, %685 : vector<8x256xi1>, vector<8x256xf32>
    %c242_i32_238 = arith.constant 242 : i32
    %687 = tpu.dynamic_rotate %398 by %c242_i32_238 dim 1 : vector<8x256xf32>, i32 -> vector<8x256xf32>
    %688 = arith.andi %426, %446 : vector<1x256xi1>
    %cst_239 = arith.constant 0.000000e+00 : f32
    %689 = vector.shape_cast %688 : vector<1x256xi1> to vector<1x256xi1>
    %690 = vector.broadcast %689 : vector<1x256xi1> to vector<8x256xi1>
    %691 = vector.broadcast %cst_239 : f32 to vector<8x256xf32>
    %692 = arith.select %690, %687, %691 : vector<8x256xi1>, vector<8x256xf32>
    %693 = tpu.concatenate %686, %692 in 0 : vector<8x256xf32>, vector<8x256xf32> -> vector<16x256xf32>
    %694 = arith.truncf %693 : vector<16x256xf32> to vector<16x256xbf16>
    %c224 = arith.constant 224 : index
    %c0_240 = arith.constant 0 : index
    %695 = vector.load %arg5[%c224, %c0_240] : memref<400x256xbf16, #tpu.memory_space<vmem>>, vector<16x256xbf16>
    tpu.vector_store %arg5[%c224, %c0_240], %694 {strides = array<i32>} : memref<400x256xbf16, #tpu.memory_space<vmem>>, vector<16x256xbf16>,
    %c241_i32_241 = arith.constant 241 : i32
    %696 = tpu.dynamic_rotate %398 by %c241_i32_241 dim 1 : vector<8x256xf32>, i32 -> vector<8x256xf32>
    %697 = arith.andi %426, %451 : vector<1x256xi1>
    %cst_242 = arith.constant 0.000000e+00 : f32
    %698 = vector.shape_cast %697 : vector<1x256xi1> to vector<1x256xi1>
    %699 = vector.broadcast %698 : vector<1x256xi1> to vector<8x256xi1>
    %700 = vector.broadcast %cst_242 : f32 to vector<8x256xf32>
    %701 = arith.select %699, %696, %700 : vector<8x256xi1>, vector<8x256xf32>
    %c240_i32_243 = arith.constant 240 : i32
    %702 = tpu.dynamic_rotate %398 by %c240_i32_243 dim 1 : vector<8x256xf32>, i32 -> vector<8x256xf32>
    %703 = arith.andi %426, %456 : vector<1x256xi1>
    %cst_244 = arith.constant 0.000000e+00 : f32
    %704 = vector.shape_cast %703 : vector<1x256xi1> to vector<1x256xi1>
    %705 = vector.broadcast %704 : vector<1x256xi1> to vector<8x256xi1>
    %706 = vector.broadcast %cst_244 : f32 to vector<8x256xf32>
    %707 = arith.select %705, %702, %706 : vector<8x256xi1>, vector<8x256xf32>
    %708 = tpu.concatenate %701, %707 in 0 : vector<8x256xf32>, vector<8x256xf32> -> vector<16x256xf32>
    %709 = arith.truncf %708 : vector<16x256xf32> to vector<16x256xbf16>
    %c240 = arith.constant 240 : index
    %c0_245 = arith.constant 0 : index
    %710 = vector.load %arg5[%c240, %c0_245] : memref<400x256xbf16, #tpu.memory_space<vmem>>, vector<16x256xbf16>
    tpu.vector_store %arg5[%c240, %c0_245], %709 {strides = array<i32>} : memref<400x256xbf16, #tpu.memory_space<vmem>>, vector<16x256xbf16>,
    %c239_i32_246 = arith.constant 239 : i32
    %711 = tpu.dynamic_rotate %398 by %c239_i32_246 dim 1 : vector<8x256xf32>, i32 -> vector<8x256xf32>
    %712 = arith.andi %426, %461 : vector<1x256xi1>
    %cst_247 = arith.constant 0.000000e+00 : f32
    %713 = vector.shape_cast %712 : vector<1x256xi1> to vector<1x256xi1>
    %714 = vector.broadcast %713 : vector<1x256xi1> to vector<8x256xi1>
    %715 = vector.broadcast %cst_247 : f32 to vector<8x256xf32>
    %716 = arith.select %714, %711, %715 : vector<8x256xi1>, vector<8x256xf32>
    %c238_i32_248 = arith.constant 238 : i32
    %717 = tpu.dynamic_rotate %398 by %c238_i32_248 dim 1 : vector<8x256xf32>, i32 -> vector<8x256xf32>
    %718 = arith.andi %426, %466 : vector<1x256xi1>
    %cst_249 = arith.constant 0.000000e+00 : f32
    %719 = vector.shape_cast %718 : vector<1x256xi1> to vector<1x256xi1>
    %720 = vector.broadcast %719 : vector<1x256xi1> to vector<8x256xi1>
    %721 = vector.broadcast %cst_249 : f32 to vector<8x256xf32>
    %722 = arith.select %720, %717, %721 : vector<8x256xi1>, vector<8x256xf32>
    %723 = tpu.concatenate %716, %722 in 0 : vector<8x256xf32>, vector<8x256xf32> -> vector<16x256xf32>
    %724 = arith.truncf %723 : vector<16x256xf32> to vector<16x256xbf16>
    %c256 = arith.constant 256 : index
    %c0_250 = arith.constant 0 : index
    %725 = vector.load %arg5[%c256, %c0_250] : memref<400x256xbf16, #tpu.memory_space<vmem>>, vector<16x256xbf16>
    tpu.vector_store %arg5[%c256, %c0_250], %724 {strides = array<i32>} : memref<400x256xbf16, #tpu.memory_space<vmem>>, vector<16x256xbf16>,
    %c237_i32 = arith.constant 237 : i32
    %726 = tpu.dynamic_rotate %398 by %c237_i32 dim 1 : vector<8x256xf32>, i32 -> vector<8x256xf32>
    %727 = arith.andi %426, %471 : vector<1x256xi1>
    %cst_251 = arith.constant 0.000000e+00 : f32
    %728 = vector.shape_cast %727 : vector<1x256xi1> to vector<1x256xi1>
    %729 = vector.broadcast %728 : vector<1x256xi1> to vector<8x256xi1>
    %730 = vector.broadcast %cst_251 : f32 to vector<8x256xf32>
    %731 = arith.select %729, %726, %730 : vector<8x256xi1>, vector<8x256xf32>
    %c227_i32 = arith.constant 227 : i32
    %732 = tpu.dynamic_rotate %398 by %c227_i32 dim 1 : vector<8x256xf32>, i32 -> vector<8x256xf32>
    %733 = arith.andi %431, %441 : vector<1x256xi1>
    %cst_252 = arith.constant 0.000000e+00 : f32
    %734 = vector.shape_cast %733 : vector<1x256xi1> to vector<1x256xi1>
    %735 = vector.broadcast %734 : vector<1x256xi1> to vector<8x256xi1>
    %736 = vector.broadcast %cst_252 : f32 to vector<8x256xf32>
    %737 = arith.select %735, %732, %736 : vector<8x256xi1>, vector<8x256xf32>
    %738 = tpu.concatenate %731, %737 in 0 : vector<8x256xf32>, vector<8x256xf32> -> vector<16x256xf32>
    %739 = arith.truncf %738 : vector<16x256xf32> to vector<16x256xbf16>
    %c272 = arith.constant 272 : index
    %c0_253 = arith.constant 0 : index
    %740 = vector.load %arg5[%c272, %c0_253] : memref<400x256xbf16, #tpu.memory_space<vmem>>, vector<16x256xbf16>
    tpu.vector_store %arg5[%c272, %c0_253], %739 {strides = array<i32>} : memref<400x256xbf16, #tpu.memory_space<vmem>>, vector<16x256xbf16>,
    %c226_i32_254 = arith.constant 226 : i32
    %741 = tpu.dynamic_rotate %398 by %c226_i32_254 dim 1 : vector<8x256xf32>, i32 -> vector<8x256xf32>
    %742 = arith.andi %431, %446 : vector<1x256xi1>
    %cst_255 = arith.constant 0.000000e+00 : f32
    %743 = vector.shape_cast %742 : vector<1x256xi1> to vector<1x256xi1>
    %744 = vector.broadcast %743 : vector<1x256xi1> to vector<8x256xi1>
    %745 = vector.broadcast %cst_255 : f32 to vector<8x256xf32>
    %746 = arith.select %744, %741, %745 : vector<8x256xi1>, vector<8x256xf32>
    %c225_i32_256 = arith.constant 225 : i32
    %747 = tpu.dynamic_rotate %398 by %c225_i32_256 dim 1 : vector<8x256xf32>, i32 -> vector<8x256xf32>
    %748 = arith.andi %431, %451 : vector<1x256xi1>
    %cst_257 = arith.constant 0.000000e+00 : f32
    %749 = vector.shape_cast %748 : vector<1x256xi1> to vector<1x256xi1>
    %750 = vector.broadcast %749 : vector<1x256xi1> to vector<8x256xi1>
    %751 = vector.broadcast %cst_257 : f32 to vector<8x256xf32>
    %752 = arith.select %750, %747, %751 : vector<8x256xi1>, vector<8x256xf32>
    %753 = tpu.concatenate %746, %752 in 0 : vector<8x256xf32>, vector<8x256xf32> -> vector<16x256xf32>
    %754 = arith.truncf %753 : vector<16x256xf32> to vector<16x256xbf16>
    %c288 = arith.constant 288 : index
    %c0_258 = arith.constant 0 : index
    %755 = vector.load %arg5[%c288, %c0_258] : memref<400x256xbf16, #tpu.memory_space<vmem>>, vector<16x256xbf16>
    tpu.vector_store %arg5[%c288, %c0_258], %754 {strides = array<i32>} : memref<400x256xbf16, #tpu.memory_space<vmem>>, vector<16x256xbf16>,
    %c224_i32_259 = arith.constant 224 : i32
    %756 = tpu.dynamic_rotate %398 by %c224_i32_259 dim 1 : vector<8x256xf32>, i32 -> vector<8x256xf32>
    %757 = arith.andi %431, %456 : vector<1x256xi1>
    %cst_260 = arith.constant 0.000000e+00 : f32
    %758 = vector.shape_cast %757 : vector<1x256xi1> to vector<1x256xi1>
    %759 = vector.broadcast %758 : vector<1x256xi1> to vector<8x256xi1>
    %760 = vector.broadcast %cst_260 : f32 to vector<8x256xf32>
    %761 = arith.select %759, %756, %760 : vector<8x256xi1>, vector<8x256xf32>
    %c223_i32_261 = arith.constant 223 : i32
    %762 = tpu.dynamic_rotate %398 by %c223_i32_261 dim 1 : vector<8x256xf32>, i32 -> vector<8x256xf32>
    %763 = arith.andi %431, %461 : vector<1x256xi1>
    %cst_262 = arith.constant 0.000000e+00 : f32
    %764 = vector.shape_cast %763 : vector<1x256xi1> to vector<1x256xi1>
    %765 = vector.broadcast %764 : vector<1x256xi1> to vector<8x256xi1>
    %766 = vector.broadcast %cst_262 : f32 to vector<8x256xf32>
    %767 = arith.select %765, %762, %766 : vector<8x256xi1>, vector<8x256xf32>
    %768 = tpu.concatenate %761, %767 in 0 : vector<8x256xf32>, vector<8x256xf32> -> vector<16x256xf32>
    %769 = arith.truncf %768 : vector<16x256xf32> to vector<16x256xbf16>
    %c304 = arith.constant 304 : index
    %c0_263 = arith.constant 0 : index
    %770 = vector.load %arg5[%c304, %c0_263] : memref<400x256xbf16, #tpu.memory_space<vmem>>, vector<16x256xbf16>
    tpu.vector_store %arg5[%c304, %c0_263], %769 {strides = array<i32>} : memref<400x256xbf16, #tpu.memory_space<vmem>>, vector<16x256xbf16>,
    %c222_i32_264 = arith.constant 222 : i32
    %771 = tpu.dynamic_rotate %398 by %c222_i32_264 dim 1 : vector<8x256xf32>, i32 -> vector<8x256xf32>
    %772 = arith.andi %431, %466 : vector<1x256xi1>
    %cst_265 = arith.constant 0.000000e+00 : f32
    %773 = vector.shape_cast %772 : vector<1x256xi1> to vector<1x256xi1>
    %774 = vector.broadcast %773 : vector<1x256xi1> to vector<8x256xi1>
    %775 = vector.broadcast %cst_265 : f32 to vector<8x256xf32>
    %776 = arith.select %774, %771, %775 : vector<8x256xi1>, vector<8x256xf32>
    %c221_i32 = arith.constant 221 : i32
    %777 = tpu.dynamic_rotate %398 by %c221_i32 dim 1 : vector<8x256xf32>, i32 -> vector<8x256xf32>
    %778 = arith.andi %431, %471 : vector<1x256xi1>
    %cst_266 = arith.constant 0.000000e+00 : f32
    %779 = vector.shape_cast %778 : vector<1x256xi1> to vector<1x256xi1>
    %780 = vector.broadcast %779 : vector<1x256xi1> to vector<8x256xi1>
    %781 = vector.broadcast %cst_266 : f32 to vector<8x256xf32>
    %782 = arith.select %780, %777, %781 : vector<8x256xi1>, vector<8x256xf32>
    %783 = tpu.concatenate %776, %782 in 0 : vector<8x256xf32>, vector<8x256xf32> -> vector<16x256xf32>
    %784 = arith.truncf %783 : vector<16x256xf32> to vector<16x256xbf16>
    %c320 = arith.constant 320 : index
    %c0_267 = arith.constant 0 : index
    %785 = vector.load %arg5[%c320, %c0_267] : memref<400x256xbf16, #tpu.memory_space<vmem>>, vector<16x256xbf16>
    tpu.vector_store %arg5[%c320, %c0_267], %784 {strides = array<i32>} : memref<400x256xbf16, #tpu.memory_space<vmem>>, vector<16x256xbf16>,
    %c211_i32 = arith.constant 211 : i32
    %786 = tpu.dynamic_rotate %398 by %c211_i32 dim 1 : vector<8x256xf32>, i32 -> vector<8x256xf32>
    %787 = arith.andi %436, %441 : vector<1x256xi1>
    %cst_268 = arith.constant 0.000000e+00 : f32
    %788 = vector.shape_cast %787 : vector<1x256xi1> to vector<1x256xi1>
    %789 = vector.broadcast %788 : vector<1x256xi1> to vector<8x256xi1>
    %790 = vector.broadcast %cst_268 : f32 to vector<8x256xf32>
    %791 = arith.select %789, %786, %790 : vector<8x256xi1>, vector<8x256xf32>
    %c210_i32 = arith.constant 210 : i32
    %792 = tpu.dynamic_rotate %398 by %c210_i32 dim 1 : vector<8x256xf32>, i32 -> vector<8x256xf32>
    %793 = arith.andi %436, %446 : vector<1x256xi1>
    %cst_269 = arith.constant 0.000000e+00 : f32
    %794 = vector.shape_cast %793 : vector<1x256xi1> to vector<1x256xi1>
    %795 = vector.broadcast %794 : vector<1x256xi1> to vector<8x256xi1>
    %796 = vector.broadcast %cst_269 : f32 to vector<8x256xf32>
    %797 = arith.select %795, %792, %796 : vector<8x256xi1>, vector<8x256xf32>
    %798 = tpu.concatenate %791, %797 in 0 : vector<8x256xf32>, vector<8x256xf32> -> vector<16x256xf32>
    %799 = arith.truncf %798 : vector<16x256xf32> to vector<16x256xbf16>
    %c336 = arith.constant 336 : index
    %c0_270 = arith.constant 0 : index
    %800 = vector.load %arg5[%c336, %c0_270] : memref<400x256xbf16, #tpu.memory_space<vmem>>, vector<16x256xbf16>
    tpu.vector_store %arg5[%c336, %c0_270], %799 {strides = array<i32>} : memref<400x256xbf16, #tpu.memory_space<vmem>>, vector<16x256xbf16>,
    %c209_i32 = arith.constant 209 : i32
    %801 = tpu.dynamic_rotate %398 by %c209_i32 dim 1 : vector<8x256xf32>, i32 -> vector<8x256xf32>
    %802 = arith.andi %436, %451 : vector<1x256xi1>
    %cst_271 = arith.constant 0.000000e+00 : f32
    %803 = vector.shape_cast %802 : vector<1x256xi1> to vector<1x256xi1>
    %804 = vector.broadcast %803 : vector<1x256xi1> to vector<8x256xi1>
    %805 = vector.broadcast %cst_271 : f32 to vector<8x256xf32>
    %806 = arith.select %804, %801, %805 : vector<8x256xi1>, vector<8x256xf32>
    %c208_i32 = arith.constant 208 : i32
    %807 = tpu.dynamic_rotate %398 by %c208_i32 dim 1 : vector<8x256xf32>, i32 -> vector<8x256xf32>
    %808 = arith.andi %436, %456 : vector<1x256xi1>
    %cst_272 = arith.constant 0.000000e+00 : f32
    %809 = vector.shape_cast %808 : vector<1x256xi1> to vector<1x256xi1>
    %810 = vector.broadcast %809 : vector<1x256xi1> to vector<8x256xi1>
    %811 = vector.broadcast %cst_272 : f32 to vector<8x256xf32>
    %812 = arith.select %810, %807, %811 : vector<8x256xi1>, vector<8x256xf32>
    %813 = tpu.concatenate %806, %812 in 0 : vector<8x256xf32>, vector<8x256xf32> -> vector<16x256xf32>
    %814 = arith.truncf %813 : vector<16x256xf32> to vector<16x256xbf16>
    %c352 = arith.constant 352 : index
    %c0_273 = arith.constant 0 : index
    %815 = vector.load %arg5[%c352, %c0_273] : memref<400x256xbf16, #tpu.memory_space<vmem>>, vector<16x256xbf16>
    tpu.vector_store %arg5[%c352, %c0_273], %814 {strides = array<i32>} : memref<400x256xbf16, #tpu.memory_space<vmem>>, vector<16x256xbf16>,
    %c207_i32 = arith.constant 207 : i32
    %816 = tpu.dynamic_rotate %398 by %c207_i32 dim 1 : vector<8x256xf32>, i32 -> vector<8x256xf32>
    %817 = arith.andi %436, %461 : vector<1x256xi1>
    %cst_274 = arith.constant 0.000000e+00 : f32
    %818 = vector.shape_cast %817 : vector<1x256xi1> to vector<1x256xi1>
    %819 = vector.broadcast %818 : vector<1x256xi1> to vector<8x256xi1>
    %820 = vector.broadcast %cst_274 : f32 to vector<8x256xf32>
    %821 = arith.select %819, %816, %820 : vector<8x256xi1>, vector<8x256xf32>
    %c206_i32 = arith.constant 206 : i32
    %822 = tpu.dynamic_rotate %398 by %c206_i32 dim 1 : vector<8x256xf32>, i32 -> vector<8x256xf32>
    %823 = arith.andi %436, %466 : vector<1x256xi1>
    %cst_275 = arith.constant 0.000000e+00 : f32
    %824 = vector.shape_cast %823 : vector<1x256xi1> to vector<1x256xi1>
    %825 = vector.broadcast %824 : vector<1x256xi1> to vector<8x256xi1>
    %826 = vector.broadcast %cst_275 : f32 to vector<8x256xf32>
    %827 = arith.select %825, %822, %826 : vector<8x256xi1>, vector<8x256xf32>
    %828 = tpu.concatenate %821, %827 in 0 : vector<8x256xf32>, vector<8x256xf32> -> vector<16x256xf32>
    %829 = arith.truncf %828 : vector<16x256xf32> to vector<16x256xbf16>
    %c368 = arith.constant 368 : index
    %c0_276 = arith.constant 0 : index
    %830 = vector.load %arg5[%c368, %c0_276] : memref<400x256xbf16, #tpu.memory_space<vmem>>, vector<16x256xbf16>
    tpu.vector_store %arg5[%c368, %c0_276], %829 {strides = array<i32>} : memref<400x256xbf16, #tpu.memory_space<vmem>>, vector<16x256xbf16>,
    %c205_i32 = arith.constant 205 : i32
    %831 = tpu.dynamic_rotate %398 by %c205_i32 dim 1 : vector<8x256xf32>, i32 -> vector<8x256xf32>
    %832 = arith.andi %436, %471 : vector<1x256xi1>
    %cst_277 = arith.constant 0.000000e+00 : f32
    %833 = vector.shape_cast %832 : vector<1x256xi1> to vector<1x256xi1>
    %834 = vector.broadcast %833 : vector<1x256xi1> to vector<8x256xi1>
    %835 = vector.broadcast %cst_277 : f32 to vector<8x256xf32>
    %836 = arith.select %834, %831, %835 : vector<8x256xi1>, vector<8x256xf32>
    %cst_278 = arith.constant 0.000000e+00 : f32
    %837 = vector.broadcast %cst_278 : f32 to vector<8x256xf32>
    %838 = tpu.concatenate %836, %837 in 0 : vector<8x256xf32>, vector<8x256xf32> -> vector<16x256xf32>
    %839 = arith.truncf %838 : vector<16x256xf32> to vector<16x256xbf16>
    %c384 = arith.constant 384 : index
    %c0_279 = arith.constant 0 : index
    %840 = vector.load %arg5[%c384, %c0_279] : memref<400x256xbf16, #tpu.memory_space<vmem>>, vector<16x256xbf16>
    tpu.vector_store %arg5[%c384, %c0_279], %839 {strides = array<i32>} : memref<400x256xbf16, #tpu.memory_space<vmem>>, vector<16x256xbf16>,
    %c0_280 = arith.constant 0 : index
    %c0_281 = arith.constant 0 : index
    %841 = vector.load %arg5[%c0_280, %c0_281] : memref<400x256xbf16, #tpu.memory_space<vmem>>, vector<392x256xbf16>
    %cst_282 = arith.constant dense<0.000000e+00> : vector<8x256xf32>
    %842 = tpu.matmul %400, %841, %cst_282 {dimension_numbers = #tpu.dot_dimension_numbers<[1], [0], [0], [1], [0, 0, 1, 1], [], []>} : vector<8x392xbf16>, vector<392x256xbf16>, vector<8x256xf32> -> vector<8x256xf32>
    %843 = vector.broadcast %401 : vector<8x1xf32> to vector<8x256xf32>
    %844 = arith.addf %842, %843 : vector<8x256xf32>
    %cst_283 = arith.constant 0.000000e+00 : f32
    %845 = vector.broadcast %cst_283 : f32 to vector<8x256xf32>
    %846 = arith.maximumf %844, %845 : vector<8x256xf32>
    %c72 = arith.constant 72 : index
    %c0_284 = arith.constant 0 : index
    %847 = vector.load %arg2[%c72, %c0_284] : memref<96x512xf32, #tpu.memory_space<vmem>>, vector<8x8xf32>
    %848 = arith.truncf %847 : vector<8x8xf32> to vector<8x8xbf16>
    %c72_285 = arith.constant 72 : index
    %c0_286 = arith.constant 0 : index
    %849 = vector.load %arg3[%c72_285, %c0_286] : memref<96x1xf32, #tpu.memory_space<vmem>>, vector<8x1xf32>
    %850 = arith.truncf %846 : vector<8x256xf32> to vector<8x256xbf16>
    %cst_287 = arith.constant dense<0.000000e+00> : vector<8x256xf32>
    %851 = tpu.matmul %848, %850, %cst_287 {dimension_numbers = #tpu.dot_dimension_numbers<[1], [0], [0], [1], [0, 0, 1, 1], [], []>} : vector<8x8xbf16>, vector<8x256xbf16>, vector<8x256xf32> -> vector<8x256xf32>
    %852 = vector.broadcast %849 : vector<8x1xf32> to vector<8x256xf32>
    %853 = arith.addf %851, %852 : vector<8x256xf32>
    %cst_288 = arith.constant 0.000000e+00 : f32
    %854 = vector.broadcast %cst_288 : f32 to vector<8x256xf32>
    %855 = arith.maximumf %853, %854 : vector<8x256xf32>
    %c24 = arith.constant 24 : index
    %c0_289 = arith.constant 0 : index
    %856 = vector.load %arg6[%c24, %c0_289] : memref<32x256xf32, #tpu.memory_space<vmem>>, vector<8x256xf32>
    tpu.vector_store %arg6[%c24, %c0_289], %855 {strides = array<i32>} : memref<32x256xf32, #tpu.memory_space<vmem>>, vector<8x256xf32>,
    %c80_290 = arith.constant 80 : index
    %c0_291 = arith.constant 0 : index
    %857 = vector.load %arg2[%c80_290, %c0_291] : memref<96x512xf32, #tpu.memory_space<vmem>>, vector<8x32xf32>
    %858 = arith.truncf %857 : vector<8x32xf32> to vector<8x32xbf16>
    %c80_292 = arith.constant 80 : index
    %c0_293 = arith.constant 0 : index
    %859 = vector.load %arg3[%c80_292, %c0_293] : memref<96x1xf32, #tpu.memory_space<vmem>>, vector<8x1xf32>
    %c0_294 = arith.constant 0 : index
    %c0_295 = arith.constant 0 : index
    %860 = vector.load %arg6[%c0_294, %c0_295] : memref<32x256xf32, #tpu.memory_space<vmem>>, vector<32x256xf32>
    %861 = arith.truncf %860 : vector<32x256xf32> to vector<32x256xbf16>
    %cst_296 = arith.constant dense<0.000000e+00> : vector<8x256xf32>
    %862 = tpu.matmul %858, %861, %cst_296 {dimension_numbers = #tpu.dot_dimension_numbers<[1], [0], [0], [1], [0, 0, 1, 1], [], []>} : vector<8x32xbf16>, vector<32x256xbf16>, vector<8x256xf32> -> vector<8x256xf32>
    %863 = vector.broadcast %859 : vector<8x1xf32> to vector<8x256xf32>
    %864 = arith.addf %862, %863 : vector<8x256xf32>
    %cst_297 = arith.constant 0.000000e+00 : f32
    %865 = vector.broadcast %cst_297 : f32 to vector<8x256xf32>
    %866 = arith.maximumf %864, %865 : vector<8x256xf32>
    %c88 = arith.constant 88 : index
    %c0_298 = arith.constant 0 : index
    %867 = vector.load %arg2[%c88, %c0_298] : memref<96x512xf32, #tpu.memory_space<vmem>>, vector<8x72xf32>
    %868 = arith.truncf %867 : vector<8x72xf32> to vector<8x72xbf16>
    %c88_299 = arith.constant 88 : index
    %c0_300 = arith.constant 0 : index
    %869 = vector.load %arg3[%c88_299, %c0_300] : memref<96x1xf32, #tpu.memory_space<vmem>>, vector<8x1xf32>
    %c1_i32_301 = arith.constant 1 : i32
    %870 = vector.broadcast %c1_i32_301 : i32 to vector<1x256xi32>
    %871 = arith.cmpi sge, %4, %870 : vector<1x256xi32>
    %c17_i32_302 = arith.constant 17 : i32
    %872 = vector.broadcast %c17_i32_302 : i32 to vector<1x256xi32>
    %873 = arith.cmpi slt, %4, %872 : vector<1x256xi32>
    %874 = arith.andi %871, %873 : vector<1x256xi1>
    %c0_i32_303 = arith.constant 0 : i32
    %875 = vector.broadcast %c0_i32_303 : i32 to vector<1x256xi32>
    %876 = arith.cmpi sge, %4, %875 : vector<1x256xi32>
    %c16_i32_304 = arith.constant 16 : i32
    %877 = vector.broadcast %c16_i32_304 : i32 to vector<1x256xi32>
    %878 = arith.cmpi slt, %4, %877 : vector<1x256xi32>
    %879 = arith.andi %876, %878 : vector<1x256xi1>
    %c-1_i32_305 = arith.constant -1 : i32
    %880 = vector.broadcast %c-1_i32_305 : i32 to vector<1x256xi32>
    %881 = arith.cmpi sge, %4, %880 : vector<1x256xi32>
    %c15_i32_306 = arith.constant 15 : i32
    %882 = vector.broadcast %c15_i32_306 : i32 to vector<1x256xi32>
    %883 = arith.cmpi slt, %4, %882 : vector<1x256xi32>
    %884 = arith.andi %881, %883 : vector<1x256xi1>
    %c1_i32_307 = arith.constant 1 : i32
    %885 = vector.broadcast %c1_i32_307 : i32 to vector<1x256xi32>
    %886 = arith.cmpi sge, %6, %885 : vector<1x256xi32>
    %c17_i32_308 = arith.constant 17 : i32
    %887 = vector.broadcast %c17_i32_308 : i32 to vector<1x256xi32>
    %888 = arith.cmpi slt, %6, %887 : vector<1x256xi32>
    %889 = arith.andi %886, %888 : vector<1x256xi1>
    %c0_i32_309 = arith.constant 0 : i32
    %890 = vector.broadcast %c0_i32_309 : i32 to vector<1x256xi32>
    %891 = arith.cmpi sge, %6, %890 : vector<1x256xi32>
    %c16_i32_310 = arith.constant 16 : i32
    %892 = vector.broadcast %c16_i32_310 : i32 to vector<1x256xi32>
    %893 = arith.cmpi slt, %6, %892 : vector<1x256xi32>
    %894 = arith.andi %891, %893 : vector<1x256xi1>
    %c-1_i32_311 = arith.constant -1 : i32
    %895 = vector.broadcast %c-1_i32_311 : i32 to vector<1x256xi32>
    %896 = arith.cmpi sge, %6, %895 : vector<1x256xi32>
    %c15_i32_312 = arith.constant 15 : i32
    %897 = vector.broadcast %c15_i32_312 : i32 to vector<1x256xi32>
    %898 = arith.cmpi slt, %6, %897 : vector<1x256xi32>
    %899 = arith.andi %896, %898 : vector<1x256xi1>
    %c17_i32_313 = arith.constant 17 : i32
    %900 = tpu.dynamic_rotate %866 by %c17_i32_313 dim 1 : vector<8x256xf32>, i32 -> vector<8x256xf32>
    %901 = arith.andi %874, %889 : vector<1x256xi1>
    %cst_314 = arith.constant 0.000000e+00 : f32
    %902 = vector.shape_cast %901 : vector<1x256xi1> to vector<1x256xi1>
    %903 = vector.broadcast %902 : vector<1x256xi1> to vector<8x256xi1>
    %904 = vector.broadcast %cst_314 : f32 to vector<8x256xf32>
    %905 = arith.select %903, %900, %904 : vector<8x256xi1>, vector<8x256xf32>
    %c16_i32_315 = arith.constant 16 : i32
    %906 = tpu.dynamic_rotate %866 by %c16_i32_315 dim 1 : vector<8x256xf32>, i32 -> vector<8x256xf32>
    %907 = arith.andi %874, %894 : vector<1x256xi1>
    %cst_316 = arith.constant 0.000000e+00 : f32
    %908 = vector.shape_cast %907 : vector<1x256xi1> to vector<1x256xi1>
    %909 = vector.broadcast %908 : vector<1x256xi1> to vector<8x256xi1>
    %910 = vector.broadcast %cst_316 : f32 to vector<8x256xf32>
    %911 = arith.select %909, %906, %910 : vector<8x256xi1>, vector<8x256xf32>
    %912 = tpu.concatenate %905, %911 in 0 : vector<8x256xf32>, vector<8x256xf32> -> vector<16x256xf32>
    %913 = arith.truncf %912 : vector<16x256xf32> to vector<16x256xbf16>
    %c0_317 = arith.constant 0 : index
    %c0_318 = arith.constant 0 : index
    %914 = vector.load %arg5[%c0_317, %c0_318] : memref<400x256xbf16, #tpu.memory_space<vmem>>, vector<16x256xbf16>
    tpu.vector_store %arg5[%c0_317, %c0_318], %913 {strides = array<i32>} : memref<400x256xbf16, #tpu.memory_space<vmem>>, vector<16x256xbf16>,
    %c15_i32_319 = arith.constant 15 : i32
    %915 = tpu.dynamic_rotate %866 by %c15_i32_319 dim 1 : vector<8x256xf32>, i32 -> vector<8x256xf32>
    %916 = arith.andi %874, %899 : vector<1x256xi1>
    %cst_320 = arith.constant 0.000000e+00 : f32
    %917 = vector.shape_cast %916 : vector<1x256xi1> to vector<1x256xi1>
    %918 = vector.broadcast %917 : vector<1x256xi1> to vector<8x256xi1>
    %919 = vector.broadcast %cst_320 : f32 to vector<8x256xf32>
    %920 = arith.select %918, %915, %919 : vector<8x256xi1>, vector<8x256xf32>
    %c1_i32_321 = arith.constant 1 : i32
    %921 = tpu.dynamic_rotate %866 by %c1_i32_321 dim 1 : vector<8x256xf32>, i32 -> vector<8x256xf32>
    %922 = arith.andi %879, %889 : vector<1x256xi1>
    %cst_322 = arith.constant 0.000000e+00 : f32
    %923 = vector.shape_cast %922 : vector<1x256xi1> to vector<1x256xi1>
    %924 = vector.broadcast %923 : vector<1x256xi1> to vector<8x256xi1>
    %925 = vector.broadcast %cst_322 : f32 to vector<8x256xf32>
    %926 = arith.select %924, %921, %925 : vector<8x256xi1>, vector<8x256xf32>
    %927 = tpu.concatenate %920, %926 in 0 : vector<8x256xf32>, vector<8x256xf32> -> vector<16x256xf32>
    %928 = arith.truncf %927 : vector<16x256xf32> to vector<16x256xbf16>
    %c16_323 = arith.constant 16 : index
    %c0_324 = arith.constant 0 : index
    %929 = vector.load %arg5[%c16_323, %c0_324] : memref<400x256xbf16, #tpu.memory_space<vmem>>, vector<16x256xbf16>
    tpu.vector_store %arg5[%c16_323, %c0_324], %928 {strides = array<i32>} : memref<400x256xbf16, #tpu.memory_space<vmem>>, vector<16x256xbf16>,
    %930 = arith.andi %879, %894 : vector<1x256xi1>
    %cst_325 = arith.constant 0.000000e+00 : f32
    %931 = vector.shape_cast %930 : vector<1x256xi1> to vector<1x256xi1>
    %932 = vector.broadcast %931 : vector<1x256xi1> to vector<8x256xi1>
    %933 = vector.broadcast %cst_325 : f32 to vector<8x256xf32>
    %934 = arith.select %932, %866, %933 : vector<8x256xi1>, vector<8x256xf32>
    %c255_i32_326 = arith.constant 255 : i32
    %935 = tpu.dynamic_rotate %866 by %c255_i32_326 dim 1 : vector<8x256xf32>, i32 -> vector<8x256xf32>
    %936 = arith.andi %879, %899 : vector<1x256xi1>
    %cst_327 = arith.constant 0.000000e+00 : f32
    %937 = vector.shape_cast %936 : vector<1x256xi1> to vector<1x256xi1>
    %938 = vector.broadcast %937 : vector<1x256xi1> to vector<8x256xi1>
    %939 = vector.broadcast %cst_327 : f32 to vector<8x256xf32>
    %940 = arith.select %938, %935, %939 : vector<8x256xi1>, vector<8x256xf32>
    %941 = tpu.concatenate %934, %940 in 0 : vector<8x256xf32>, vector<8x256xf32> -> vector<16x256xf32>
    %942 = arith.truncf %941 : vector<16x256xf32> to vector<16x256xbf16>
    %c32_328 = arith.constant 32 : index
    %c0_329 = arith.constant 0 : index
    %943 = vector.load %arg5[%c32_328, %c0_329] : memref<400x256xbf16, #tpu.memory_space<vmem>>, vector<16x256xbf16>
    tpu.vector_store %arg5[%c32_328, %c0_329], %942 {strides = array<i32>} : memref<400x256xbf16, #tpu.memory_space<vmem>>, vector<16x256xbf16>,
    %c241_i32_330 = arith.constant 241 : i32
    %944 = tpu.dynamic_rotate %866 by %c241_i32_330 dim 1 : vector<8x256xf32>, i32 -> vector<8x256xf32>
    %945 = arith.andi %884, %889 : vector<1x256xi1>
    %cst_331 = arith.constant 0.000000e+00 : f32
    %946 = vector.shape_cast %945 : vector<1x256xi1> to vector<1x256xi1>
    %947 = vector.broadcast %946 : vector<1x256xi1> to vector<8x256xi1>
    %948 = vector.broadcast %cst_331 : f32 to vector<8x256xf32>
    %949 = arith.select %947, %944, %948 : vector<8x256xi1>, vector<8x256xf32>
    %c240_i32_332 = arith.constant 240 : i32
    %950 = tpu.dynamic_rotate %866 by %c240_i32_332 dim 1 : vector<8x256xf32>, i32 -> vector<8x256xf32>
    %951 = arith.andi %884, %894 : vector<1x256xi1>
    %cst_333 = arith.constant 0.000000e+00 : f32
    %952 = vector.shape_cast %951 : vector<1x256xi1> to vector<1x256xi1>
    %953 = vector.broadcast %952 : vector<1x256xi1> to vector<8x256xi1>
    %954 = vector.broadcast %cst_333 : f32 to vector<8x256xf32>
    %955 = arith.select %953, %950, %954 : vector<8x256xi1>, vector<8x256xf32>
    %956 = tpu.concatenate %949, %955 in 0 : vector<8x256xf32>, vector<8x256xf32> -> vector<16x256xf32>
    %957 = arith.truncf %956 : vector<16x256xf32> to vector<16x256xbf16>
    %c48_334 = arith.constant 48 : index
    %c0_335 = arith.constant 0 : index
    %958 = vector.load %arg5[%c48_334, %c0_335] : memref<400x256xbf16, #tpu.memory_space<vmem>>, vector<16x256xbf16>
    tpu.vector_store %arg5[%c48_334, %c0_335], %957 {strides = array<i32>} : memref<400x256xbf16, #tpu.memory_space<vmem>>, vector<16x256xbf16>,
    %c239_i32_336 = arith.constant 239 : i32
    %959 = tpu.dynamic_rotate %866 by %c239_i32_336 dim 1 : vector<8x256xf32>, i32 -> vector<8x256xf32>
    %960 = arith.andi %884, %899 : vector<1x256xi1>
    %cst_337 = arith.constant 0.000000e+00 : f32
    %961 = vector.shape_cast %960 : vector<1x256xi1> to vector<1x256xi1>
    %962 = vector.broadcast %961 : vector<1x256xi1> to vector<8x256xi1>
    %963 = vector.broadcast %cst_337 : f32 to vector<8x256xf32>
    %964 = arith.select %962, %959, %963 : vector<8x256xi1>, vector<8x256xf32>
    %cst_338 = arith.constant 0.000000e+00 : f32
    %965 = vector.broadcast %cst_338 : f32 to vector<8x256xf32>
    %966 = tpu.concatenate %964, %965 in 0 : vector<8x256xf32>, vector<8x256xf32> -> vector<16x256xf32>
    %967 = arith.truncf %966 : vector<16x256xf32> to vector<16x256xbf16>
    %c64_339 = arith.constant 64 : index
    %c0_340 = arith.constant 0 : index
    %968 = vector.load %arg5[%c64_339, %c0_340] : memref<400x256xbf16, #tpu.memory_space<vmem>>, vector<16x256xbf16>
    tpu.vector_store %arg5[%c64_339, %c0_340], %967 {strides = array<i32>} : memref<400x256xbf16, #tpu.memory_space<vmem>>, vector<16x256xbf16>,
    %c0_341 = arith.constant 0 : index
    %c0_342 = arith.constant 0 : index
    %969 = vector.load %arg5[%c0_341, %c0_342] : memref<400x256xbf16, #tpu.memory_space<vmem>>, vector<72x256xbf16>
    %cst_343 = arith.constant dense<0.000000e+00> : vector<8x256xf32>
    %970 = tpu.matmul %868, %969, %cst_343 {dimension_numbers = #tpu.dot_dimension_numbers<[1], [0], [0], [1], [0, 0, 1, 1], [], []>} : vector<8x72xbf16>, vector<72x256xbf16>, vector<8x256xf32> -> vector<8x256xf32>
    %971 = vector.broadcast %869 : vector<8x1xf32> to vector<8x256xf32>
    %972 = arith.addf %970, %971 : vector<8x256xf32>
    %cst_344 = arith.constant 0.000000e+00 : f32
    %973 = vector.broadcast %cst_344 : f32 to vector<8x256xf32>
    %974 = arith.maximumf %972, %973 : vector<8x256xf32>
    %c0_345 = arith.constant 0 : index
    %c0_346 = arith.constant 0 : index
    %c0_347 = arith.constant 0 : index
    %975 = vector.load %arg4[%c0_345, %c0_346, %c0_347] : memref<1x8x256xf32, #tpu.memory_space<vmem>>, vector<1x8x256xf32>
    %976 = vector.shape_cast %975 : vector<1x8x256xf32> to vector<8x256xf32>
    %977 = vector.shape_cast %974 : vector<8x256xf32> to vector<1x8x256xf32>
    tpu.vector_store %arg4[%c0_345, %c0_346, %c0_347], %977 {strides = array<i32>} : memref<1x8x256xf32, #tpu.memory_space<vmem>>, vector<1x8x256xf32>,
    return
  }
  func.func @transform_0(%arg0: i32) -> (i32, i32, i32) {
    %c0_i32 = arith.constant 0 : i32
    %c0_i32_0 = arith.constant 0 : i32
    %c0_i32_1 = arith.constant 0 : i32
    return %arg0, %c0_i32, %c0_i32_0 : i32, i32, i32
  }
  func.func @transform_1(%arg0: i32) -> (i32, i32) {
    %c0_i32 = arith.constant 0 : i32
    %c0_i32_0 = arith.constant 0 : i32
    %c0_i32_1 = arith.constant 0 : i32
    return %c0_i32, %c0_i32_0 : i32, i32
  }
  func.func @transform_2(%arg0: i32) -> (i32, i32) {
    %c0_i32 = arith.constant 0 : i32
    %c0_i32_0 = arith.constant 0 : i32
    %c0_i32_1 = arith.constant 0 : i32
    return %c0_i32, %c0_i32_0 : i32, i32
  }
  func.func @transform_3(%arg0: i32) -> (i32, i32, i32) {
    %c0_i32 = arith.constant 0 : i32
    %c0_i32_0 = arith.constant 0 : i32
    %c0_i32_1 = arith.constant 0 : i32
    return %arg0, %c0_i32, %c0_i32_0 : i32, i32, i32
  }
}

</mosaic_0001>

<llo_original>
// kernel: msff_forward.1
$region0: #{msff_forward.1}
  #allocation0 [shape = 'u32[]', space=smem, size = 0x4, offset = 0x4, fixed_abs, tag = 'smem constant byte address 0x4 - core index']
  #allocation1 [shape = 'u32[144,128]{1,0:T(1,128)}', space=vmem, size = 0x12000, scoped, tag = 'internal scratch']
  #allocation2 [shape = 'bf16[400,256]{1,0:T(16,128)(2,1)}', space=vmem, size = 0x32000, scoped, tag = 'scratch operand']
  #allocation3 [shape = 'f32[32,256]{1,0:T(8,128)}', space=vmem, size = 0x8000, scoped, tag = 'scratch operand']
  %s0 = inlined_call_operand.vmem [shape: f32[2,8,256], index: 0, kind: input, shape index: {}]
  %s1 = inlined_call_operand.vmem [shape: f32[96,512], index: 1, kind: input, shape index: {}]
  %s2 = inlined_call_operand.vmem [shape: f32[96,1], index: 2, kind: input, shape index: {}]
  %s3 = inlined_call_operand.vmem [shape: f32[2,8,256], index: 3, kind: output, shape index: {}]
  %s4 = sld [smem:[#allocation0]]
  $region45: #{msff_forward.1} parent=0
    _
  %s6 = ssub.s32 1, %s4
  %s7 = scalar_select 0, %s6, %s4
  loop: start=0, step=1, limit=4
  $region2: #{msff_forward.1} parent=0 // loop_pre_header
    _
  $region3: #{msff_forward.1} parent=0 // loop_header
    %s9 = sphi 0, %s13
    %p10 = scmp.ge.s32.totalorder %s9, 4
    %s19 = sphi 0, %s21
    %s22 = sphi 0, %s19
    %s23 = sphi 0, %s22
    %s39 = sphi 0, %s23
    %s43 = sphi 0, %s43
    %s45 = sphi 0, %s43
    %s46 = sphi 0, %s45
    %s60 = sphi 0, %s46
    %s64 = sphi 0, %s64
    %s66 = sphi 0, %s64
    %s67 = sphi 0, %s66
    %s81 = sphi 0, %s67
    %s87 = sphi 0, %s89
    %s90 = sphi 0, %s87
    %s91 = sphi 0, %s90
    %s107 = sphi 0, %s91
  $region4: #{msff_forward.1} parent=0 // loop_header_branch
    %12 = sbr.rel (%p10) target = $region8
  $region5: #{msff_forward.1} parent=0 // loop_body
    %s14 = ssub.s32 %s9, 1
    %s15 = ssub.s32 %s9, 2
    %s16 = sadd.s32 %s9, 1
    %s17 = ssub.s32 %s9, %s16
    %p18 = scmp.eq.s32.totalorder %s17, 0
    %s20 = sadd.s32 %s19, 1
    %s21 = scalar_select %p18, %s19, %s20
    %p24 = pneg %p18
    %p25 = scmp.eq.s32.totalorder %s9, 1
    %p26 = por %p24, %p25
    %p27 = scmp.ne.s32.totalorder %s19, %s22
    %p28 = scmp.eq.s32.totalorder %s9, 0
    %p29 = por %p27, %p28
    %p30 = scmp.ne.s32.totalorder %s19, %s22
    %p31 = scmp.eq.s32.totalorder %s14, 1
    %p32 = por %p30, %p31
    %p33 = scmp.ne.s32.totalorder %s22, %s23
    %p34 = scmp.eq.s32.totalorder %s14, 0
    %p35 = por %p33, %p34
    %p36 = scmp.ne.s32.totalorder %s22, %s23
    %p37 = scmp.eq.s32.totalorder %s15, 1
    %p38 = por %p36, %p37
    %p40 = scmp.ne.s32.totalorder %s23, %s39
    %p41 = scmp.eq.s32.totalorder %s15, 0
    %p42 = por %p40, %p41
    %s44 = sadd.s32 %s43, 1
    %p47 = scmp.eq.s32.totalorder %s9, 1
    %p48 = scmp.ne.s32.totalorder %s43, %s45
    %p49 = scmp.eq.s32.totalorder %s9, 0
    %p50 = por %p48, %p49
    %p51 = scmp.ne.s32.totalorder %s43, %s45
    %p52 = scmp.eq.s32.totalorder %s14, 1
    %p53 = por %p51, %p52
    %p54 = scmp.ne.s32.totalorder %s45, %s46
    %p55 = scmp.eq.s32.totalorder %s14, 0
    %p56 = por %p54, %p55
    %p57 = scmp.ne.s32.totalorder %s45, %s46
    %p58 = scmp.eq.s32.totalorder %s15, 1
    %p59 = por %p57, %p58
    %p61 = scmp.ne.s32.totalorder %s46, %s60
    %p62 = scmp.eq.s32.totalorder %s15, 0
    %p63 = por %p61, %p62
    %s65 = sadd.s32 %s64, 1
    %p68 = scmp.eq.s32.totalorder %s9, 1
    %p69 = scmp.ne.s32.totalorder %s64, %s66
    %p70 = scmp.eq.s32.totalorder %s9, 0
    %p71 = por %p69, %p70
    %p72 = scmp.ne.s32.totalorder %s64, %s66
    %p73 = scmp.eq.s32.totalorder %s14, 1
    %p74 = por %p72, %p73
    %p75 = scmp.ne.s32.totalorder %s66, %s67
    %p76 = scmp.eq.s32.totalorder %s14, 0
    %p77 = por %p75, %p76
    %p78 = scmp.ne.s32.totalorder %s66, %s67
    %p79 = scmp.eq.s32.totalorder %s15, 1
    %p80 = por %p78, %p79
    %p82 = scmp.ne.s32.totalorder %s67, %s81
    %p83 = scmp.eq.s32.totalorder %s15, 0
    %p84 = por %p82, %p83
    %s85 = ssub.s32 %s9, %s16
    %p86 = scmp.eq.s32.totalorder %s85, 0
    %s88 = sadd.s32 %s87, 1
    %s89 = scalar_select %p86, %s87, %s88
    %p92 = pneg %p86
    %p93 = scmp.eq.s32.totalorder %s9, 1
    %p94 = por %p92, %p93
    %p95 = scmp.ne.s32.totalorder %s87, %s90
    %p96 = scmp.eq.s32.totalorder %s9, 0
    %p97 = por %p95, %p96
    %p98 = scmp.ne.s32.totalorder %s87, %s90
    %p99 = scmp.eq.s32.totalorder %s14, 1
    %p100 = por %p98, %p99
    %p101 = scmp.ne.s32.totalorder %s90, %s91
    %p102 = scmp.eq.s32.totalorder %s14, 0
    %p103 = por %p101, %p102
    %p104 = scmp.ne.s32.totalorder %s90, %s91
    %p105 = scmp.eq.s32.totalorder %s15, 1
    %p106 = por %p104, %p105
    %p108 = scmp.ne.s32.totalorder %s91, %s107
    %p109 = scmp.eq.s32.totalorder %s15, 0
    %p110 = por %p108, %p109
    %p111 = scmp.le.s32.totalorder 1, %s9
    %p112 = scmp.lt.s32.totalorder %s9, 3
    %p113 = pnand %p111, %p112
    %p114 = pneg %p113
    // Predicated region
    $region9: #{msff_forward.1} parent=5 // pred_check
      _
    $region10: #{msff_forward.1} parent=5 // pred_check_branch
      %116 = sbr.rel (%p113) target = $region12
    $region11: #{msff_forward.1} parent=5 // pred_region
      %s117 = ssub.s32 %s9, 1
      // Predicated region
      $region13: #{msff_forward.1} parent=11 // pred_check
        %p118 = pneg %p56
      $region14: #{msff_forward.1} parent=11 // pred_check_branch
        %120 = sbr.rel (%p118) target = $region16
      $region15: #{msff_forward.1} parent=11 // pred_region
        _
      $region16: #{msff_forward.1} parent=11 // pred_fallthru
        _
      // Predicated region
      $region17: #{msff_forward.1} parent=11 // pred_check
        %p121 = pneg %p77
      $region18: #{msff_forward.1} parent=11 // pred_check_branch
        %123 = sbr.rel (%p121) target = $region20
      $region19: #{msff_forward.1} parent=11 // pred_region
        _
      $region20: #{msff_forward.1} parent=11 // pred_fallthru
        _
    $region12: #{msff_forward.1} parent=5 // pred_fallthru
      _
    %p124 = scmp.lt.s32.totalorder %s9, 2
    // Predicated region
    $region21: #{msff_forward.1} parent=5 // pred_check
      %p125 = pneg %p124
    $region22: #{msff_forward.1} parent=5 // pred_check_branch
      %127 = sbr.rel (%p125) target = $region24
    $region23: #{msff_forward.1} parent=5 // pred_region
      // Predicated region
      $region25: #{msff_forward.1} parent=23 // pred_check
        %p128 = pneg %p29
      $region26: #{msff_forward.1} parent=23 // pred_check_branch
        %130 = sbr.rel (%p128) target = $region28
      $region27: #{msff_forward.1} parent=23 // pred_region
        %p131 = scmp.lt.s32.totalorder %s9, 1
        %s132 = scalar_select %p131, %s9, 1
        %s133 = smul.addr %s132, 2
        %s134 = smul.addr %s133, 8
        %s135 = scalar_lea.vmem %s0, %s134
      $region28: #{msff_forward.1} parent=23 // pred_fallthru
        _
    $region24: #{msff_forward.1} parent=5 // pred_fallthru
      _
    %p136 = scmp.le.s32.totalorder 1, %s9
    %p137 = scmp.lt.s32.totalorder %s9, 3
    %p138 = pnand %p136, %p137
    %p139 = pneg %p138
    // Predicated region
    $region29: #{msff_forward.1} parent=5 // pred_check
      _
    $region30: #{msff_forward.1} parent=5 // pred_check_branch
      %141 = sbr.rel (%p138) target = $region32
    $region31: #{msff_forward.1} parent=5 // pred_region
      %s142 = ssub.s32 %s9, 1
      %p143 = scmp.lt.s32.totalorder %s14, 1
      %s144 = scalar_select %p143, %s14, 1
      %s145 = smul.addr %s144, 2
      %s146 = smul.addr %s145, 8
      %s147 = scalar_lea.vmem %s0, %s146
      %p148 = pneg %p35
      %p149 = pneg %p32
      %p150 = pneg %p56
      %p151 = pneg %p53
      %p152 = pneg %p77
      %p153 = pneg %p74
      %p154 = pneg %p103
      %p155 = pneg %p100
      %p156 = scmp.lt.s32.totalorder %s14, 1
      %s157 = scalar_select %p156, %s14, 1
      %s158 = smul.addr %s157, 2
      %s159 = smul.addr %s158, 8
      %s160 = scalar_lea.vmem %s3, %s159
      %p161 = scmp.lt.s32.totalorder %s14, 1
      %s162 = scalar_select %p161, %s14, 1
      %s163 = smul.addr %s162, 2
      %s164 = smul.addr %s163, 8
      %s165 = scalar_lea.vmem %s0, %s164
      %p166 = scmp.lt.s32.totalorder %s14, 1
      %s167 = scalar_select %p166, %s14, 1
      %s168 = smul.addr %s167, 2
      %s169 = smul.addr %s168, 8
      %s170 = scalar_lea.vmem %s3, %s169
      %v172 = vlaneseq
      %v173 = vand.u32 %v172, 127
      %v174 = vadd.s32 %v173, 128
      %v175 = vand.u32 %v173, 255
      %v176 = vand.u32 %v174, 255
      %v177 = vshra.s32 %v175, 4
      %v178 = vshra.s32 %v176, 4
      %v179 = vand.u32 %v175, 15
      %v180 = vand.u32 %v176, 15
      %v181 = vld [vmem:[%s165] sm:$0xff]
      %v182 = vld [vmem:[%s165 + $0x8] sm:$0xff]
      %v183 = vld [vmem:[%s1] sm:$0xff]
      %v184 = vld [vmem:[%s1 + $0x20] sm:$0xff]
      %v185 = vld [vmem:[%s1 + $0x40] sm:$0xff]
      %v186 = vld [vmem:[%s1 + $0x60] sm:$0xff]
      %v187 = vpack.c.bf16 %v184, %v183
      %v188 = vpack.c.bf16 %v186, %v185
      %v189 = vld [vmem:[%s2] sm:$0xff]
      %v190 = vld [vmem:[%s2 + $0x8] sm:$0xff]
      %v191 = vld [vmem:[%s2 + $0x10] sm:$0xff]
      %v192 = vld [vmem:[%s2 + $0x18] sm:$0xff]
      %v193 = vpack.c.bf16 %v181, %v181
      %v194 = vpack.c.bf16 %v182, %v182
      %196 = vset.pattern.permute.xlu0 0
      %197 = vperm.xlu0 %196, %v189
      %v198 = vpop.permute.xlu0 %197
      %201 = vset.pattern.permute.xlu0 0
      %202 = vperm.xlu0 %201, %v190
      %v203 = vpop.permute.xlu0 %202
      %206 = vset.pattern.permute.xlu0 0
      %207 = vperm.xlu0 %206, %v191
      %v208 = vpop.permute.xlu0 %207
      %211 = vset.pattern.permute.xlu0 0
      %212 = vperm.xlu0 %211, %v192
      %v213 = vpop.permute.xlu0 %212
      %vm215 = vcmask 64512
      %v217 = vsel %vm215, %v187, 0
      %v220 = vsel %vm215, %v188, 0
      %vm222 = vcmask 1043456
      %v224 = vsel %vm222, %v193, 0
      %v227 = vsel %vm222, %v194, 0
      %229 = vmatprep.subr.bf16.mxu0 %v227
      %230 = vmatpush1.bf16.msra.mxu0 %v224
      %231 = vmatprep.subr.bf16.mxu0 0
      %232 = vmatpush1.bf16.msra.mxu0 0
      %233 = vmatprep.subr.bf16.mxu0 0
      %234 = vmatpush1.bf16.msra.mxu0 0
      %235 = vmatprep.subr.bf16.mxu0 0
      %236 = vmatpush1.bf16.msra.mxu0 0
      %237 = vmatprep.subr.bf16.mxu0 0
      %238 = vmatpush1.bf16.msra.mxu0 0
      %239 = vmatprep.subr.bf16.mxu0 0
      %240 = vmatpush1.bf16.msra.mxu0 0
      %241 = vmatprep.subr.bf16.mxu0 0
      %242 = vmatpush1.bf16.msra.mxu0 0
      %243 = vmatprep.subr.bf16.mxu0 0
      %244 = vmatpush1.bf16.msra.mxu0 0
      %245 = vmatprep.subr.bf16.mxu0 0
      %246 = vmatpush1.bf16.msra.mxu0 0
      %247 = vmatprep.subr.bf16.mxu0 0
      %248 = vmatpush1.bf16.msra.mxu0 0
      %249 = vmatprep.subr.bf16.mxu0 0
      %250 = vmatpush1.bf16.msra.mxu0 0
      %251 = vmatprep.subr.bf16.mxu0 0
      %252 = vmatpush1.bf16.msra.mxu0 0
      %253 = vmatprep.subr.bf16.mxu0 0
      %254 = vmatpush1.bf16.msra.mxu0 0
      %255 = vmatprep.subr.bf16.mxu0 0
      %256 = vmatpush1.bf16.msra.mxu0 0
      %257 = vmatprep.subr.bf16.mxu0 0
      %258 = vmatpush1.bf16.msra.mxu0 0
      %259 = vmatprep.subr.bf16.mxu0 0
      %260 = vmatpush1.bf16.msra.mxu0 0
      %261 = vmatprep.mubr.bf16.mxu0 0
      %262 = vmatmul.mubr.bf16.gmra.mrb[0].mxu0 %v217
      %v263 = vpop.f32.mrb[0].mxu0
      %v264 = vadd.f32 %v198, %v263
      %v265 = vpop.f32.mrb[0].mxu0
      %v266 = vadd.f32 %v198, %v265
      %v267 = vpop.f32.mrb[0].mxu0
      %v268 = vadd.f32 %v203, %v267
      %v269 = vpop.f32.mrb[0].mxu0
      %v270 = vadd.f32 %v203, %v269
      %271 = vmatprep.mubr.bf16.mxu0 0
      %272 = vmatmul.mubr.bf16.gmra.mrb[0].mxu0 %v220
      %v273 = vpop.f32.mrb[0].mxu0
      %v274 = vadd.f32 %v208, %v273
      %v275 = vpop.f32.mrb[0].mxu0
      %v276 = vadd.f32 %v208, %v275
      %v277 = vpop.f32.mrb[0].mxu0
      %v278 = vadd.f32 %v213, %v277
      %v279 = vpop.f32.mrb[0].mxu0
      %v280 = vadd.f32 %v213, %v279
      %281 = vdwg.mxu0
      %v282 = vmax.f32 %v264, 0.0
      %v283 = vmax.f32 %v266, 0.0
      %v284 = vmax.f32 %v268, 0.0
      %v285 = vmax.f32 %v270, 0.0
      %v286 = vmax.f32 %v274, 0.0
      %v287 = vmax.f32 %v276, 0.0
      %v288 = vmax.f32 %v278, 0.0
      %v289 = vmax.f32 %v280, 0.0
      %290 = vst [vmem:[#allocation3] sm:$0xff] %v282
      %291 = vst [vmem:[#allocation3 + $0x8] sm:$0xff] %v283
      %v292 = vld [vmem:[%s1 + $0x80] sm:$0xff]
      %v293 = vpack.c.bf16 %v292, %v292
      %v294 = vld [vmem:[%s2 + $0x20] sm:$0xff]
      %vm295 = vcmp.ge.s32.totalorder %v177, 1
      %vm296 = vcmp.ge.s32.totalorder %v178, 1
      %vm297 = vcmp.lt.s32.totalorder %v177, 17
      %vm298 = vcmp.lt.s32.totalorder %v178, 17
      %vm299 = vmand %vm295, %vm297
      %vm300 = vmand %vm296, %vm298
      %vm301 = vcmp.ge.s32.totalorder %v177, 0
      %vm302 = vcmp.ge.s32.totalorder %v178, 0
      %vm303 = vcmp.lt.s32.totalorder %v177, 16
      %vm304 = vcmp.lt.s32.totalorder %v178, 16
      %vm305 = vmand %vm301, %vm303
      %vm306 = vmand %vm302, %vm304
      %vm307 = vcmp.ge.s32.totalorder %v177, 4294967295
      %vm308 = vcmp.ge.s32.totalorder %v178, 4294967295
      %vm309 = vcmp.lt.s32.totalorder %v177, 15
      %vm310 = vcmp.lt.s32.totalorder %v178, 15
      %vm311 = vmand %vm307, %vm309
      %vm312 = vmand %vm308, %vm310
      %vm313 = vcmp.ge.s32.totalorder %v179, 1
      %vm314 = vcmp.ge.s32.totalorder %v180, 1
      %vm315 = vcmp.lt.s32.totalorder %v179, 17
      %vm316 = vcmp.lt.s32.totalorder %v180, 17
      %vm317 = vmand %vm313, %vm315
      %vm318 = vmand %vm314, %vm316
      %vm319 = vcmp.ge.s32.totalorder %v179, 0
      %vm320 = vcmp.ge.s32.totalorder %v180, 0
      %vm321 = vcmp.lt.s32.totalorder %v179, 16
      %vm322 = vcmp.lt.s32.totalorder %v180, 16
      %vm323 = vmand %vm319, %vm321
      %vm324 = vmand %vm320, %vm322
      %vm325 = vcmp.ge.s32.totalorder %v179, 4294967295
      %vm326 = vcmp.ge.s32.totalorder %v180, 4294967295
      %vm327 = vcmp.lt.s32.totalorder %v179, 15
      %vm328 = vcmp.lt.s32.totalorder %v180, 15
      %vm329 = vmand %vm325, %vm327
      %vm330 = vmand %vm326, %vm328
      %331 = vrot.lane.b32.xlu0 %v284, 17
      %v332 = vpop.permute.xlu0 %331
      %333 = vrot.lane.b32.xlu0 %v285, 17
      %v334 = vpop.permute.xlu0 %333
      %vm335 = vcmp.lt.s32.totalorder %v173, 17
      %v336 = vsel %vm335, %v332, %v334
      %v337 = vsel %vm335, %v334, %v332
      %vm338 = vmand %vm299, %vm317
      %vm339 = vmand %vm300, %vm318
      %v340 = vsel %vm338, 1, 0
      %v341 = vsel %vm339, 1, 0
      %vm342 = vcmp.eq.s32.totalorder %v340, 1
      %vm343 = vcmp.eq.s32.totalorder %v341, 1
      %v344 = vsel %vm342, %v337, 0.0
      %v345 = vsel %vm343, %v336, 0.0
      %346 = vrot.lane.b32.xlu0 %v284, 16
      %v347 = vpop.permute.xlu0 %346
      %348 = vrot.lane.b32.xlu0 %v285, 16
      %v349 = vpop.permute.xlu0 %348
      %vm350 = vcmp.lt.s32.totalorder %v173, 16
      %v351 = vsel %vm350, %v347, %v349
      %v352 = vsel %vm350, %v349, %v347
      %vm353 = vmand %vm299, %vm323
      %vm354 = vmand %vm300, %vm324
      %v355 = vsel %vm353, 1, 0
      %v356 = vsel %vm354, 1, 0
      %vm357 = vcmp.eq.s32.totalorder %v355, 1
      %vm358 = vcmp.eq.s32.totalorder %v356, 1
      %v359 = vsel %vm357, %v352, 0.0
      %v360 = vsel %vm358, %v351, 0.0
      %v361 = vpack.c.bf16 %v359, %v344
      %v362 = vpack.c.bf16 %v360, %v345
      %363 = vst [vmem:[#allocation2] sm:$0xff] %v361
      %364 = vst [vmem:[#allocation2 + $0x8] sm:$0xff] %v362
      %365 = vrot.lane.b32.xlu0 %v284, 15
      %v366 = vpop.permute.xlu0 %365
      %367 = vrot.lane.b32.xlu0 %v285, 15
      %v368 = vpop.permute.xlu0 %367
      %vm369 = vcmp.lt.s32.totalorder %v173, 15
      %v370 = vsel %vm369, %v366, %v368
      %v371 = vsel %vm369, %v368, %v366
      %vm372 = vmand %vm299, %vm329
      %vm373 = vmand %vm300, %vm330
      %v374 = vsel %vm372, 1, 0
      %v375 = vsel %vm373, 1, 0
      %vm376 = vcmp.eq.s32.totalorder %v374, 1
      %vm377 = vcmp.eq.s32.totalorder %v375, 1
      %v378 = vsel %vm376, %v371, 0.0
      %v379 = vsel %vm377, %v370, 0.0
      %380 = vrot.lane.b32.xlu0 %v284, 1
      %v381 = vpop.permute.xlu0 %380
      %382 = vrot.lane.b32.xlu0 %v285, 1
      %v383 = vpop.permute.xlu0 %382
      %vm384 = vcmp.lt.s32.totalorder %v173, 1
      %v385 = vsel %vm384, %v381, %v383
      %v386 = vsel %vm384, %v383, %v381
      %vm387 = vmand %vm305, %vm317
      %vm388 = vmand %vm306, %vm318
      %v389 = vsel %vm387, 1, 0
      %v390 = vsel %vm388, 1, 0
      %vm391 = vcmp.eq.s32.totalorder %v389, 1
      %vm392 = vcmp.eq.s32.totalorder %v390, 1
      %v393 = vsel %vm391, %v386, 0.0
      %v394 = vsel %vm392, %v385, 0.0
      %v395 = vpack.c.bf16 %v393, %v378
      %v396 = vpack.c.bf16 %v394, %v379
      %397 = vst [vmem:[#allocation2 + $0x10] sm:$0xff] %v395
      %398 = vst [vmem:[#allocation2 + $0x18] sm:$0xff] %v396
      %vm399 = vmand %vm305, %vm323
      %vm400 = vmand %vm306, %vm324
      %v401 = vsel %vm399, 1, 0
      %v402 = vsel %vm400, 1, 0
      %vm403 = vcmp.eq.s32.totalorder %v401, 1
      %vm404 = vcmp.eq.s32.totalorder %v402, 1
      %v405 = vsel %vm403, %v284, 0.0
      %v406 = vsel %vm404, %v285, 0.0
      %407 = vrot.lane.b32.xlu0 %v284, 127
      %v408 = vpop.permute.xlu0 %407
      %409 = vrot.lane.b32.xlu0 %v285, 127
      %v410 = vpop.permute.xlu0 %409
      %vm411 = vcmp.lt.s32.totalorder %v173, 127
      %v412 = vsel %vm411, %v408, %v410
      %v413 = vsel %vm411, %v410, %v408
      %vm414 = vmand %vm305, %vm329
      %vm415 = vmand %vm306, %vm330
      %v416 = vsel %vm414, 1, 0
      %v417 = vsel %vm415, 1, 0
      %vm418 = vcmp.eq.s32.totalorder %v416, 1
      %vm419 = vcmp.eq.s32.totalorder %v417, 1
      %v420 = vsel %vm418, %v412, 0.0
      %v421 = vsel %vm419, %v413, 0.0
      %v422 = vpack.c.bf16 %v420, %v405
      %v423 = vpack.c.bf16 %v421, %v406
      %424 = vst [vmem:[#allocation2 + $0x20] sm:$0xff] %v422
      %425 = vst [vmem:[#allocation2 + $0x28] sm:$0xff] %v423
      %426 = vrot.lane.b32.xlu0 %v284, 113
      %v427 = vpop.permute.xlu0 %426
      %428 = vrot.lane.b32.xlu0 %v285, 113
      %v429 = vpop.permute.xlu0 %428
      %vm430 = vcmp.lt.s32.totalorder %v173, 113
      %v431 = vsel %vm430, %v427, %v429
      %v432 = vsel %vm430, %v429, %v427
      %vm433 = vmand %vm311, %vm317
      %vm434 = vmand %vm312, %vm318
      %v435 = vsel %vm433, 1, 0
      %v436 = vsel %vm434, 1, 0
      %vm437 = vcmp.eq.s32.totalorder %v435, 1
      %vm438 = vcmp.eq.s32.totalorder %v436, 1
      %v439 = vsel %vm437, %v431, 0.0
      %v440 = vsel %vm438, %v432, 0.0
      %441 = vrot.lane.b32.xlu0 %v284, 112
      %v442 = vpop.permute.xlu0 %441
      %443 = vrot.lane.b32.xlu0 %v285, 112
      %v444 = vpop.permute.xlu0 %443
      %vm445 = vcmp.lt.s32.totalorder %v173, 112
      %v446 = vsel %vm445, %v442, %v444
      %v447 = vsel %vm445, %v444, %v442
      %vm448 = vmand %vm311, %vm323
      %vm449 = vmand %vm312, %vm324
      %v450 = vsel %vm448, 1, 0
      %v451 = vsel %vm449, 1, 0
      %vm452 = vcmp.eq.s32.totalorder %v450, 1
      %vm453 = vcmp.eq.s32.totalorder %v451, 1
      %v454 = vsel %vm452, %v446, 0.0
      %v455 = vsel %vm453, %v447, 0.0
      %v456 = vpack.c.bf16 %v454, %v439
      %v457 = vpack.c.bf16 %v455, %v440
      %458 = vst [vmem:[#allocation2 + $0x30] sm:$0xff] %v456
      %459 = vst [vmem:[#allocation2 + $0x38] sm:$0xff] %v457
      %460 = vrot.lane.b32.xlu0 %v284, 111
      %v461 = vpop.permute.xlu0 %460
      %462 = vrot.lane.b32.xlu0 %v285, 111
      %v463 = vpop.permute.xlu0 %462
      %vm464 = vcmp.lt.s32.totalorder %v173, 111
      %v465 = vsel %vm464, %v461, %v463
      %v466 = vsel %vm464, %v463, %v461
      %vm467 = vmand %vm311, %vm329
      %vm468 = vmand %vm312, %vm330
      %v469 = vsel %vm467, 1, 0
      %v470 = vsel %vm468, 1, 0
      %vm471 = vcmp.eq.s32.totalorder %v469, 1
      %vm472 = vcmp.eq.s32.totalorder %v470, 1
      %v473 = vsel %vm471, %v465, 0.0
      %v474 = vsel %vm472, %v466, 0.0
      %v475 = vpack.c.bf16 0.0, %v473
      %v476 = vpack.c.bf16 0.0, %v474
      %477 = vst [vmem:[#allocation2 + $0x40] sm:$0xff] %v475
      %478 = vst [vmem:[#allocation2 + $0x48] sm:$0xff] %v476
      %v479 = vld [vmem:[#allocation2] sm:$0xff]
      %v480 = vld [vmem:[#allocation2 + $0x8] sm:$0xff]
      %v481 = vld [vmem:[#allocation2 + $0x10] sm:$0xff]
      %v482 = vld [vmem:[#allocation2 + $0x18] sm:$0xff]
      %v483 = vld [vmem:[#allocation2 + $0x20] sm:$0xff]
      %v484 = vld [vmem:[#allocation2 + $0x28] sm:$0xff]
      %v485 = vld [vmem:[#allocation2 + $0x30] sm:$0xff]
      %v486 = vld [vmem:[#allocation2 + $0x38] sm:$0xff]
      %v487 = vld [vmem:[#allocation2 + $0x40] sm:$0xf]
      %v488 = vld [vmem:[#allocation2 + $0x48] sm:$0xf]
      %490 = vset.pattern.permute.xlu0 0
      %491 = vperm.xlu0 %490, %v294
      %v492 = vpop.permute.xlu0 %491
      %vm494 = vcmask 588800
      %v496 = vsel %vm494, %v293, 0
      %v499 = vsel %vm222, %v487, 0
      %v502 = vsel %vm222, %v488, 0
      %504 = vmatprep.subr.bf16.mxu0 %v480
      %505 = vmatpush1.bf16.msra.mxu0 %v479
      %506 = vmatprep.subr.bf16.mxu0 %v482
      %507 = vmatpush1.bf16.msra.mxu0 %v481
      %508 = vmatprep.subr.bf16.mxu0 %v484
      %509 = vmatpush1.bf16.msra.mxu0 %v483
      %510 = vmatprep.subr.bf16.mxu0 %v486
      %511 = vmatpush1.bf16.msra.mxu0 %v485
      %512 = vmatprep.subr.bf16.mxu0 %v502
      %513 = vmatpush1.bf16.msra.mxu0 %v499
      %514 = vmatprep.subr.bf16.mxu0 0
      %515 = vmatpush1.bf16.msra.mxu0 0
      %516 = vmatprep.subr.bf16.mxu0 0
      %517 = vmatpush1.bf16.msra.mxu0 0
      %518 = vmatprep.subr.bf16.mxu0 0
      %519 = vmatpush1.bf16.msra.mxu0 0
      %520 = vmatprep.subr.bf16.mxu0 0
      %521 = vmatpush1.bf16.msra.mxu0 0
      %522 = vmatprep.subr.bf16.mxu0 0
      %523 = vmatpush1.bf16.msra.mxu0 0
      %524 = vmatprep.subr.bf16.mxu0 0
      %525 = vmatpush1.bf16.msra.mxu0 0
      %526 = vmatprep.subr.bf16.mxu0 0
      %527 = vmatpush1.bf16.msra.mxu0 0
      %528 = vmatprep.subr.bf16.mxu0 0
      %529 = vmatpush1.bf16.msra.mxu0 0
      %530 = vmatprep.subr.bf16.mxu0 0
      %531 = vmatpush1.bf16.msra.mxu0 0
      %532 = vmatprep.subr.bf16.mxu0 0
      %533 = vmatpush1.bf16.msra.mxu0 0
      %534 = vmatprep.subr.bf16.mxu0 0
      %535 = vmatpush1.bf16.msra.mxu0 0
      %536 = vmatprep.mubr.bf16.mxu0 0
      %537 = vmatmul.mubr.bf16.gmra.mrb[0].mxu0 %v496
      %v538 = vpop.f32.mrb[0].mxu0
      %v539 = vadd.f32 %v492, %v538
      %v540 = vpop.f32.mrb[0].mxu0
      %v541 = vadd.f32 %v492, %v540
      %v542 = vpop.f32.mrb[0].mxu0
      %v543 = vpop.f32.mrb[0].mxu0
      %544 = vdwg.mxu0
      %v545 = vmax.f32 %v539, 0.0
      %v546 = vmax.f32 %v541, 0.0
      %v547 = vld [vmem:[%s1 + $0xa0] sm:$0xff]
      %v548 = vpack.c.bf16 %v547, %v547
      %v549 = vld [vmem:[%s2 + $0x28] sm:$0xff]
      %v550 = vpack.c.bf16 %v545, %v545
      %v551 = vpack.c.bf16 %v546, %v546
      %553 = vset.pattern.permute.xlu0 0
      %554 = vperm.xlu0 %553, %v549
      %v555 = vpop.permute.xlu0 %554
      %v558 = vsel %vm215, %v548, 0
      %v561 = vsel %vm222, %v550, 0
      %v564 = vsel %vm222, %v551, 0
      %566 = vmatprep.subr.bf16.mxu0 %v564
      %567 = vmatpush1.bf16.msra.mxu0 %v561
      %568 = vmatprep.subr.bf16.mxu0 0
      %569 = vmatpush1.bf16.msra.mxu0 0
      %570 = vmatprep.subr.bf16.mxu0 0
      %571 = vmatpush1.bf16.msra.mxu0 0
      %572 = vmatprep.subr.bf16.mxu0 0
      %573 = vmatpush1.bf16.msra.mxu0 0
      %574 = vmatprep.subr.bf16.mxu0 0
      %575 = vmatpush1.bf16.msra.mxu0 0
      %576 = vmatprep.subr.bf16.mxu0 0
      %577 = vmatpush1.bf16.msra.mxu0 0
      %578 = vmatprep.subr.bf16.mxu0 0
      %579 = vmatpush1.bf16.msra.mxu0 0
      %580 = vmatprep.subr.bf16.mxu0 0
      %581 = vmatpush1.bf16.msra.mxu0 0
      %582 = vmatprep.subr.bf16.mxu0 0
      %583 = vmatpush1.bf16.msra.mxu0 0
      %584 = vmatprep.subr.bf16.mxu0 0
      %585 = vmatpush1.bf16.msra.mxu0 0
      %586 = vmatprep.subr.bf16.mxu0 0
      %587 = vmatpush1.bf16.msra.mxu0 0
      %588 = vmatprep.subr.bf16.mxu0 0
      %589 = vmatpush1.bf16.msra.mxu0 0
      %590 = vmatprep.subr.bf16.mxu0 0
      %591 = vmatpush1.bf16.msra.mxu0 0
      %592 = vmatprep.subr.bf16.mxu0 0
      %593 = vmatpush1.bf16.msra.mxu0 0
      %594 = vmatprep.subr.bf16.mxu0 0
      %595 = vmatpush1.bf16.msra.mxu0 0
      %596 = vmatprep.subr.bf16.mxu0 0
      %597 = vmatpush1.bf16.msra.mxu0 0
      %598 = vmatprep.mubr.bf16.mxu0 0
      %599 = vmatmul.mubr.bf16.gmra.mrb[0].mxu0 %v558
      %v600 = vpop.f32.mrb[0].mxu0
      %v601 = vadd.f32 %v555, %v600
      %v602 = vpop.f32.mrb[0].mxu0
      %v603 = vadd.f32 %v555, %v602
      %v604 = vpop.f32.mrb[0].mxu0
      %v605 = vpop.f32.mrb[0].mxu0
      %606 = vdwg.mxu0
      %v607 = vmax.f32 %v601, 0.0
      %v608 = vmax.f32 %v603, 0.0
      %609 = vst [vmem:[#allocation3 + $0x10] sm:$0xff] %v607
      %610 = vst [vmem:[#allocation3 + $0x18] sm:$0xff] %v608
      %v611 = vld [vmem:[%s1 + $0xc0] sm:$0xff]
      %v612 = vld [vmem:[%s1 + $0xc8] sm:$0xff]
      %v613 = vpack.c.bf16 %v611, %v611
      %v614 = vpack.c.bf16 %v612, %v612
      %v615 = vld [vmem:[%s2 + $0x30] sm:$0xff]
      %vm616 = vcmp.ge.s32.totalorder %v177, 2
      %vm617 = vcmp.ge.s32.totalorder %v178, 2
      %vm618 = vcmp.lt.s32.totalorder %v177, 18
      %vm619 = vcmp.lt.s32.totalorder %v178, 18
      %vm620 = vmand %vm616, %vm618
      %vm621 = vmand %vm617, %vm619
      %vm622 = vcmp.ge.s32.totalorder %v177, 4294967294
      %vm623 = vcmp.ge.s32.totalorder %v178, 4294967294
      %vm624 = vcmp.lt.s32.totalorder %v177, 14
      %vm625 = vcmp.lt.s32.totalorder %v178, 14
      %vm626 = vmand %vm622, %vm624
      %vm627 = vmand %vm623, %vm625
      %vm628 = vcmp.ge.s32.totalorder %v179, 2
      %vm629 = vcmp.ge.s32.totalorder %v180, 2
      %vm630 = vcmp.lt.s32.totalorder %v179, 18
      %vm631 = vcmp.lt.s32.totalorder %v180, 18
      %vm632 = vmand %vm628, %vm630
      %vm633 = vmand %vm629, %vm631
      %vm634 = vcmp.ge.s32.totalorder %v179, 4294967294
      %vm635 = vcmp.ge.s32.totalorder %v180, 4294967294
      %vm636 = vcmp.lt.s32.totalorder %v179, 14
      %vm637 = vcmp.lt.s32.totalorder %v180, 14
      %vm638 = vmand %vm634, %vm636
      %vm639 = vmand %vm635, %vm637
      %640 = vrot.lane.b32.xlu0 %v286, 34
      %v641 = vpop.permute.xlu0 %640
      %642 = vrot.lane.b32.xlu0 %v287, 34
      %v643 = vpop.permute.xlu0 %642
      %vm644 = vcmp.lt.s32.totalorder %v173, 34
      %v645 = vsel %vm644, %v641, %v643
      %v646 = vsel %vm644, %v643, %v641
      %vm647 = vmand %vm620, %vm632
      %vm648 = vmand %vm621, %vm633
      %v649 = vsel %vm647, 1, 0
      %v650 = vsel %vm648, 1, 0
      %vm651 = vcmp.eq.s32.totalorder %v649, 1
      %vm652 = vcmp.eq.s32.totalorder %v650, 1
      %v653 = vsel %vm651, %v646, 0.0
      %v654 = vsel %vm652, %v645, 0.0
      %655 = vrot.lane.b32.xlu0 %v286, 33
      %v656 = vpop.permute.xlu0 %655
      %657 = vrot.lane.b32.xlu0 %v287, 33
      %v658 = vpop.permute.xlu0 %657
      %vm659 = vcmp.lt.s32.totalorder %v173, 33
      %v660 = vsel %vm659, %v656, %v658
      %v661 = vsel %vm659, %v658, %v656
      %vm662 = vmand %vm620, %vm317
      %vm663 = vmand %vm621, %vm318
      %v664 = vsel %vm662, 1, 0
      %v665 = vsel %vm663, 1, 0
      %vm666 = vcmp.eq.s32.totalorder %v664, 1
      %vm667 = vcmp.eq.s32.totalorder %v665, 1
      %v668 = vsel %vm666, %v661, 0.0
      %v669 = vsel %vm667, %v660, 0.0
      %v670 = vpack.c.bf16 %v668, %v653
      %v671 = vpack.c.bf16 %v669, %v654
      %672 = vst [vmem:[#allocation2] sm:$0xff] %v670
      %673 = vst [vmem:[#allocation2 + $0x8] sm:$0xff] %v671
      %674 = vrot.lane.b32.xlu0 %v286, 32
      %v675 = vpop.permute.xlu0 %674
      %676 = vrot.lane.b32.xlu0 %v287, 32
      %v677 = vpop.permute.xlu0 %676
      %vm678 = vcmp.lt.s32.totalorder %v173, 32
      %v679 = vsel %vm678, %v675, %v677
      %v680 = vsel %vm678, %v677, %v675
      %vm681 = vmand %vm620, %vm323
      %vm682 = vmand %vm621, %vm324
      %v683 = vsel %vm681, 1, 0
      %v684 = vsel %vm682, 1, 0
      %vm685 = vcmp.eq.s32.totalorder %v683, 1
      %vm686 = vcmp.eq.s32.totalorder %v684, 1
      %v687 = vsel %vm685, %v680, 0.0
      %v688 = vsel %vm686, %v679, 0.0
      %689 = vrot.lane.b32.xlu0 %v286, 31
      %v690 = vpop.permute.xlu0 %689
      %691 = vrot.lane.b32.xlu0 %v287, 31
      %v692 = vpop.permute.xlu0 %691
      %vm693 = vcmp.lt.s32.totalorder %v173, 31
      %v694 = vsel %vm693, %v690, %v692
      %v695 = vsel %vm693, %v692, %v690
      %vm696 = vmand %vm620, %vm329
      %vm697 = vmand %vm621, %vm330
      %v698 = vsel %vm696, 1, 0
      %v699 = vsel %vm697, 1, 0
      %vm700 = vcmp.eq.s32.totalorder %v698, 1
      %vm701 = vcmp.eq.s32.totalorder %v699, 1
      %v702 = vsel %vm700, %v695, 0.0
      %v703 = vsel %vm701, %v694, 0.0
      %v704 = vpack.c.bf16 %v702, %v687
      %v705 = vpack.c.bf16 %v703, %v688
      %706 = vst [vmem:[#allocation2 + $0x10] sm:$0xff] %v704
      %707 = vst [vmem:[#allocation2 + $0x18] sm:$0xff] %v705
      %708 = vrot.lane.b32.xlu0 %v286, 30
      %v709 = vpop.permute.xlu0 %708
      %710 = vrot.lane.b32.xlu0 %v287, 30
      %v711 = vpop.permute.xlu0 %710
      %vm712 = vcmp.lt.s32.totalorder %v173, 30
      %v713 = vsel %vm712, %v709, %v711
      %v714 = vsel %vm712, %v711, %v709
      %vm715 = vmand %vm620, %vm638
      %vm716 = vmand %vm621, %vm639
      %v717 = vsel %vm715, 1, 0
      %v718 = vsel %vm716, 1, 0
      %vm719 = vcmp.eq.s32.totalorder %v717, 1
      %vm720 = vcmp.eq.s32.totalorder %v718, 1
      %v721 = vsel %vm719, %v714, 0.0
      %v722 = vsel %vm720, %v713, 0.0
      %723 = vrot.lane.b32.xlu0 %v286, 18
      %v724 = vpop.permute.xlu0 %723
      %725 = vrot.lane.b32.xlu0 %v287, 18
      %v726 = vpop.permute.xlu0 %725
      %vm727 = vcmp.lt.s32.totalorder %v173, 18
      %v728 = vsel %vm727, %v724, %v726
      %v729 = vsel %vm727, %v726, %v724
      %vm730 = vmand %vm299, %vm632
      %vm731 = vmand %vm300, %vm633
      %v732 = vsel %vm730, 1, 0
      %v733 = vsel %vm731, 1, 0
      %vm734 = vcmp.eq.s32.totalorder %v732, 1
      %vm735 = vcmp.eq.s32.totalorder %v733, 1
      %v736 = vsel %vm734, %v729, 0.0
      %v737 = vsel %vm735, %v728, 0.0
      %v738 = vpack.c.bf16 %v736, %v721
      %v739 = vpack.c.bf16 %v737, %v722
      %740 = vst [vmem:[#allocation2 + $0x20] sm:$0xff] %v738
      %741 = vst [vmem:[#allocation2 + $0x28] sm:$0xff] %v739
      %742 = vrot.lane.b32.xlu0 %v286, 17
      %v743 = vpop.permute.xlu0 %742
      %744 = vrot.lane.b32.xlu0 %v287, 17
      %v745 = vpop.permute.xlu0 %744
      %v746 = vsel %vm335, %v743, %v745
      %v747 = vsel %vm335, %v745, %v743
      %v748 = vsel %vm342, %v747, 0.0
      %v749 = vsel %vm343, %v746, 0.0
      %750 = vrot.lane.b32.xlu0 %v286, 16
      %v751 = vpop.permute.xlu0 %750
      %752 = vrot.lane.b32.xlu0 %v287, 16
      %v753 = vpop.permute.xlu0 %752
      %v754 = vsel %vm350, %v751, %v753
      %v755 = vsel %vm350, %v753, %v751
      %v756 = vsel %vm357, %v755, 0.0
      %v757 = vsel %vm358, %v754, 0.0
      %v758 = vpack.c.bf16 %v756, %v748
      %v759 = vpack.c.bf16 %v757, %v749
      %760 = vst [vmem:[#allocation2 + $0x30] sm:$0xff] %v758
      %761 = vst [vmem:[#allocation2 + $0x38] sm:$0xff] %v759
      %762 = vrot.lane.b32.xlu0 %v286, 15
      %v763 = vpop.permute.xlu0 %762
      %764 = vrot.lane.b32.xlu0 %v287, 15
      %v765 = vpop.permute.xlu0 %764
      %v766 = vsel %vm369, %v763, %v765
      %v767 = vsel %vm369, %v765, %v763
      %v768 = vsel %vm376, %v767, 0.0
      %v769 = vsel %vm377, %v766, 0.0
      %770 = vrot.lane.b32.xlu0 %v286, 14
      %v771 = vpop.permute.xlu0 %770
      %772 = vrot.lane.b32.xlu0 %v287, 14
      %v773 = vpop.permute.xlu0 %772
      %vm774 = vcmp.lt.s32.totalorder %v173, 14
      %v775 = vsel %vm774, %v771, %v773
      %v776 = vsel %vm774, %v773, %v771
      %vm777 = vmand %vm299, %vm638
      %vm778 = vmand %vm300, %vm639
      %v779 = vsel %vm777, 1, 0
      %v780 = vsel %vm778, 1, 0
      %vm781 = vcmp.eq.s32.totalorder %v779, 1
      %vm782 = vcmp.eq.s32.totalorder %v780, 1
      %v783 = vsel %vm781, %v776, 0.0
      %v784 = vsel %vm782, %v775, 0.0
      %v785 = vpack.c.bf16 %v783, %v768
      %v786 = vpack.c.bf16 %v784, %v769
      %787 = vst [vmem:[#allocation2 + $0x40] sm:$0xff] %v785
      %788 = vst [vmem:[#allocation2 + $0x48] sm:$0xff] %v786
      %789 = vrot.lane.b32.xlu0 %v286, 2
      %v790 = vpop.permute.xlu0 %789
      %791 = vrot.lane.b32.xlu0 %v287, 2
      %v792 = vpop.permute.xlu0 %791
      %vm793 = vcmp.lt.s32.totalorder %v173, 2
      %v794 = vsel %vm793, %v790, %v792
      %v795 = vsel %vm793, %v792, %v790
      %vm796 = vmand %vm305, %vm632
      %vm797 = vmand %vm306, %vm633
      %v798 = vsel %vm796, 1, 0
      %v799 = vsel %vm797, 1, 0
      %vm800 = vcmp.eq.s32.totalorder %v798, 1
      %vm801 = vcmp.eq.s32.totalorder %v799, 1
      %v802 = vsel %vm800, %v795, 0.0
      %v803 = vsel %vm801, %v794, 0.0
      %804 = vrot.lane.b32.xlu0 %v286, 1
      %v805 = vpop.permute.xlu0 %804
      %806 = vrot.lane.b32.xlu0 %v287, 1
      %v807 = vpop.permute.xlu0 %806
      %v808 = vsel %vm384, %v805, %v807
      %v809 = vsel %vm384, %v807, %v805
      %v810 = vsel %vm391, %v809, 0.0
      %v811 = vsel %vm392, %v808, 0.0
      %v812 = vpack.c.bf16 %v810, %v802
      %v813 = vpack.c.bf16 %v811, %v803
      %814 = vst [vmem:[#allocation2 + $0x50] sm:$0xff] %v812
      %815 = vst [vmem:[#allocation2 + $0x58] sm:$0xff] %v813
      %v816 = vsel %vm403, %v286, 0.0
      %v817 = vsel %vm404, %v287, 0.0
      %818 = vrot.lane.b32.xlu0 %v286, 127
      %v819 = vpop.permute.xlu0 %818
      %820 = vrot.lane.b32.xlu0 %v287, 127
      %v821 = vpop.permute.xlu0 %820
      %v822 = vsel %vm411, %v819, %v821
      %v823 = vsel %vm411, %v821, %v819
      %v824 = vsel %vm418, %v822, 0.0
      %v825 = vsel %vm419, %v823, 0.0
      %v826 = vpack.c.bf16 %v824, %v816
      %v827 = vpack.c.bf16 %v825, %v817
      %828 = vst [vmem:[#allocation2 + $0x60] sm:$0xff] %v826
      %829 = vst [vmem:[#allocation2 + $0x68] sm:$0xff] %v827
      %830 = vrot.lane.b32.xlu0 %v286, 126
      %v831 = vpop.permute.xlu0 %830
      %832 = vrot.lane.b32.xlu0 %v287, 126
      %v833 = vpop.permute.xlu0 %832
      %vm834 = vcmp.lt.s32.totalorder %v173, 126
      %v835 = vsel %vm834, %v831, %v833
      %v836 = vsel %vm834, %v833, %v831
      %vm837 = vmand %vm305, %vm638
      %vm838 = vmand %vm306, %vm639
      %v839 = vsel %vm837, 1, 0
      %v840 = vsel %vm838, 1, 0
      %vm841 = vcmp.eq.s32.totalorder %v839, 1
      %vm842 = vcmp.eq.s32.totalorder %v840, 1
      %v843 = vsel %vm841, %v835, 0.0
      %v844 = vsel %vm842, %v836, 0.0
      %845 = vrot.lane.b32.xlu0 %v286, 114
      %v846 = vpop.permute.xlu0 %845
      %847 = vrot.lane.b32.xlu0 %v287, 114
      %v848 = vpop.permute.xlu0 %847
      %vm849 = vcmp.lt.s32.totalorder %v173, 114
      %v850 = vsel %vm849, %v846, %v848
      %v851 = vsel %vm849, %v848, %v846
      %vm852 = vmand %vm311, %vm632
      %vm853 = vmand %vm312, %vm633
      %v854 = vsel %vm852, 1, 0
      %v855 = vsel %vm853, 1, 0
      %vm856 = vcmp.eq.s32.totalorder %v854, 1
      %vm857 = vcmp.eq.s32.totalorder %v855, 1
      %v858 = vsel %vm856, %v850, 0.0
      %v859 = vsel %vm857, %v851, 0.0
      %v860 = vpack.c.bf16 %v858, %v843
      %v861 = vpack.c.bf16 %v859, %v844
      %862 = vst [vmem:[#allocation2 + $0x70] sm:$0xff] %v860
      %863 = vst [vmem:[#allocation2 + $0x78] sm:$0xff] %v861
      %864 = vrot.lane.b32.xlu0 %v286, 113
      %v865 = vpop.permute.xlu0 %864
      %866 = vrot.lane.b32.xlu0 %v287, 113
      %v867 = vpop.permute.xlu0 %866
      %v868 = vsel %vm430, %v865, %v867
      %v869 = vsel %vm430, %v867, %v865
      %v870 = vsel %vm437, %v868, 0.0
      %v871 = vsel %vm438, %v869, 0.0
      %872 = vrot.lane.b32.xlu0 %v286, 112
      %v873 = vpop.permute.xlu0 %872
      %874 = vrot.lane.b32.xlu0 %v287, 112
      %v875 = vpop.permute.xlu0 %874
      %v876 = vsel %vm445, %v873, %v875
      %v877 = vsel %vm445, %v875, %v873
      %v878 = vsel %vm452, %v876, 0.0
      %v879 = vsel %vm453, %v877, 0.0
      %v880 = vpack.c.bf16 %v878, %v870
      %v881 = vpack.c.bf16 %v879, %v871
      %882 = vst [vmem:[#allocation2 + $0x80] sm:$0xff] %v880
      %883 = vst [vmem:[#allocation2 + $0x88] sm:$0xff] %v881
      %884 = vrot.lane.b32.xlu0 %v286, 111
      %v885 = vpop.permute.xlu0 %884
      %886 = vrot.lane.b32.xlu0 %v287, 111
      %v887 = vpop.permute.xlu0 %886
      %v888 = vsel %vm464, %v885, %v887
      %v889 = vsel %vm464, %v887, %v885
      %v890 = vsel %vm471, %v888, 0.0
      %v891 = vsel %vm472, %v889, 0.0
      %892 = vrot.lane.b32.xlu0 %v286, 110
      %v893 = vpop.permute.xlu0 %892
      %894 = vrot.lane.b32.xlu0 %v287, 110
      %v895 = vpop.permute.xlu0 %894
      %vm896 = vcmp.lt.s32.totalorder %v173, 110
      %v897 = vsel %vm896, %v893, %v895
      %v898 = vsel %vm896, %v895, %v893
      %vm899 = vmand %vm311, %vm638
      %vm900 = vmand %vm312, %vm639
      %v901 = vsel %vm899, 1, 0
      %v902 = vsel %vm900, 1, 0
      %vm903 = vcmp.eq.s32.totalorder %v901, 1
      %vm904 = vcmp.eq.s32.totalorder %v902, 1
      %v905 = vsel %vm903, %v897, 0.0
      %v906 = vsel %vm904, %v898, 0.0
      %v907 = vpack.c.bf16 %v905, %v890
      %v908 = vpack.c.bf16 %v906, %v891
      %909 = vst [vmem:[#allocation2 + $0x90] sm:$0xff] %v907
      %910 = vst [vmem:[#allocation2 + $0x98] sm:$0xff] %v908
      %911 = vrot.lane.b32.xlu0 %v286, 98
      %v912 = vpop.permute.xlu0 %911
      %913 = vrot.lane.b32.xlu0 %v287, 98
      %v914 = vpop.permute.xlu0 %913
      %vm915 = vcmp.lt.s32.totalorder %v173, 98
      %v916 = vsel %vm915, %v912, %v914
      %v917 = vsel %vm915, %v914, %v912
      %vm918 = vmand %vm626, %vm632
      %vm919 = vmand %vm627, %vm633
      %v920 = vsel %vm918, 1, 0
      %v921 = vsel %vm919, 1, 0
      %vm922 = vcmp.eq.s32.totalorder %v920, 1
      %vm923 = vcmp.eq.s32.totalorder %v921, 1
      %v924 = vsel %vm922, %v916, 0.0
      %v925 = vsel %vm923, %v917, 0.0
      %926 = vrot.lane.b32.xlu0 %v286, 97
      %v927 = vpop.permute.xlu0 %926
      %928 = vrot.lane.b32.xlu0 %v287, 97
      %v929 = vpop.permute.xlu0 %928
      %vm930 = vcmp.lt.s32.totalorder %v173, 97
      %v931 = vsel %vm930, %v927, %v929
      %v932 = vsel %vm930, %v929, %v927
      %vm933 = vmand %vm626, %vm317
      %vm934 = vmand %vm627, %vm318
      %v935 = vsel %vm933, 1, 0
      %v936 = vsel %vm934, 1, 0
      %vm937 = vcmp.eq.s32.totalorder %v935, 1
      %vm938 = vcmp.eq.s32.totalorder %v936, 1
      %v939 = vsel %vm937, %v931, 0.0
      %v940 = vsel %vm938, %v932, 0.0
      %v941 = vpack.c.bf16 %v939, %v924
      %v942 = vpack.c.bf16 %v940, %v925
      %943 = vst [vmem:[#allocation2 + $0xa0] sm:$0xff] %v941
      %944 = vst [vmem:[#allocation2 + $0xa8] sm:$0xff] %v942
      %945 = vrot.lane.b32.xlu0 %v286, 96
      %v946 = vpop.permute.xlu0 %945
      %947 = vrot.lane.b32.xlu0 %v287, 96
      %v948 = vpop.permute.xlu0 %947
      %vm949 = vcmp.lt.s32.totalorder %v173, 96
      %v950 = vsel %vm949, %v946, %v948
      %v951 = vsel %vm949, %v948, %v946
      %vm952 = vmand %vm626, %vm323
      %vm953 = vmand %vm627, %vm324
      %v954 = vsel %vm952, 1, 0
      %v955 = vsel %vm953, 1, 0
      %vm956 = vcmp.eq.s32.totalorder %v954, 1
      %vm957 = vcmp.eq.s32.totalorder %v955, 1
      %v958 = vsel %vm956, %v950, 0.0
      %v959 = vsel %vm957, %v951, 0.0
      %960 = vrot.lane.b32.xlu0 %v286, 95
      %v961 = vpop.permute.xlu0 %960
      %962 = vrot.lane.b32.xlu0 %v287, 95
      %v963 = vpop.permute.xlu0 %962
      %vm964 = vcmp.lt.s32.totalorder %v173, 95
      %v965 = vsel %vm964, %v961, %v963
      %v966 = vsel %vm964, %v963, %v961
      %vm967 = vmand %vm626, %vm329
      %vm968 = vmand %vm627, %vm330
      %v969 = vsel %vm967, 1, 0
      %v970 = vsel %vm968, 1, 0
      %vm971 = vcmp.eq.s32.totalorder %v969, 1
      %vm972 = vcmp.eq.s32.totalorder %v970, 1
      %v973 = vsel %vm971, %v965, 0.0
      %v974 = vsel %vm972, %v966, 0.0
      %v975 = vpack.c.bf16 %v973, %v958
      %v976 = vpack.c.bf16 %v974, %v959
      %977 = vst [vmem:[#allocation2 + $0xb0] sm:$0xff] %v975
      %978 = vst [vmem:[#allocation2 + $0xb8] sm:$0xff] %v976
      %979 = vrot.lane.b32.xlu0 %v286, 94
      %v980 = vpop.permute.xlu0 %979
      %981 = vrot.lane.b32.xlu0 %v287, 94
      %v982 = vpop.permute.xlu0 %981
      %vm983 = vcmp.lt.s32.totalorder %v173, 94
      %v984 = vsel %vm983, %v980, %v982
      %v985 = vsel %vm983, %v982, %v980
      %vm986 = vmand %vm626, %vm638
      %vm987 = vmand %vm627, %vm639
      %v988 = vsel %vm986, 1, 0
      %v989 = vsel %vm987, 1, 0
      %vm990 = vcmp.eq.s32.totalorder %v988, 1
      %vm991 = vcmp.eq.s32.totalorder %v989, 1
      %v992 = vsel %vm990, %v984, 0.0
      %v993 = vsel %vm991, %v985, 0.0
      %v994 = vpack.c.bf16 0.0, %v992
      %v995 = vpack.c.bf16 0.0, %v993
      %996 = vst [vmem:[#allocation2 + $0xc0] sm:$0xff] %v994
      %997 = vst [vmem:[#allocation2 + $0xc8] sm:$0xff] %v995
      %v998 = vld [vmem:[#allocation2] sm:$0xff]
      %v999 = vld [vmem:[#allocation2 + $0x8] sm:$0xff]
      %v1000 = vld [vmem:[#allocation2 + $0x10] sm:$0xff]
      %v1001 = vld [vmem:[#allocation2 + $0x18] sm:$0xff]
      %v1002 = vld [vmem:[#allocation2 + $0x20] sm:$0xff]
      %v1003 = vld [vmem:[#allocation2 + $0x28] sm:$0xff]
      %v1004 = vld [vmem:[#allocation2 + $0x30] sm:$0xff]
      %v1005 = vld [vmem:[#allocation2 + $0x38] sm:$0xff]
      %v1006 = vld [vmem:[#allocation2 + $0x40] sm:$0xff]
      %v1007 = vld [vmem:[#allocation2 + $0x48] sm:$0xff]
      %v1008 = vld [vmem:[#allocation2 + $0x50] sm:$0xff]
      %v1009 = vld [vmem:[#allocation2 + $0x58] sm:$0xff]
      %v1010 = vld [vmem:[#allocation2 + $0x60] sm:$0xff]
      %v1011 = vld [vmem:[#allocation2 + $0x68] sm:$0xff]
      %v1012 = vld [vmem:[#allocation2 + $0x70] sm:$0xff]
      %v1013 = vld [vmem:[#allocation2 + $0x78] sm:$0xff]
      %v1014 = vld [vmem:[#allocation2 + $0x80] sm:$0xff]
      %v1015 = vld [vmem:[#allocation2 + $0x88] sm:$0xff]
      %v1016 = vld [vmem:[#allocation2 + $0x90] sm:$0xff]
      %v1017 = vld [vmem:[#allocation2 + $0x98] sm:$0xff]
      %v1018 = vld [vmem:[#allocation2 + $0xa0] sm:$0xff]
      %v1019 = vld [vmem:[#allocation2 + $0xa8] sm:$0xff]
      %v1020 = vld [vmem:[#allocation2 + $0xb0] sm:$0xff]
      %v1021 = vld [vmem:[#allocation2 + $0xb8] sm:$0xff]
      %v1022 = vld [vmem:[#allocation2 + $0xc0] sm:$0xf]
      %v1023 = vld [vmem:[#allocation2 + $0xc8] sm:$0xf]
      %1025 = vset.pattern.permute.xlu0 0
      %1026 = vperm.xlu0 %1025, %v615
      %v1027 = vpop.permute.xlu0 %1026
      %v1030 = vsel %vm494, %v614, 0
      %v1033 = vsel %vm222, %v1022, 0
      %v1036 = vsel %vm222, %v1023, 0
      %1038 = vmatprep.subr.bf16.mxu0 %v999
      %1039 = vmatpush1.bf16.msra.mxu0 %v998
      %1040 = vmatprep.subr.bf16.mxu0 %v1001
      %1041 = vmatpush1.bf16.msra.mxu0 %v1000
      %1042 = vmatprep.subr.bf16.mxu0 %v1003
      %1043 = vmatpush1.bf16.msra.mxu0 %v1002
      %1044 = vmatprep.subr.bf16.mxu0 %v1005
      %1045 = vmatpush1.bf16.msra.mxu0 %v1004
      %1046 = vmatprep.subr.bf16.mxu0 %v1007
      %1047 = vmatpush1.bf16.msra.mxu0 %v1006
      %1048 = vmatprep.subr.bf16.mxu0 %v1009
      %1049 = vmatpush1.bf16.msra.mxu0 %v1008
      %1050 = vmatprep.subr.bf16.mxu0 %v1011
      %1051 = vmatpush1.bf16.msra.mxu0 %v1010
      %1052 = vmatprep.subr.bf16.mxu0 %v1013
      %1053 = vmatpush1.bf16.msra.mxu0 %v1012
      %1054 = vmatprep.subr.bf16.mxu0 %v1015
      %1055 = vmatpush1.bf16.msra.mxu0 %v1014
      %1056 = vmatprep.subr.bf16.mxu0 %v1017
      %1057 = vmatpush1.bf16.msra.mxu0 %v1016
      %1058 = vmatprep.subr.bf16.mxu0 %v1019
      %1059 = vmatpush1.bf16.msra.mxu0 %v1018
      %1060 = vmatprep.subr.bf16.mxu0 %v1021
      %1061 = vmatpush1.bf16.msra.mxu0 %v1020
      %1062 = vmatprep.subr.bf16.mxu0 %v1036
      %1063 = vmatpush1.bf16.msra.mxu0 %v1033
      %1064 = vmatprep.subr.bf16.mxu0 0
      %1065 = vmatpush1.bf16.msra.mxu0 0
      %1066 = vmatprep.subr.bf16.mxu0 0
      %1067 = vmatpush1.bf16.msra.mxu0 0
      %1068 = vmatprep.subr.bf16.mxu0 0
      %1069 = vmatpush1.bf16.msra.mxu0 0
      %1070 = vmatprep.mubr.bf16.mxu0 %v1030
      %1071 = vmatmul.mubr.bf16.gmra.mrb[0].mxu0 %v613
      %v1072 = vpop.f32.mrb[0].mxu0
      %v1073 = vadd.f32 %v1027, %v1072
      %v1074 = vpop.f32.mrb[0].mxu0
      %v1075 = vadd.f32 %v1027, %v1074
      %v1076 = vpop.f32.mrb[0].mxu0
      %v1077 = vpop.f32.mrb[0].mxu0
      %1078 = vdwg.mxu0
      %v1079 = vmax.f32 %v1073, 0.0
      %v1080 = vmax.f32 %v1075, 0.0
      %v1081 = vld [vmem:[%s1 + $0xe0] sm:$0xff]
      %v1082 = vpack.c.bf16 %v1081, %v1081
      %v1083 = vld [vmem:[%s2 + $0x38] sm:$0xff]
      %v1084 = vpack.c.bf16 %v1079, %v1079
      %v1085 = vpack.c.bf16 %v1080, %v1080
      %1087 = vset.pattern.permute.xlu0 0
      %1088 = vperm.xlu0 %1087, %v1083
      %v1089 = vpop.permute.xlu0 %1088
      %v1092 = vsel %vm215, %v1082, 0
      %v1095 = vsel %vm222, %v1084, 0
      %v1098 = vsel %vm222, %v1085, 0
      %1100 = vmatprep.subr.bf16.mxu0 %v1098
      %1101 = vmatpush1.bf16.msra.mxu0 %v1095
      %1102 = vmatprep.subr.bf16.mxu0 0
      %1103 = vmatpush1.bf16.msra.mxu0 0
      %1104 = vmatprep.subr.bf16.mxu0 0
      %1105 = vmatpush1.bf16.msra.mxu0 0
      %1106 = vmatprep.subr.bf16.mxu0 0
      %1107 = vmatpush1.bf16.msra.mxu0 0
      %1108 = vmatprep.subr.bf16.mxu0 0
      %1109 = vmatpush1.bf16.msra.mxu0 0
      %1110 = vmatprep.subr.bf16.mxu0 0
      %1111 = vmatpush1.bf16.msra.mxu0 0
      %1112 = vmatprep.subr.bf16.mxu0 0
      %1113 = vmatpush1.bf16.msra.mxu0 0
      %1114 = vmatprep.subr.bf16.mxu0 0
      %1115 = vmatpush1.bf16.msra.mxu0 0
      %1116 = vmatprep.subr.bf16.mxu0 0
      %1117 = vmatpush1.bf16.msra.mxu0 0
      %1118 = vmatprep.subr.bf16.mxu0 0
      %1119 = vmatpush1.bf16.msra.mxu0 0
      %1120 = vmatprep.subr.bf16.mxu0 0
      %1121 = vmatpush1.bf16.msra.mxu0 0
      %1122 = vmatprep.subr.bf16.mxu0 0
      %1123 = vmatpush1.bf16.msra.mxu0 0
      %1124 = vmatprep.subr.bf16.mxu0 0
      %1125 = vmatpush1.bf16.msra.mxu0 0
      %1126 = vmatprep.subr.bf16.mxu0 0
      %1127 = vmatpush1.bf16.msra.mxu0 0
      %1128 = vmatprep.subr.bf16.mxu0 0
      %1129 = vmatpush1.bf16.msra.mxu0 0
      %1130 = vmatprep.subr.bf16.mxu0 0
      %1131 = vmatpush1.bf16.msra.mxu0 0
      %1132 = vmatprep.mubr.bf16.mxu0 0
      %1133 = vmatmul.mubr.bf16.gmra.mrb[0].mxu0 %v1092
      %v1134 = vpop.f32.mrb[0].mxu0
      %v1135 = vadd.f32 %v1089, %v1134
      %v1136 = vpop.f32.mrb[0].mxu0
      %v1137 = vadd.f32 %v1089, %v1136
      %v1138 = vpop.f32.mrb[0].mxu0
      %v1139 = vpop.f32.mrb[0].mxu0
      %1140 = vdwg.mxu0
      %v1141 = vmax.f32 %v1135, 0.0
      %v1142 = vmax.f32 %v1137, 0.0
      %1143 = vst [vmem:[#allocation3 + $0x20] sm:$0xff] %v1141
      %1144 = vst [vmem:[#allocation3 + $0x28] sm:$0xff] %v1142
      %v1145 = vld [vmem:[%s1 + $0x100] sm:$0xff]
      %v1146 = vld [vmem:[%s1 + $0x108] sm:$0xff]
      %v1147 = vld [vmem:[%s1 + $0x110] sm:$0xff]
      %v1148 = vld [vmem:[%s1 + $0x118] sm:$0xff]
      %v1149 = vpack.c.bf16 %v1145, %v1145
      %v1150 = vpack.c.bf16 %v1146, %v1146
      %v1151 = vpack.c.bf16 %v1147, %v1147
      %v1152 = vpack.c.bf16 %v1148, %v1148
      %v1153 = vld [vmem:[%s2 + $0x40] sm:$0xff]
      %vm1154 = vcmp.ge.s32.totalorder %v177, 3
      %vm1155 = vcmp.ge.s32.totalorder %v178, 3
      %vm1156 = vcmp.lt.s32.totalorder %v177, 19
      %vm1157 = vcmp.lt.s32.totalorder %v178, 19
      %vm1158 = vmand %vm1154, %vm1156
      %vm1159 = vmand %vm1155, %vm1157
      %vm1160 = vcmp.ge.s32.totalorder %v177, 4294967293
      %vm1161 = vcmp.ge.s32.totalorder %v178, 4294967293
      %vm1162 = vcmp.lt.s32.totalorder %v177, 13
      %vm1163 = vcmp.lt.s32.totalorder %v178, 13
      %vm1164 = vmand %vm1160, %vm1162
      %vm1165 = vmand %vm1161, %vm1163
      %vm1166 = vcmp.ge.s32.totalorder %v179, 3
      %vm1167 = vcmp.ge.s32.totalorder %v180, 3
      %vm1168 = vcmp.lt.s32.totalorder %v179, 19
      %vm1169 = vcmp.lt.s32.totalorder %v180, 19
      %vm1170 = vmand %vm1166, %vm1168
      %vm1171 = vmand %vm1167, %vm1169
      %vm1172 = vcmp.ge.s32.totalorder %v179, 4294967293
      %vm1173 = vcmp.ge.s32.totalorder %v180, 4294967293
      %vm1174 = vcmp.lt.s32.totalorder %v179, 13
      %vm1175 = vcmp.lt.s32.totalorder %v180, 13
      %vm1176 = vmand %vm1172, %vm1174
      %vm1177 = vmand %vm1173, %vm1175
      %1178 = vrot.lane.b32.xlu0 %v288, 51
      %v1179 = vpop.permute.xlu0 %1178
      %1180 = vrot.lane.b32.xlu0 %v289, 51
      %v1181 = vpop.permute.xlu0 %1180
      %vm1182 = vcmp.lt.s32.totalorder %v173, 51
      %v1183 = vsel %vm1182, %v1179, %v1181
      %v1184 = vsel %vm1182, %v1181, %v1179
      %vm1185 = vmand %vm1158, %vm1170
      %vm1186 = vmand %vm1159, %vm1171
      %v1187 = vsel %vm1185, 1, 0
      %v1188 = vsel %vm1186, 1, 0
      %vm1189 = vcmp.eq.s32.totalorder %v1187, 1
      %vm1190 = vcmp.eq.s32.totalorder %v1188, 1
      %v1191 = vsel %vm1189, %v1184, 0.0
      %v1192 = vsel %vm1190, %v1183, 0.0
      %1193 = vrot.lane.b32.xlu0 %v288, 50
      %v1194 = vpop.permute.xlu0 %1193
      %1195 = vrot.lane.b32.xlu0 %v289, 50
      %v1196 = vpop.permute.xlu0 %1195
      %vm1197 = vcmp.lt.s32.totalorder %v173, 50
      %v1198 = vsel %vm1197, %v1194, %v1196
      %v1199 = vsel %vm1197, %v1196, %v1194
      %vm1200 = vmand %vm1158, %vm632
      %vm1201 = vmand %vm1159, %vm633
      %v1202 = vsel %vm1200, 1, 0
      %v1203 = vsel %vm1201, 1, 0
      %vm1204 = vcmp.eq.s32.totalorder %v1202, 1
      %vm1205 = vcmp.eq.s32.totalorder %v1203, 1
      %v1206 = vsel %vm1204, %v1199, 0.0
      %v1207 = vsel %vm1205, %v1198, 0.0
      %v1208 = vpack.c.bf16 %v1206, %v1191
      %v1209 = vpack.c.bf16 %v1207, %v1192
      %1210 = vst [vmem:[#allocation2] sm:$0xff] %v1208
      %1211 = vst [vmem:[#allocation2 + $0x8] sm:$0xff] %v1209
      %1212 = vrot.lane.b32.xlu0 %v288, 49
      %v1213 = vpop.permute.xlu0 %1212
      %1214 = vrot.lane.b32.xlu0 %v289, 49
      %v1215 = vpop.permute.xlu0 %1214
      %vm1216 = vcmp.lt.s32.totalorder %v173, 49
      %v1217 = vsel %vm1216, %v1213, %v1215
      %v1218 = vsel %vm1216, %v1215, %v1213
      %vm1219 = vmand %vm1158, %vm317
      %vm1220 = vmand %vm1159, %vm318
      %v1221 = vsel %vm1219, 1, 0
      %v1222 = vsel %vm1220, 1, 0
      %vm1223 = vcmp.eq.s32.totalorder %v1221, 1
      %vm1224 = vcmp.eq.s32.totalorder %v1222, 1
      %v1225 = vsel %vm1223, %v1218, 0.0
      %v1226 = vsel %vm1224, %v1217, 0.0
      %1227 = vrot.lane.b32.xlu0 %v288, 48
      %v1228 = vpop.permute.xlu0 %1227
      %1229 = vrot.lane.b32.xlu0 %v289, 48
      %v1230 = vpop.permute.xlu0 %1229
      %vm1231 = vcmp.lt.s32.totalorder %v173, 48
      %v1232 = vsel %vm1231, %v1228, %v1230
      %v1233 = vsel %vm1231, %v1230, %v1228
      %vm1234 = vmand %vm1158, %vm323
      %vm1235 = vmand %vm1159, %vm324
      %v1236 = vsel %vm1234, 1, 0
      %v1237 = vsel %vm1235, 1, 0
      %vm1238 = vcmp.eq.s32.totalorder %v1236, 1
      %vm1239 = vcmp.eq.s32.totalorder %v1237, 1
      %v1240 = vsel %vm1238, %v1233, 0.0
      %v1241 = vsel %vm1239, %v1232, 0.0
      %v1242 = vpack.c.bf16 %v1240, %v1225
      %v1243 = vpack.c.bf16 %v1241, %v1226
      %1244 = vst [vmem:[#allocation2 + $0x10] sm:$0xff] %v1242
      %1245 = vst [vmem:[#allocation2 + $0x18] sm:$0xff] %v1243
      %1246 = vrot.lane.b32.xlu0 %v288, 47
      %v1247 = vpop.permute.xlu0 %1246
      %1248 = vrot.lane.b32.xlu0 %v289, 47
      %v1249 = vpop.permute.xlu0 %1248
      %vm1250 = vcmp.lt.s32.totalorder %v173, 47
      %v1251 = vsel %vm1250, %v1247, %v1249
      %v1252 = vsel %vm1250, %v1249, %v1247
      %vm1253 = vmand %vm1158, %vm329
      %vm1254 = vmand %vm1159, %vm330
      %v1255 = vsel %vm1253, 1, 0
      %v1256 = vsel %vm1254, 1, 0
      %vm1257 = vcmp.eq.s32.totalorder %v1255, 1
      %vm1258 = vcmp.eq.s32.totalorder %v1256, 1
      %v1259 = vsel %vm1257, %v1252, 0.0
      %v1260 = vsel %vm1258, %v1251, 0.0
      %1261 = vrot.lane.b32.xlu0 %v288, 46
      %v1262 = vpop.permute.xlu0 %1261
      %1263 = vrot.lane.b32.xlu0 %v289, 46
      %v1264 = vpop.permute.xlu0 %1263
      %vm1265 = vcmp.lt.s32.totalorder %v173, 46
      %v1266 = vsel %vm1265, %v1262, %v1264
      %v1267 = vsel %vm1265, %v1264, %v1262
      %vm1268 = vmand %vm1158, %vm638
      %vm1269 = vmand %vm1159, %vm639
      %v1270 = vsel %vm1268, 1, 0
      %v1271 = vsel %vm1269, 1, 0
      %vm1272 = vcmp.eq.s32.totalorder %v1270, 1
      %vm1273 = vcmp.eq.s32.totalorder %v1271, 1
      %v1274 = vsel %vm1272, %v1267, 0.0
      %v1275 = vsel %vm1273, %v1266, 0.0
      %v1276 = vpack.c.bf16 %v1274, %v1259
      %v1277 = vpack.c.bf16 %v1275, %v1260
      %1278 = vst [vmem:[#allocation2 + $0x20] sm:$0xff] %v1276
      %1279 = vst [vmem:[#allocation2 + $0x28] sm:$0xff] %v1277
      %1280 = vrot.lane.b32.xlu0 %v288, 45
      %v1281 = vpop.permute.xlu0 %1280
      %1282 = vrot.lane.b32.xlu0 %v289, 45
      %v1283 = vpop.permute.xlu0 %1282
      %vm1284 = vcmp.lt.s32.totalorder %v173, 45
      %v1285 = vsel %vm1284, %v1281, %v1283
      %v1286 = vsel %vm1284, %v1283, %v1281
      %vm1287 = vmand %vm1158, %vm1176
      %vm1288 = vmand %vm1159, %vm1177
      %v1289 = vsel %vm1287, 1, 0
      %v1290 = vsel %vm1288, 1, 0
      %vm1291 = vcmp.eq.s32.totalorder %v1289, 1
      %vm1292 = vcmp.eq.s32.totalorder %v1290, 1
      %v1293 = vsel %vm1291, %v1286, 0.0
      %v1294 = vsel %vm1292, %v1285, 0.0
      %1295 = vrot.lane.b32.xlu0 %v288, 35
      %v1296 = vpop.permute.xlu0 %1295
      %1297 = vrot.lane.b32.xlu0 %v289, 35
      %v1298 = vpop.permute.xlu0 %1297
      %vm1299 = vcmp.lt.s32.totalorder %v173, 35
      %v1300 = vsel %vm1299, %v1296, %v1298
      %v1301 = vsel %vm1299, %v1298, %v1296
      %vm1302 = vmand %vm620, %vm1170
      %vm1303 = vmand %vm621, %vm1171
      %v1304 = vsel %vm1302, 1, 0
      %v1305 = vsel %vm1303, 1, 0
      %vm1306 = vcmp.eq.s32.totalorder %v1304, 1
      %vm1307 = vcmp.eq.s32.totalorder %v1305, 1
      %v1308 = vsel %vm1306, %v1301, 0.0
      %v1309 = vsel %vm1307, %v1300, 0.0
      %v1310 = vpack.c.bf16 %v1308, %v1293
      %v1311 = vpack.c.bf16 %v1309, %v1294
      %1312 = vst [vmem:[#allocation2 + $0x30] sm:$0xff] %v1310
      %1313 = vst [vmem:[#allocation2 + $0x38] sm:$0xff] %v1311
      %1314 = vrot.lane.b32.xlu0 %v288, 34
      %v1315 = vpop.permute.xlu0 %1314
      %1316 = vrot.lane.b32.xlu0 %v289, 34
      %v1317 = vpop.permute.xlu0 %1316
      %v1318 = vsel %vm644, %v1315, %v1317
      %v1319 = vsel %vm644, %v1317, %v1315
      %v1320 = vsel %vm651, %v1319, 0.0
      %v1321 = vsel %vm652, %v1318, 0.0
      %1322 = vrot.lane.b32.xlu0 %v288, 33
      %v1323 = vpop.permute.xlu0 %1322
      %1324 = vrot.lane.b32.xlu0 %v289, 33
      %v1325 = vpop.permute.xlu0 %1324
      %v1326 = vsel %vm659, %v1323, %v1325
      %v1327 = vsel %vm659, %v1325, %v1323
      %v1328 = vsel %vm666, %v1327, 0.0
      %v1329 = vsel %vm667, %v1326, 0.0
      %v1330 = vpack.c.bf16 %v1328, %v1320
      %v1331 = vpack.c.bf16 %v1329, %v1321
      %1332 = vst [vmem:[#allocation2 + $0x40] sm:$0xff] %v1330
      %1333 = vst [vmem:[#allocation2 + $0x48] sm:$0xff] %v1331
      %1334 = vrot.lane.b32.xlu0 %v288, 32
      %v1335 = vpop.permute.xlu0 %1334
      %1336 = vrot.lane.b32.xlu0 %v289, 32
      %v1337 = vpop.permute.xlu0 %1336
      %v1338 = vsel %vm678, %v1335, %v1337
      %v1339 = vsel %vm678, %v1337, %v1335
      %v1340 = vsel %vm685, %v1339, 0.0
      %v1341 = vsel %vm686, %v1338, 0.0
      %1342 = vrot.lane.b32.xlu0 %v288, 31
      %v1343 = vpop.permute.xlu0 %1342
      %1344 = vrot.lane.b32.xlu0 %v289, 31
      %v1345 = vpop.permute.xlu0 %1344
      %v1346 = vsel %vm693, %v1343, %v1345
      %v1347 = vsel %vm693, %v1345, %v1343
      %v1348 = vsel %vm700, %v1347, 0.0
      %v1349 = vsel %vm701, %v1346, 0.0
      %v1350 = vpack.c.bf16 %v1348, %v1340
      %v1351 = vpack.c.bf16 %v1349, %v1341
      %1352 = vst [vmem:[#allocation2 + $0x50] sm:$0xff] %v1350
      %1353 = vst [vmem:[#allocation2 + $0x58] sm:$0xff] %v1351
      %1354 = vrot.lane.b32.xlu0 %v288, 30
      %v1355 = vpop.permute.xlu0 %1354
      %1356 = vrot.lane.b32.xlu0 %v289, 30
      %v1357 = vpop.permute.xlu0 %1356
      %v1358 = vsel %vm712, %v1355, %v1357
      %v1359 = vsel %vm712, %v1357, %v1355
      %v1360 = vsel %vm719, %v1359, 0.0
      %v1361 = vsel %vm720, %v1358, 0.0
      %1362 = vrot.lane.b32.xlu0 %v288, 29
      %v1363 = vpop.permute.xlu0 %1362
      %1364 = vrot.lane.b32.xlu0 %v289, 29
      %v1365 = vpop.permute.xlu0 %1364
      %vm1366 = vcmp.lt.s32.totalorder %v173, 29
      %v1367 = vsel %vm1366, %v1363, %v1365
      %v1368 = vsel %vm1366, %v1365, %v1363
      %vm1369 = vmand %vm620, %vm1176
      %vm1370 = vmand %vm621, %vm1177
      %v1371 = vsel %vm1369, 1, 0
      %v1372 = vsel %vm1370, 1, 0
      %vm1373 = vcmp.eq.s32.totalorder %v1371, 1
      %vm1374 = vcmp.eq.s32.totalorder %v1372, 1
      %v1375 = vsel %vm1373, %v1368, 0.0
      %v1376 = vsel %vm1374, %v1367, 0.0
      %v1377 = vpack.c.bf16 %v1375, %v1360
      %v1378 = vpack.c.bf16 %v1376, %v1361
      %1379 = vst [vmem:[#allocation2 + $0x60] sm:$0xff] %v1377
      %1380 = vst [vmem:[#allocation2 + $0x68] sm:$0xff] %v1378
      %1381 = vrot.lane.b32.xlu0 %v288, 19
      %v1382 = vpop.permute.xlu0 %1381
      %1383 = vrot.lane.b32.xlu0 %v289, 19
      %v1384 = vpop.permute.xlu0 %1383
      %vm1385 = vcmp.lt.s32.totalorder %v173, 19
      %v1386 = vsel %vm1385, %v1382, %v1384
      %v1387 = vsel %vm1385, %v1384, %v1382
      %vm1388 = vmand %vm299, %vm1170
      %vm1389 = vmand %vm300, %vm1171
      %v1390 = vsel %vm1388, 1, 0
      %v1391 = vsel %vm1389, 1, 0
      %vm1392 = vcmp.eq.s32.totalorder %v1390, 1
      %vm1393 = vcmp.eq.s32.totalorder %v1391, 1
      %v1394 = vsel %vm1392, %v1387, 0.0
      %v1395 = vsel %vm1393, %v1386, 0.0
      %1396 = vrot.lane.b32.xlu0 %v288, 18
      %v1397 = vpop.permute.xlu0 %1396
      %1398 = vrot.lane.b32.xlu0 %v289, 18
      %v1399 = vpop.permute.xlu0 %1398
      %v1400 = vsel %vm727, %v1397, %v1399
      %v1401 = vsel %vm727, %v1399, %v1397
      %v1402 = vsel %vm734, %v1401, 0.0
      %v1403 = vsel %vm735, %v1400, 0.0
      %v1404 = vpack.c.bf16 %v1402, %v1394
      %v1405 = vpack.c.bf16 %v1403, %v1395
      %1406 = vst [vmem:[#allocation2 + $0x70] sm:$0xff] %v1404
      %1407 = vst [vmem:[#allocation2 + $0x78] sm:$0xff] %v1405
      %1408 = vrot.lane.b32.xlu0 %v288, 17
      %v1409 = vpop.permute.xlu0 %1408
      %1410 = vrot.lane.b32.xlu0 %v289, 17
      %v1411 = vpop.permute.xlu0 %1410
      %v1412 = vsel %vm335, %v1409, %v1411
      %v1413 = vsel %vm335, %v1411, %v1409
      %v1414 = vsel %vm342, %v1413, 0.0
      %v1415 = vsel %vm343, %v1412, 0.0
      %1416 = vrot.lane.b32.xlu0 %v288, 16
      %v1417 = vpop.permute.xlu0 %1416
      %1418 = vrot.lane.b32.xlu0 %v289, 16
      %v1419 = vpop.permute.xlu0 %1418
      %v1420 = vsel %vm350, %v1417, %v1419
      %v1421 = vsel %vm350, %v1419, %v1417
      %v1422 = vsel %vm357, %v1421, 0.0
      %v1423 = vsel %vm358, %v1420, 0.0
      %v1424 = vpack.c.bf16 %v1422, %v1414
      %v1425 = vpack.c.bf16 %v1423, %v1415
      %1426 = vst [vmem:[#allocation2 + $0x80] sm:$0xff] %v1424
      %1427 = vst [vmem:[#allocation2 + $0x88] sm:$0xff] %v1425
      %1428 = vrot.lane.b32.xlu0 %v288, 15
      %v1429 = vpop.permute.xlu0 %1428
      %1430 = vrot.lane.b32.xlu0 %v289, 15
      %v1431 = vpop.permute.xlu0 %1430
      %v1432 = vsel %vm369, %v1429, %v1431
      %v1433 = vsel %vm369, %v1431, %v1429
      %v1434 = vsel %vm376, %v1433, 0.0
      %v1435 = vsel %vm377, %v1432, 0.0
      %1436 = vrot.lane.b32.xlu0 %v288, 14
      %v1437 = vpop.permute.xlu0 %1436
      %1438 = vrot.lane.b32.xlu0 %v289, 14
      %v1439 = vpop.permute.xlu0 %1438
      %v1440 = vsel %vm774, %v1437, %v1439
      %v1441 = vsel %vm774, %v1439, %v1437
      %v1442 = vsel %vm781, %v1441, 0.0
      %v1443 = vsel %vm782, %v1440, 0.0
      %v1444 = vpack.c.bf16 %v1442, %v1434
      %v1445 = vpack.c.bf16 %v1443, %v1435
      %1446 = vst [vmem:[#allocation2 + $0x90] sm:$0xff] %v1444
      %1447 = vst [vmem:[#allocation2 + $0x98] sm:$0xff] %v1445
      %1448 = vrot.lane.b32.xlu0 %v288, 13
      %v1449 = vpop.permute.xlu0 %1448
      %1450 = vrot.lane.b32.xlu0 %v289, 13
      %v1451 = vpop.permute.xlu0 %1450
      %vm1452 = vcmp.lt.s32.totalorder %v173, 13
      %v1453 = vsel %vm1452, %v1449, %v1451
      %v1454 = vsel %vm1452, %v1451, %v1449
      %vm1455 = vmand %vm299, %vm1176
      %vm1456 = vmand %vm300, %vm1177
      %v1457 = vsel %vm1455, 1, 0
      %v1458 = vsel %vm1456, 1, 0
      %vm1459 = vcmp.eq.s32.totalorder %v1457, 1
      %vm1460 = vcmp.eq.s32.totalorder %v1458, 1
      %v1461 = vsel %vm1459, %v1454, 0.0
      %v1462 = vsel %vm1460, %v1453, 0.0
      %1463 = vrot.lane.b32.xlu0 %v288, 3
      %v1464 = vpop.permute.xlu0 %1463
      %1465 = vrot.lane.b32.xlu0 %v289, 3
      %v1466 = vpop.permute.xlu0 %1465
      %vm1467 = vcmp.lt.s32.totalorder %v173, 3
      %v1468 = vsel %vm1467, %v1464, %v1466
      %v1469 = vsel %vm1467, %v1466, %v1464
      %vm1470 = vmand %vm305, %vm1170
      %vm1471 = vmand %vm306, %vm1171
      %v1472 = vsel %vm1470, 1, 0
      %v1473 = vsel %vm1471, 1, 0
      %vm1474 = vcmp.eq.s32.totalorder %v1472, 1
      %vm1475 = vcmp.eq.s32.totalorder %v1473, 1
      %v1476 = vsel %vm1474, %v1469, 0.0
      %v1477 = vsel %vm1475, %v1468, 0.0
      %v1478 = vpack.c.bf16 %v1476, %v1461
      %v1479 = vpack.c.bf16 %v1477, %v1462
      %1480 = vst [vmem:[#allocation2 + $0xa0] sm:$0xff] %v1478
      %1481 = vst [vmem:[#allocation2 + $0xa8] sm:$0xff] %v1479
      %1482 = vrot.lane.b32.xlu0 %v288, 2
      %v1483 = vpop.permute.xlu0 %1482
      %1484 = vrot.lane.b32.xlu0 %v289, 2
      %v1485 = vpop.permute.xlu0 %1484
      %v1486 = vsel %vm793, %v1483, %v1485
      %v1487 = vsel %vm793, %v1485, %v1483
      %v1488 = vsel %vm800, %v1487, 0.0
      %v1489 = vsel %vm801, %v1486, 0.0
      %1490 = vrot.lane.b32.xlu0 %v288, 1
      %v1491 = vpop.permute.xlu0 %1490
      %1492 = vrot.lane.b32.xlu0 %v289, 1
      %v1493 = vpop.permute.xlu0 %1492
      %v1494 = vsel %vm384, %v1491, %v1493
      %v1495 = vsel %vm384, %v1493, %v1491
      %v1496 = vsel %vm391, %v1495, 0.0
      %v1497 = vsel %vm392, %v1494, 0.0
      %v1498 = vpack.c.bf16 %v1496, %v1488
      %v1499 = vpack.c.bf16 %v1497, %v1489
      %1500 = vst [vmem:[#allocation2 + $0xb0] sm:$0xff] %v1498
      %1501 = vst [vmem:[#allocation2 + $0xb8] sm:$0xff] %v1499
      %v1502 = vsel %vm403, %v288, 0.0
      %v1503 = vsel %vm404, %v289, 0.0
      %1504 = vrot.lane.b32.xlu0 %v288, 127
      %v1505 = vpop.permute.xlu0 %1504
      %1506 = vrot.lane.b32.xlu0 %v289, 127
      %v1507 = vpop.permute.xlu0 %1506
      %v1508 = vsel %vm411, %v1505, %v1507
      %v1509 = vsel %vm411, %v1507, %v1505
      %v1510 = vsel %vm418, %v1508, 0.0
      %v1511 = vsel %vm419, %v1509, 0.0
      %v1512 = vpack.c.bf16 %v1510, %v1502
      %v1513 = vpack.c.bf16 %v1511, %v1503
      %1514 = vst [vmem:[#allocation2 + $0xc0] sm:$0xff] %v1512
      %1515 = vst [vmem:[#allocation2 + $0xc8] sm:$0xff] %v1513
      %1516 = vrot.lane.b32.xlu0 %v288, 126
      %v1517 = vpop.permute.xlu0 %1516
      %1518 = vrot.lane.b32.xlu0 %v289, 126
      %v1519 = vpop.permute.xlu0 %1518
      %v1520 = vsel %vm834, %v1517, %v1519
      %v1521 = vsel %vm834, %v1519, %v1517
      %v1522 = vsel %vm841, %v1520, 0.0
      %v1523 = vsel %vm842, %v1521, 0.0
      %1524 = vrot.lane.b32.xlu0 %v288, 125
      %v1525 = vpop.permute.xlu0 %1524
      %1526 = vrot.lane.b32.xlu0 %v289, 125
      %v1527 = vpop.permute.xlu0 %1526
      %vm1528 = vcmp.lt.s32.totalorder %v173, 125
      %v1529 = vsel %vm1528, %v1525, %v1527
      %v1530 = vsel %vm1528, %v1527, %v1525
      %vm1531 = vmand %vm305, %vm1176
      %vm1532 = vmand %vm306, %vm1177
      %v1533 = vsel %vm1531, 1, 0
      %v1534 = vsel %vm1532, 1, 0
      %vm1535 = vcmp.eq.s32.totalorder %v1533, 1
      %vm1536 = vcmp.eq.s32.totalorder %v1534, 1
      %v1537 = vsel %vm1535, %v1529, 0.0
      %v1538 = vsel %vm1536, %v1530, 0.0
      %v1539 = vpack.c.bf16 %v1537, %v1522
      %v1540 = vpack.c.bf16 %v1538, %v1523
      %1541 = vst [vmem:[#allocation2 + $0xd0] sm:$0xff] %v1539
      %1542 = vst [vmem:[#allocation2 + $0xd8] sm:$0xff] %v1540
      %1543 = vrot.lane.b32.xlu0 %v288, 115
      %v1544 = vpop.permute.xlu0 %1543
      %1545 = vrot.lane.b32.xlu0 %v289, 115
      %v1546 = vpop.permute.xlu0 %1545
      %vm1547 = vcmp.lt.s32.totalorder %v173, 115
      %v1548 = vsel %vm1547, %v1544, %v1546
      %v1549 = vsel %vm1547, %v1546, %v1544
      %vm1550 = vmand %vm311, %vm1170
      %vm1551 = vmand %vm312, %vm1171
      %v1552 = vsel %vm1550, 1, 0
      %v1553 = vsel %vm1551, 1, 0
      %vm1554 = vcmp.eq.s32.totalorder %v1552, 1
      %vm1555 = vcmp.eq.s32.totalorder %v1553, 1
      %v1556 = vsel %vm1554, %v1548, 0.0
      %v1557 = vsel %vm1555, %v1549, 0.0
      %1558 = vrot.lane.b32.xlu0 %v288, 114
      %v1559 = vpop.permute.xlu0 %1558
      %1560 = vrot.lane.b32.xlu0 %v289, 114
      %v1561 = vpop.permute.xlu0 %1560
      %v1562 = vsel %vm849, %v1559, %v1561
      %v1563 = vsel %vm849, %v1561, %v1559
      %v1564 = vsel %vm856, %v1562, 0.0
      %v1565 = vsel %vm857, %v1563, 0.0
      %v1566 = vpack.c.bf16 %v1564, %v1556
      %v1567 = vpack.c.bf16 %v1565, %v1557
      %1568 = vst [vmem:[#allocation2 + $0xe0] sm:$0xff] %v1566
      %1569 = vst [vmem:[#allocation2 + $0xe8] sm:$0xff] %v1567
      %1570 = vrot.lane.b32.xlu0 %v288, 113
      %v1571 = vpop.permute.xlu0 %1570
      %1572 = vrot.lane.b32.xlu0 %v289, 113
      %v1573 = vpop.permute.xlu0 %1572
      %v1574 = vsel %vm430, %v1571, %v1573
      %v1575 = vsel %vm430, %v1573, %v1571
      %v1576 = vsel %vm437, %v1574, 0.0
      %v1577 = vsel %vm438, %v1575, 0.0
      %1578 = vrot.lane.b32.xlu0 %v288, 112
      %v1579 = vpop.permute.xlu0 %1578
      %1580 = vrot.lane.b32.xlu0 %v289, 112
      %v1581 = vpop.permute.xlu0 %1580
      %v1582 = vsel %vm445, %v1579, %v1581
      %v1583 = vsel %vm445, %v1581, %v1579
      %v1584 = vsel %vm452, %v1582, 0.0
      %v1585 = vsel %vm453, %v1583, 0.0
      %v1586 = vpack.c.bf16 %v1584, %v1576
      %v1587 = vpack.c.bf16 %v1585, %v1577
      %1588 = vst [vmem:[#allocation2 + $0xf0] sm:$0xff] %v1586
      %1589 = vst [vmem:[#allocation2 + $0xf8] sm:$0xff] %v1587
      %1590 = vrot.lane.b32.xlu0 %v288, 111
      %v1591 = vpop.permute.xlu0 %1590
      %1592 = vrot.lane.b32.xlu0 %v289, 111
      %v1593 = vpop.permute.xlu0 %1592
      %v1594 = vsel %vm464, %v1591, %v1593
      %v1595 = vsel %vm464, %v1593, %v1591
      %v1596 = vsel %vm471, %v1594, 0.0
      %v1597 = vsel %vm472, %v1595, 0.0
      %1598 = vrot.lane.b32.xlu0 %v288, 110
      %v1599 = vpop.permute.xlu0 %1598
      %1600 = vrot.lane.b32.xlu0 %v289, 110
      %v1601 = vpop.permute.xlu0 %1600
      %v1602 = vsel %vm896, %v1599, %v1601
      %v1603 = vsel %vm896, %v1601, %v1599
      %v1604 = vsel %vm903, %v1602, 0.0
      %v1605 = vsel %vm904, %v1603, 0.0
      %v1606 = vpack.c.bf16 %v1604, %v1596
      %v1607 = vpack.c.bf16 %v1605, %v1597
      %1608 = vst [vmem:[#allocation2 + $0x100] sm:$0xff] %v1606
      %1609 = vst [vmem:[#allocation2 + $0x108] sm:$0xff] %v1607
      %1610 = vrot.lane.b32.xlu0 %v288, 109
      %v1611 = vpop.permute.xlu0 %1610
      %1612 = vrot.lane.b32.xlu0 %v289, 109
      %v1613 = vpop.permute.xlu0 %1612
      %vm1614 = vcmp.lt.s32.totalorder %v173, 109
      %v1615 = vsel %vm1614, %v1611, %v1613
      %v1616 = vsel %vm1614, %v1613, %v1611
      %vm1617 = vmand %vm311, %vm1176
      %vm1618 = vmand %vm312, %vm1177
      %v1619 = vsel %vm1617, 1, 0
      %v1620 = vsel %vm1618, 1, 0
      %vm1621 = vcmp.eq.s32.totalorder %v1619, 1
      %vm1622 = vcmp.eq.s32.totalorder %v1620, 1
      %v1623 = vsel %vm1621, %v1615, 0.0
      %v1624 = vsel %vm1622, %v1616, 0.0
      %1625 = vrot.lane.b32.xlu0 %v288, 99
      %v1626 = vpop.permute.xlu0 %1625
      %1627 = vrot.lane.b32.xlu0 %v289, 99
      %v1628 = vpop.permute.xlu0 %1627
      %vm1629 = vcmp.lt.s32.totalorder %v173, 99
      %v1630 = vsel %vm1629, %v1626, %v1628
      %v1631 = vsel %vm1629, %v1628, %v1626
      %vm1632 = vmand %vm626, %vm1170
      %vm1633 = vmand %vm627, %vm1171
      %v1634 = vsel %vm1632, 1, 0
      %v1635 = vsel %vm1633, 1, 0
      %vm1636 = vcmp.eq.s32.totalorder %v1634, 1
      %vm1637 = vcmp.eq.s32.totalorder %v1635, 1
      %v1638 = vsel %vm1636, %v1630, 0.0
      %v1639 = vsel %vm1637, %v1631, 0.0
      %v1640 = vpack.c.bf16 %v1638, %v1623
      %v1641 = vpack.c.bf16 %v1639, %v1624
      %1642 = vst [vmem:[#allocation2 + $0x110] sm:$0xff] %v1640
      %1643 = vst [vmem:[#allocation2 + $0x118] sm:$0xff] %v1641
      %1644 = vrot.lane.b32.xlu0 %v288, 98
      %v1645 = vpop.permute.xlu0 %1644
      %1646 = vrot.lane.b32.xlu0 %v289, 98
      %v1647 = vpop.permute.xlu0 %1646
      %v1648 = vsel %vm915, %v1645, %v1647
      %v1649 = vsel %vm915, %v1647, %v1645
      %v1650 = vsel %vm922, %v1648, 0.0
      %v1651 = vsel %vm923, %v1649, 0.0
      %1652 = vrot.lane.b32.xlu0 %v288, 97
      %v1653 = vpop.permute.xlu0 %1652
      %1654 = vrot.lane.b32.xlu0 %v289, 97
      %v1655 = vpop.permute.xlu0 %1654
      %v1656 = vsel %vm930, %v1653, %v1655
      %v1657 = vsel %vm930, %v1655, %v1653
      %v1658 = vsel %vm937, %v1656, 0.0
      %v1659 = vsel %vm938, %v1657, 0.0
      %v1660 = vpack.c.bf16 %v1658, %v1650
      %v1661 = vpack.c.bf16 %v1659, %v1651
      %1662 = vst [vmem:[#allocation2 + $0x120] sm:$0xff] %v1660
      %1663 = vst [vmem:[#allocation2 + $0x128] sm:$0xff] %v1661
      %1664 = vrot.lane.b32.xlu0 %v288, 96
      %v1665 = vpop.permute.xlu0 %1664
      %1666 = vrot.lane.b32.xlu0 %v289, 96
      %v1667 = vpop.permute.xlu0 %1666
      %v1668 = vsel %vm949, %v1665, %v1667
      %v1669 = vsel %vm949, %v1667, %v1665
      %v1670 = vsel %vm956, %v1668, 0.0
      %v1671 = vsel %vm957, %v1669, 0.0
      %1672 = vrot.lane.b32.xlu0 %v288, 95
      %v1673 = vpop.permute.xlu0 %1672
      %1674 = vrot.lane.b32.xlu0 %v289, 95
      %v1675 = vpop.permute.xlu0 %1674
      %v1676 = vsel %vm964, %v1673, %v1675
      %v1677 = vsel %vm964, %v1675, %v1673
      %v1678 = vsel %vm971, %v1676, 0.0
      %v1679 = vsel %vm972, %v1677, 0.0
      %v1680 = vpack.c.bf16 %v1678, %v1670
      %v1681 = vpack.c.bf16 %v1679, %v1671
      %1682 = vst [vmem:[#allocation2 + $0x130] sm:$0xff] %v1680
      %1683 = vst [vmem:[#allocation2 + $0x138] sm:$0xff] %v1681
      %1684 = vrot.lane.b32.xlu0 %v288, 94
      %v1685 = vpop.permute.xlu0 %1684
      %1686 = vrot.lane.b32.xlu0 %v289, 94
      %v1687 = vpop.permute.xlu0 %1686
      %v1688 = vsel %vm983, %v1685, %v1687
      %v1689 = vsel %vm983, %v1687, %v1685
      %v1690 = vsel %vm990, %v1688, 0.0
      %v1691 = vsel %vm991, %v1689, 0.0
      %1692 = vrot.lane.b32.xlu0 %v288, 93
      %v1693 = vpop.permute.xlu0 %1692
      %1694 = vrot.lane.b32.xlu0 %v289, 93
      %v1695 = vpop.permute.xlu0 %1694
      %vm1696 = vcmp.lt.s32.totalorder %v173, 93
      %v1697 = vsel %vm1696, %v1693, %v1695
      %v1698 = vsel %vm1696, %v1695, %v1693
      %vm1699 = vmand %vm626, %vm1176
      %vm1700 = vmand %vm627, %vm1177
      %v1701 = vsel %vm1699, 1, 0
      %v1702 = vsel %vm1700, 1, 0
      %vm1703 = vcmp.eq.s32.totalorder %v1701, 1
      %vm1704 = vcmp.eq.s32.totalorder %v1702, 1
      %v1705 = vsel %vm1703, %v1697, 0.0
      %v1706 = vsel %vm1704, %v1698, 0.0
      %v1707 = vpack.c.bf16 %v1705, %v1690
      %v1708 = vpack.c.bf16 %v1706, %v1691
      %1709 = vst [vmem:[#allocation2 + $0x140] sm:$0xff] %v1707
      %1710 = vst [vmem:[#allocation2 + $0x148] sm:$0xff] %v1708
      %1711 = vrot.lane.b32.xlu0 %v288, 83
      %v1712 = vpop.permute.xlu0 %1711
      %1713 = vrot.lane.b32.xlu0 %v289, 83
      %v1714 = vpop.permute.xlu0 %1713
      %vm1715 = vcmp.lt.s32.totalorder %v173, 83
      %v1716 = vsel %vm1715, %v1712, %v1714
      %v1717 = vsel %vm1715, %v1714, %v1712
      %vm1718 = vmand %vm1164, %vm1170
      %vm1719 = vmand %vm1165, %vm1171
      %v1720 = vsel %vm1718, 1, 0
      %v1721 = vsel %vm1719, 1, 0
      %vm1722 = vcmp.eq.s32.totalorder %v1720, 1
      %vm1723 = vcmp.eq.s32.totalorder %v1721, 1
      %v1724 = vsel %vm1722, %v1716, 0.0
      %v1725 = vsel %vm1723, %v1717, 0.0
      %1726 = vrot.lane.b32.xlu0 %v288, 82
      %v1727 = vpop.permute.xlu0 %1726
      %1728 = vrot.lane.b32.xlu0 %v289, 82
      %v1729 = vpop.permute.xlu0 %1728
      %vm1730 = vcmp.lt.s32.totalorder %v173, 82
      %v1731 = vsel %vm1730, %v1727, %v1729
      %v1732 = vsel %vm1730, %v1729, %v1727
      %vm1733 = vmand %vm1164, %vm632
      %vm1734 = vmand %vm1165, %vm633
      %v1735 = vsel %vm1733, 1, 0
      %v1736 = vsel %vm1734, 1, 0
      %vm1737 = vcmp.eq.s32.totalorder %v1735, 1
      %vm1738 = vcmp.eq.s32.totalorder %v1736, 1
      %v1739 = vsel %vm1737, %v1731, 0.0
      %v1740 = vsel %vm1738, %v1732, 0.0
      %v1741 = vpack.c.bf16 %v1739, %v1724
      %v1742 = vpack.c.bf16 %v1740, %v1725
      %1743 = vst [vmem:[#allocation2 + $0x150] sm:$0xff] %v1741
      %1744 = vst [vmem:[#allocation2 + $0x158] sm:$0xff] %v1742
      %1745 = vrot.lane.b32.xlu0 %v288, 81
      %v1746 = vpop.permute.xlu0 %1745
      %1747 = vrot.lane.b32.xlu0 %v289, 81
      %v1748 = vpop.permute.xlu0 %1747
      %vm1749 = vcmp.lt.s32.totalorder %v173, 81
      %v1750 = vsel %vm1749, %v1746, %v1748
      %v1751 = vsel %vm1749, %v1748, %v1746
      %vm1752 = vmand %vm1164, %vm317
      %vm1753 = vmand %vm1165, %vm318
      %v1754 = vsel %vm1752, 1, 0
      %v1755 = vsel %vm1753, 1, 0
      %vm1756 = vcmp.eq.s32.totalorder %v1754, 1
      %vm1757 = vcmp.eq.s32.totalorder %v1755, 1
      %v1758 = vsel %vm1756, %v1750, 0.0
      %v1759 = vsel %vm1757, %v1751, 0.0
      %1760 = vrot.lane.b32.xlu0 %v288, 80
      %v1761 = vpop.permute.xlu0 %1760
      %1762 = vrot.lane.b32.xlu0 %v289, 80
      %v1763 = vpop.permute.xlu0 %1762
      %vm1764 = vcmp.lt.s32.totalorder %v173, 80
      %v1765 = vsel %vm1764, %v1761, %v1763
      %v1766 = vsel %vm1764, %v1763, %v1761
      %vm1767 = vmand %vm1164, %vm323
      %vm1768 = vmand %vm1165, %vm324
      %v1769 = vsel %vm1767, 1, 0
      %v1770 = vsel %vm1768, 1, 0
      %vm1771 = vcmp.eq.s32.totalorder %v1769, 1
      %vm1772 = vcmp.eq.s32.totalorder %v1770, 1
      %v1773 = vsel %vm1771, %v1765, 0.0
      %v1774 = vsel %vm1772, %v1766, 0.0
      %v1775 = vpack.c.bf16 %v1773, %v1758
      %v1776 = vpack.c.bf16 %v1774, %v1759
      %1777 = vst [vmem:[#allocation2 + $0x160] sm:$0xff] %v1775
      %1778 = vst [vmem:[#allocation2 + $0x168] sm:$0xff] %v1776
      %1779 = vrot.lane.b32.xlu0 %v288, 79
      %v1780 = vpop.permute.xlu0 %1779
      %1781 = vrot.lane.b32.xlu0 %v289, 79
      %v1782 = vpop.permute.xlu0 %1781
      %vm1783 = vcmp.lt.s32.totalorder %v173, 79
      %v1784 = vsel %vm1783, %v1780, %v1782
      %v1785 = vsel %vm1783, %v1782, %v1780
      %vm1786 = vmand %vm1164, %vm329
      %vm1787 = vmand %vm1165, %vm330
      %v1788 = vsel %vm1786, 1, 0
      %v1789 = vsel %vm1787, 1, 0
      %vm1790 = vcmp.eq.s32.totalorder %v1788, 1
      %vm1791 = vcmp.eq.s32.totalorder %v1789, 1
      %v1792 = vsel %vm1790, %v1784, 0.0
      %v1793 = vsel %vm1791, %v1785, 0.0
      %1794 = vrot.lane.b32.xlu0 %v288, 78
      %v1795 = vpop.permute.xlu0 %1794
      %1796 = vrot.lane.b32.xlu0 %v289, 78
      %v1797 = vpop.permute.xlu0 %1796
      %vm1798 = vcmp.lt.s32.totalorder %v173, 78
      %v1799 = vsel %vm1798, %v1795, %v1797
      %v1800 = vsel %vm1798, %v1797, %v1795
      %vm1801 = vmand %vm1164, %vm638
      %vm1802 = vmand %vm1165, %vm639
      %v1803 = vsel %vm1801, 1, 0
      %v1804 = vsel %vm1802, 1, 0
      %vm1805 = vcmp.eq.s32.totalorder %v1803, 1
      %vm1806 = vcmp.eq.s32.totalorder %v1804, 1
      %v1807 = vsel %vm1805, %v1799, 0.0
      %v1808 = vsel %vm1806, %v1800, 0.0
      %v1809 = vpack.c.bf16 %v1807, %v1792
      %v1810 = vpack.c.bf16 %v1808, %v1793
      %1811 = vst [vmem:[#allocation2 + $0x170] sm:$0xff] %v1809
      %1812 = vst [vmem:[#allocation2 + $0x178] sm:$0xff] %v1810
      %1813 = vrot.lane.b32.xlu0 %v288, 77
      %v1814 = vpop.permute.xlu0 %1813
      %1815 = vrot.lane.b32.xlu0 %v289, 77
      %v1816 = vpop.permute.xlu0 %1815
      %vm1817 = vcmp.lt.s32.totalorder %v173, 77
      %v1818 = vsel %vm1817, %v1814, %v1816
      %v1819 = vsel %vm1817, %v1816, %v1814
      %vm1820 = vmand %vm1164, %vm1176
      %vm1821 = vmand %vm1165, %vm1177
      %v1822 = vsel %vm1820, 1, 0
      %v1823 = vsel %vm1821, 1, 0
      %vm1824 = vcmp.eq.s32.totalorder %v1822, 1
      %vm1825 = vcmp.eq.s32.totalorder %v1823, 1
      %v1826 = vsel %vm1824, %v1818, 0.0
      %v1827 = vsel %vm1825, %v1819, 0.0
      %v1828 = vpack.c.bf16 0.0, %v1826
      %v1829 = vpack.c.bf16 0.0, %v1827
      %1830 = vst [vmem:[#allocation2 + $0x180] sm:$0xff] %v1828
      %1831 = vst [vmem:[#allocation2 + $0x188] sm:$0xff] %v1829
      %v1832 = vld [vmem:[#allocation2] sm:$0xff]
      %v1833 = vld [vmem:[#allocation2 + $0x8] sm:$0xff]
      %v1834 = vld [vmem:[#allocation2 + $0x10] sm:$0xff]
      %v1835 = vld [vmem:[#allocation2 + $0x18] sm:$0xff]
      %v1836 = vld [vmem:[#allocation2 + $0x20] sm:$0xff]
      %v1837 = vld [vmem:[#allocation2 + $0x28] sm:$0xff]
      %v1838 = vld [vmem:[#allocation2 + $0x30] sm:$0xff]
      %v1839 = vld [vmem:[#allocation2 + $0x38] sm:$0xff]
      %v1840 = vld [vmem:[#allocation2 + $0x40] sm:$0xff]
      %v1841 = vld [vmem:[#allocation2 + $0x48] sm:$0xff]
      %v1842 = vld [vmem:[#allocation2 + $0x50] sm:$0xff]
      %v1843 = vld [vmem:[#allocation2 + $0x58] sm:$0xff]
      %v1844 = vld [vmem:[#allocation2 + $0x60] sm:$0xff]
      %v1845 = vld [vmem:[#allocation2 + $0x68] sm:$0xff]
      %v1846 = vld [vmem:[#allocation2 + $0x70] sm:$0xff]
      %v1847 = vld [vmem:[#allocation2 + $0x78] sm:$0xff]
      %v1848 = vld [vmem:[#allocation2 + $0x80] sm:$0xff]
      %v1849 = vld [vmem:[#allocation2 + $0x88] sm:$0xff]
      %v1850 = vld [vmem:[#allocation2 + $0x90] sm:$0xff]
      %v1851 = vld [vmem:[#allocation2 + $0x98] sm:$0xff]
      %v1852 = vld [vmem:[#allocation2 + $0xa0] sm:$0xff]
      %v1853 = vld [vmem:[#allocation2 + $0xa8] sm:$0xff]
      %v1854 = vld [vmem:[#allocation2 + $0xb0] sm:$0xff]
      %v1855 = vld [vmem:[#allocation2 + $0xb8] sm:$0xff]
      %v1856 = vld [vmem:[#allocation2 + $0xc0] sm:$0xff]
      %v1857 = vld [vmem:[#allocation2 + $0xc8] sm:$0xff]
      %v1858 = vld [vmem:[#allocation2 + $0xd0] sm:$0xff]
      %v1859 = vld [vmem:[#allocation2 + $0xd8] sm:$0xff]
      %v1860 = vld [vmem:[#allocation2 + $0xe0] sm:$0xff]
      %v1861 = vld [vmem:[#allocation2 + $0xe8] sm:$0xff]
      %v1862 = vld [vmem:[#allocation2 + $0xf0] sm:$0xff]
      %v1863 = vld [vmem:[#allocation2 + $0xf8] sm:$0xff]
      %v1864 = vld [vmem:[#allocation2 + $0x100] sm:$0xff]
      %v1865 = vld [vmem:[#allocation2 + $0x108] sm:$0xff]
      %v1866 = vld [vmem:[#allocation2 + $0x110] sm:$0xff]
      %v1867 = vld [vmem:[#allocation2 + $0x118] sm:$0xff]
      %v1868 = vld [vmem:[#allocation2 + $0x120] sm:$0xff]
      %v1869 = vld [vmem:[#allocation2 + $0x128] sm:$0xff]
      %v1870 = vld [vmem:[#allocation2 + $0x130] sm:$0xff]
      %v1871 = vld [vmem:[#allocation2 + $0x138] sm:$0xff]
      %v1872 = vld [vmem:[#allocation2 + $0x140] sm:$0xff]
      %v1873 = vld [vmem:[#allocation2 + $0x148] sm:$0xff]
      %v1874 = vld [vmem:[#allocation2 + $0x150] sm:$0xff]
      %v1875 = vld [vmem:[#allocation2 + $0x158] sm:$0xff]
      %v1876 = vld [vmem:[#allocation2 + $0x160] sm:$0xff]
      %v1877 = vld [vmem:[#allocation2 + $0x168] sm:$0xff]
      %v1878 = vld [vmem:[#allocation2 + $0x170] sm:$0xff]
      %v1879 = vld [vmem:[#allocation2 + $0x178] sm:$0xff]
      %v1880 = vld [vmem:[#allocation2 + $0x180] sm:$0xf]
      %v1881 = vld [vmem:[#allocation2 + $0x188] sm:$0xf]
      %1883 = vset.pattern.permute.xlu0 0
      %1884 = vperm.xlu0 %1883, %v1153
      %v1885 = vpop.permute.xlu0 %1884
      %v1888 = vsel %vm215, %v1152, 0
      %v1891 = vsel %vm222, %v1880, 0
      %v1894 = vsel %vm222, %v1881, 0
      %1896 = vmatprep.subr.bf16.mxu0 %v1833
      %1897 = vmatpush1.bf16.msra.mxu0 %v1832
      %1898 = vmatprep.subr.bf16.mxu0 %v1835
      %1899 = vmatpush1.bf16.msra.mxu0 %v1834
      %1900 = vmatprep.subr.bf16.mxu0 %v1837
      %1901 = vmatpush1.bf16.msra.mxu0 %v1836
      %1902 = vmatprep.subr.bf16.mxu0 %v1839
      %1903 = vmatpush1.bf16.msra.mxu0 %v1838
      %1904 = vmatprep.subr.bf16.mxu0 %v1841
      %1905 = vmatpush1.bf16.msra.mxu0 %v1840
      %1906 = vmatprep.subr.bf16.mxu0 %v1843
      %1907 = vmatpush1.bf16.msra.mxu0 %v1842
      %1908 = vmatprep.subr.bf16.mxu0 %v1845
      %1909 = vmatpush1.bf16.msra.mxu0 %v1844
      %1910 = vmatprep.subr.bf16.mxu0 %v1847
      %1911 = vmatpush1.bf16.msra.mxu0 %v1846
      %1912 = vmatprep.subr.bf16.mxu0 %v1849
      %1913 = vmatpush1.bf16.msra.mxu0 %v1848
      %1914 = vmatprep.subr.bf16.mxu0 %v1851
      %1915 = vmatpush1.bf16.msra.mxu0 %v1850
      %1916 = vmatprep.subr.bf16.mxu0 %v1853
      %1917 = vmatpush1.bf16.msra.mxu0 %v1852
      %1918 = vmatprep.subr.bf16.mxu0 %v1855
      %1919 = vmatpush1.bf16.msra.mxu0 %v1854
      %1920 = vmatprep.subr.bf16.mxu0 %v1857
      %1921 = vmatpush1.bf16.msra.mxu0 %v1856
      %1922 = vmatprep.subr.bf16.mxu0 %v1859
      %1923 = vmatpush1.bf16.msra.mxu0 %v1858
      %1924 = vmatprep.subr.bf16.mxu0 %v1861
      %1925 = vmatpush1.bf16.msra.mxu0 %v1860
      %1926 = vmatprep.subr.bf16.mxu0 %v1863
      %1927 = vmatpush1.bf16.msra.mxu0 %v1862
      %1928 = vmatprep.mubr.bf16.mxu0 %v1150
      %1929 = vmatmul.mubr.bf16.gmra.mrb[0].mxu0 %v1149
      %v1930 = vpop.f32.mrb[0].mxu0
      %v1931 = vadd.f32 %v1885, %v1930
      %v1932 = vpop.f32.mrb[0].mxu0
      %v1933 = vadd.f32 %v1885, %v1932
      %v1934 = vpop.f32.mrb[0].mxu0
      %v1935 = vpop.f32.mrb[0].mxu0
      %1936 = vdwg.mxu0
      %1937 = vmatprep.subr.bf16.mxu0 %v1865
      %1938 = vmatpush1.bf16.msra.mxu0 %v1864
      %1939 = vmatprep.subr.bf16.mxu0 %v1867
      %1940 = vmatpush1.bf16.msra.mxu0 %v1866
      %1941 = vmatprep.subr.bf16.mxu0 %v1869
      %1942 = vmatpush1.bf16.msra.mxu0 %v1868
      %1943 = vmatprep.subr.bf16.mxu0 %v1871
      %1944 = vmatpush1.bf16.msra.mxu0 %v1870
      %1945 = vmatprep.subr.bf16.mxu0 %v1873
      %1946 = vmatpush1.bf16.msra.mxu0 %v1872
      %1947 = vmatprep.subr.bf16.mxu0 %v1875
      %1948 = vmatpush1.bf16.msra.mxu0 %v1874
      %1949 = vmatprep.subr.bf16.mxu0 %v1877
      %1950 = vmatpush1.bf16.msra.mxu0 %v1876
      %1951 = vmatprep.subr.bf16.mxu0 %v1879
      %1952 = vmatpush1.bf16.msra.mxu0 %v1878
      %1953 = vmatprep.subr.bf16.mxu0 %v1894
      %1954 = vmatpush1.bf16.msra.mxu0 %v1891
      %1955 = vmatprep.subr.bf16.mxu0 0
      %1956 = vmatpush1.bf16.msra.mxu0 0
      %1957 = vmatprep.subr.bf16.mxu0 0
      %1958 = vmatpush1.bf16.msra.mxu0 0
      %1959 = vmatprep.subr.bf16.mxu0 0
      %1960 = vmatpush1.bf16.msra.mxu0 0
      %1961 = vmatprep.subr.bf16.mxu0 0
      %1962 = vmatpush1.bf16.msra.mxu0 0
      %1963 = vmatprep.subr.bf16.mxu0 0
      %1964 = vmatpush1.bf16.msra.mxu0 0
      %1965 = vmatprep.subr.bf16.mxu0 0
      %1966 = vmatpush1.bf16.msra.mxu0 0
      %1967 = vmatprep.subr.bf16.mxu0 0
      %1968 = vmatpush1.bf16.msra.mxu0 0
      %1969 = vmatprep.mubr.bf16.mxu0 %v1888
      %1970 = vmatmul.mubr.bf16.gmra.mrb[0].mxu0 %v1151
      %v1971 = vpop.f32.mrb[0].mxu0
      %v1972 = vadd.f32 %v1931, %v1971
      %v1973 = vpop.f32.mrb[0].mxu0
      %v1974 = vadd.f32 %v1933, %v1973
      %v1975 = vpop.f32.mrb[0].mxu0
      %v1976 = vpop.f32.mrb[0].mxu0
      %1977 = vdwg.mxu0
      %v1978 = vmax.f32 %v1972, 0.0
      %v1979 = vmax.f32 %v1974, 0.0
      %v1980 = vld [vmem:[%s1 + $0x120] sm:$0xff]
      %v1981 = vpack.c.bf16 %v1980, %v1980
      %v1982 = vld [vmem:[%s2 + $0x48] sm:$0xff]
      %v1983 = vpack.c.bf16 %v1978, %v1978
      %v1984 = vpack.c.bf16 %v1979, %v1979
      %1986 = vset.pattern.permute.xlu0 0
      %1987 = vperm.xlu0 %1986, %v1982
      %v1988 = vpop.permute.xlu0 %1987
      %v1991 = vsel %vm215, %v1981, 0
      %v1994 = vsel %vm222, %v1983, 0
      %v1997 = vsel %vm222, %v1984, 0
      %1999 = vmatprep.subr.bf16.mxu0 %v1997
      %2000 = vmatpush1.bf16.msra.mxu0 %v1994
      %2001 = vmatprep.subr.bf16.mxu0 0
      %2002 = vmatpush1.bf16.msra.mxu0 0
      %2003 = vmatprep.subr.bf16.mxu0 0
      %2004 = vmatpush1.bf16.msra.mxu0 0
      %2005 = vmatprep.subr.bf16.mxu0 0
      %2006 = vmatpush1.bf16.msra.mxu0 0
      %2007 = vmatprep.subr.bf16.mxu0 0
      %2008 = vmatpush1.bf16.msra.mxu0 0
      %2009 = vmatprep.subr.bf16.mxu0 0
      %2010 = vmatpush1.bf16.msra.mxu0 0
      %2011 = vmatprep.subr.bf16.mxu0 0
      %2012 = vmatpush1.bf16.msra.mxu0 0
      %2013 = vmatprep.subr.bf16.mxu0 0
      %2014 = vmatpush1.bf16.msra.mxu0 0
      %2015 = vmatprep.subr.bf16.mxu0 0
      %2016 = vmatpush1.bf16.msra.mxu0 0
      %2017 = vmatprep.subr.bf16.mxu0 0
      %2018 = vmatpush1.bf16.msra.mxu0 0
      %2019 = vmatprep.subr.bf16.mxu0 0
      %2020 = vmatpush1.bf16.msra.mxu0 0
      %2021 = vmatprep.subr.bf16.mxu0 0
      %2022 = vmatpush1.bf16.msra.mxu0 0
      %2023 = vmatprep.subr.bf16.mxu0 0
      %2024 = vmatpush1.bf16.msra.mxu0 0
      %2025 = vmatprep.subr.bf16.mxu0 0
      %2026 = vmatpush1.bf16.msra.mxu0 0
      %2027 = vmatprep.subr.bf16.mxu0 0
      %2028 = vmatpush1.bf16.msra.mxu0 0
      %2029 = vmatprep.subr.bf16.mxu0 0
      %2030 = vmatpush1.bf16.msra.mxu0 0
      %2031 = vmatprep.mubr.bf16.mxu0 0
      %2032 = vmatmul.mubr.bf16.gmra.mrb[0].mxu0 %v1991
      %v2033 = vpop.f32.mrb[0].mxu0
      %v2034 = vadd.f32 %v1988, %v2033
      %v2035 = vpop.f32.mrb[0].mxu0
      %v2036 = vadd.f32 %v1988, %v2035
      %v2037 = vpop.f32.mrb[0].mxu0
      %v2038 = vpop.f32.mrb[0].mxu0
      %2039 = vdwg.mxu0
      %v2040 = vmax.f32 %v2034, 0.0
      %v2041 = vmax.f32 %v2036, 0.0
      %2042 = vst [vmem:[#allocation3 + $0x30] sm:$0xff] %v2040
      %2043 = vst [vmem:[#allocation3 + $0x38] sm:$0xff] %v2041
      %v2044 = vld [vmem:[%s1 + $0x140] sm:$0xff]
      %v2045 = vpack.c.bf16 %v2044, %v2044
      %v2046 = vld [vmem:[%s2 + $0x50] sm:$0xff]
      %v2047 = vld [vmem:[#allocation3] sm:$0xff]
      %v2048 = vld [vmem:[#allocation3 + $0x8] sm:$0xff]
      %v2049 = vld [vmem:[#allocation3 + $0x10] sm:$0xff]
      %v2050 = vld [vmem:[#allocation3 + $0x18] sm:$0xff]
      %v2051 = vld [vmem:[#allocation3 + $0x20] sm:$0xff]
      %v2052 = vld [vmem:[#allocation3 + $0x28] sm:$0xff]
      %v2053 = vld [vmem:[#allocation3 + $0x30] sm:$0xff]
      %v2054 = vld [vmem:[#allocation3 + $0x38] sm:$0xff]
      %v2055 = vpack.c.bf16 %v2049, %v2047
      %v2056 = vpack.c.bf16 %v2050, %v2048
      %v2057 = vpack.c.bf16 %v2053, %v2051
      %v2058 = vpack.c.bf16 %v2054, %v2052
      %2060 = vset.pattern.permute.xlu0 0
      %2061 = vperm.xlu0 %2060, %v2046
      %v2062 = vpop.permute.xlu0 %2061
      %vm2064 = vcmask 261120
      %v2066 = vsel %vm2064, %v2045, 0
      %2068 = vmatprep.subr.bf16.mxu0 %v2056
      %2069 = vmatpush1.bf16.msra.mxu0 %v2055
      %2070 = vmatprep.subr.bf16.mxu0 %v2058
      %2071 = vmatpush1.bf16.msra.mxu0 %v2057
      %2072 = vmatprep.subr.bf16.mxu0 0
      %2073 = vmatpush1.bf16.msra.mxu0 0
      %2074 = vmatprep.subr.bf16.mxu0 0
      %2075 = vmatpush1.bf16.msra.mxu0 0
      %2076 = vmatprep.subr.bf16.mxu0 0
      %2077 = vmatpush1.bf16.msra.mxu0 0
      %2078 = vmatprep.subr.bf16.mxu0 0
      %2079 = vmatpush1.bf16.msra.mxu0 0
      %2080 = vmatprep.subr.bf16.mxu0 0
      %2081 = vmatpush1.bf16.msra.mxu0 0
      %2082 = vmatprep.subr.bf16.mxu0 0
      %2083 = vmatpush1.bf16.msra.mxu0 0
      %2084 = vmatprep.subr.bf16.mxu0 0
      %2085 = vmatpush1.bf16.msra.mxu0 0
      %2086 = vmatprep.subr.bf16.mxu0 0
      %2087 = vmatpush1.bf16.msra.mxu0 0
      %2088 = vmatprep.subr.bf16.mxu0 0
      %2089 = vmatpush1.bf16.msra.mxu0 0
      %2090 = vmatprep.subr.bf16.mxu0 0
      %2091 = vmatpush1.bf16.msra.mxu0 0
      %2092 = vmatprep.subr.bf16.mxu0 0
      %2093 = vmatpush1.bf16.msra.mxu0 0
      %2094 = vmatprep.subr.bf16.mxu0 0
      %2095 = vmatpush1.bf16.msra.mxu0 0
      %2096 = vmatprep.subr.bf16.mxu0 0
      %2097 = vmatpush1.bf16.msra.mxu0 0
      %2098 = vmatprep.subr.bf16.mxu0 0
      %2099 = vmatpush1.bf16.msra.mxu0 0
      %2100 = vmatprep.mubr.bf16.mxu0 0
      %2101 = vmatmul.mubr.bf16.gmra.mrb[0].mxu0 %v2066
      %v2102 = vpop.f32.mrb[0].mxu0
      %v2103 = vadd.f32 %v2062, %v2102
      %v2104 = vpop.f32.mrb[0].mxu0
      %v2105 = vadd.f32 %v2062, %v2104
      %v2106 = vpop.f32.mrb[0].mxu0
      %v2107 = vpop.f32.mrb[0].mxu0
      %2108 = vdwg.mxu0
      %v2109 = vmax.f32 %v2103, 0.0
      %v2110 = vmax.f32 %v2105, 0.0
      %v2111 = vld [vmem:[%s1 + $0x160] sm:$0xff]
      %v2112 = vpack.c.bf16 %v2111, %v2111
      %v2113 = vld [vmem:[%s2 + $0x58] sm:$0xff]
      %2114 = vrot.lane.b32.xlu0 %v2109, 17
      %v2115 = vpop.permute.xlu0 %2114
      %2116 = vrot.lane.b32.xlu0 %v2110, 17
      %v2117 = vpop.permute.xlu0 %2116
      %v2118 = vsel %vm335, %v2115, %v2117
      %v2119 = vsel %vm335, %v2117, %v2115
      %v2120 = vsel %vm342, %v2119, 0.0
      %v2121 = vsel %vm343, %v2118, 0.0
      %2122 = vrot.lane.b32.xlu0 %v2109, 16
      %v2123 = vpop.permute.xlu0 %2122
      %2124 = vrot.lane.b32.xlu0 %v2110, 16
      %v2125 = vpop.permute.xlu0 %2124
      %v2126 = vsel %vm350, %v2123, %v2125
      %v2127 = vsel %vm350, %v2125, %v2123
      %v2128 = vsel %vm357, %v2127, 0.0
      %v2129 = vsel %vm358, %v2126, 0.0
      %v2130 = vpack.c.bf16 %v2128, %v2120
      %v2131 = vpack.c.bf16 %v2129, %v2121
      %2132 = vst [vmem:[#allocation2] sm:$0xff] %v2130
      %2133 = vst [vmem:[#allocation2 + $0x8] sm:$0xff] %v2131
      %2134 = vrot.lane.b32.xlu0 %v2109, 15
      %v2135 = vpop.permute.xlu0 %2134
      %2136 = vrot.lane.b32.xlu0 %v2110, 15
      %v2137 = vpop.permute.xlu0 %2136
      %v2138 = vsel %vm369, %v2135, %v2137
      %v2139 = vsel %vm369, %v2137, %v2135
      %v2140 = vsel %vm376, %v2139, 0.0
      %v2141 = vsel %vm377, %v2138, 0.0
      %2142 = vrot.lane.b32.xlu0 %v2109, 1
      %v2143 = vpop.permute.xlu0 %2142
      %2144 = vrot.lane.b32.xlu0 %v2110, 1
      %v2145 = vpop.permute.xlu0 %2144
      %v2146 = vsel %vm384, %v2143, %v2145
      %v2147 = vsel %vm384, %v2145, %v2143
      %v2148 = vsel %vm391, %v2147, 0.0
      %v2149 = vsel %vm392, %v2146, 0.0
      %v2150 = vpack.c.bf16 %v2148, %v2140
      %v2151 = vpack.c.bf16 %v2149, %v2141
      %2152 = vst [vmem:[#allocation2 + $0x10] sm:$0xff] %v2150
      %2153 = vst [vmem:[#allocation2 + $0x18] sm:$0xff] %v2151
      %v2154 = vsel %vm403, %v2109, 0.0
      %v2155 = vsel %vm404, %v2110, 0.0
      %2156 = vrot.lane.b32.xlu0 %v2109, 127
      %v2157 = vpop.permute.xlu0 %2156
      %2158 = vrot.lane.b32.xlu0 %v2110, 127
      %v2159 = vpop.permute.xlu0 %2158
      %v2160 = vsel %vm411, %v2157, %v2159
      %v2161 = vsel %vm411, %v2159, %v2157
      %v2162 = vsel %vm418, %v2160, 0.0
      %v2163 = vsel %vm419, %v2161, 0.0
      %v2164 = vpack.c.bf16 %v2162, %v2154
      %v2165 = vpack.c.bf16 %v2163, %v2155
      %2166 = vst [vmem:[#allocation2 + $0x20] sm:$0xff] %v2164
      %2167 = vst [vmem:[#allocation2 + $0x28] sm:$0xff] %v2165
      %2168 = vrot.lane.b32.xlu0 %v2109, 113
      %v2169 = vpop.permute.xlu0 %2168
      %2170 = vrot.lane.b32.xlu0 %v2110, 113
      %v2171 = vpop.permute.xlu0 %2170
      %v2172 = vsel %vm430, %v2169, %v2171
      %v2173 = vsel %vm430, %v2171, %v2169
      %v2174 = vsel %vm437, %v2172, 0.0
      %v2175 = vsel %vm438, %v2173, 0.0
      %2176 = vrot.lane.b32.xlu0 %v2109, 112
      %v2177 = vpop.permute.xlu0 %2176
      %2178 = vrot.lane.b32.xlu0 %v2110, 112
      %v2179 = vpop.permute.xlu0 %2178
      %v2180 = vsel %vm445, %v2177, %v2179
      %v2181 = vsel %vm445, %v2179, %v2177
      %v2182 = vsel %vm452, %v2180, 0.0
      %v2183 = vsel %vm453, %v2181, 0.0
      %v2184 = vpack.c.bf16 %v2182, %v2174
      %v2185 = vpack.c.bf16 %v2183, %v2175
      %2186 = vst [vmem:[#allocation2 + $0x30] sm:$0xff] %v2184
      %2187 = vst [vmem:[#allocation2 + $0x38] sm:$0xff] %v2185
      %2188 = vrot.lane.b32.xlu0 %v2109, 111
      %v2189 = vpop.permute.xlu0 %2188
      %2190 = vrot.lane.b32.xlu0 %v2110, 111
      %v2191 = vpop.permute.xlu0 %2190
      %v2192 = vsel %vm464, %v2189, %v2191
      %v2193 = vsel %vm464, %v2191, %v2189
      %v2194 = vsel %vm471, %v2192, 0.0
      %v2195 = vsel %vm472, %v2193, 0.0
      %v2196 = vpack.c.bf16 0.0, %v2194
      %v2197 = vpack.c.bf16 0.0, %v2195
      %2198 = vst [vmem:[#allocation2 + $0x40] sm:$0xff] %v2196
      %2199 = vst [vmem:[#allocation2 + $0x48] sm:$0xff] %v2197
      %v2200 = vld [vmem:[#allocation2] sm:$0xff]
      %v2201 = vld [vmem:[#allocation2 + $0x8] sm:$0xff]
      %v2202 = vld [vmem:[#allocation2 + $0x10] sm:$0xff]
      %v2203 = vld [vmem:[#allocation2 + $0x18] sm:$0xff]
      %v2204 = vld [vmem:[#allocation2 + $0x20] sm:$0xff]
      %v2205 = vld [vmem:[#allocation2 + $0x28] sm:$0xff]
      %v2206 = vld [vmem:[#allocation2 + $0x30] sm:$0xff]
      %v2207 = vld [vmem:[#allocation2 + $0x38] sm:$0xff]
      %v2208 = vld [vmem:[#allocation2 + $0x40] sm:$0xf]
      %v2209 = vld [vmem:[#allocation2 + $0x48] sm:$0xf]
      %2211 = vset.pattern.permute.xlu0 0
      %2212 = vperm.xlu0 %2211, %v2113
      %v2213 = vpop.permute.xlu0 %2212
      %v2216 = vsel %vm494, %v2112, 0
      %v2219 = vsel %vm222, %v2208, 0
      %v2222 = vsel %vm222, %v2209, 0
      %2224 = vmatprep.subr.bf16.mxu0 %v2201
      %2225 = vmatpush1.bf16.msra.mxu0 %v2200
      %2226 = vmatprep.subr.bf16.mxu0 %v2203
      %2227 = vmatpush1.bf16.msra.mxu0 %v2202
      %2228 = vmatprep.subr.bf16.mxu0 %v2205
      %2229 = vmatpush1.bf16.msra.mxu0 %v2204
      %2230 = vmatprep.subr.bf16.mxu0 %v2207
      %2231 = vmatpush1.bf16.msra.mxu0 %v2206
      %2232 = vmatprep.subr.bf16.mxu0 %v2222
      %2233 = vmatpush1.bf16.msra.mxu0 %v2219
      %2234 = vmatprep.subr.bf16.mxu0 0
      %2235 = vmatpush1.bf16.msra.mxu0 0
      %2236 = vmatprep.subr.bf16.mxu0 0
      %2237 = vmatpush1.bf16.msra.mxu0 0
      %2238 = vmatprep.subr.bf16.mxu0 0
      %2239 = vmatpush1.bf16.msra.mxu0 0
      %2240 = vmatprep.subr.bf16.mxu0 0
      %2241 = vmatpush1.bf16.msra.mxu0 0
      %2242 = vmatprep.subr.bf16.mxu0 0
      %2243 = vmatpush1.bf16.msra.mxu0 0
      %2244 = vmatprep.subr.bf16.mxu0 0
      %2245 = vmatpush1.bf16.msra.mxu0 0
      %2246 = vmatprep.subr.bf16.mxu0 0
      %2247 = vmatpush1.bf16.msra.mxu0 0
      %2248 = vmatprep.subr.bf16.mxu0 0
      %2249 = vmatpush1.bf16.msra.mxu0 0
      %2250 = vmatprep.subr.bf16.mxu0 0
      %2251 = vmatpush1.bf16.msra.mxu0 0
      %2252 = vmatprep.subr.bf16.mxu0 0
      %2253 = vmatpush1.bf16.msra.mxu0 0
      %2254 = vmatprep.subr.bf16.mxu0 0
      %2255 = vmatpush1.bf16.msra.mxu0 0
      %2256 = vmatprep.mubr.bf16.mxu0 0
      %2257 = vmatmul.mubr.bf16.gmra.mrb[0].mxu0 %v2216
      %v2258 = vpop.f32.mrb[0].mxu0
      %v2259 = vadd.f32 %v2213, %v2258
      %v2260 = vpop.f32.mrb[0].mxu0
      %v2261 = vadd.f32 %v2213, %v2260
      %v2262 = vpop.f32.mrb[0].mxu0
      %v2263 = vpop.f32.mrb[0].mxu0
      %2264 = vdwg.mxu0
      %v2265 = vmax.f32 %v2259, 0.0
      %v2266 = vmax.f32 %v2261, 0.0
      %2267 = vst [vmem:[%s170] sm:$0xff] %v2265
      %2268 = vst [vmem:[%s170 + $0x8] sm:$0xff] %v2266
      %p2269 = scmp.lt.s32.totalorder %s14, 1
      %s2270 = scalar_select %p2269, %s14, 1
      %s2271 = smul.addr %s2270, 2
      %s2272 = smul.addr %s2271, 8
      %s2273 = scalar_lea.vmem %s3, %s2272
      // Predicated region
      $region33: #{msff_forward.1} parent=31 // pred_check
        %p2274 = pneg %p100
      $region34: #{msff_forward.1} parent=31 // pred_check_branch
        %2276 = sbr.rel (%p2274) target = $region36
      $region35: #{msff_forward.1} parent=31 // pred_region
        _
      $region36: #{msff_forward.1} parent=31 // pred_fallthru
        _
    $region32: #{msff_forward.1} parent=5 // pred_fallthru
      _
    %p2277 = scmp.le.s32.totalorder 2, %s9
    // Predicated region
    $region37: #{msff_forward.1} parent=5 // pred_check
      %p2278 = pneg %p2277
    $region38: #{msff_forward.1} parent=5 // pred_check_branch
      %2280 = sbr.rel (%p2278) target = $region40
    $region39: #{msff_forward.1} parent=5 // pred_region
      %s2281 = ssub.s32 %s9, 2
      // Predicated region
      $region41: #{msff_forward.1} parent=39 // pred_check
        %p2282 = pneg %p106
      $region42: #{msff_forward.1} parent=39 // pred_check_branch
        %2284 = sbr.rel (%p2282) target = $region44
      $region43: #{msff_forward.1} parent=39 // pred_region
        %p2285 = scmp.lt.s32.totalorder %s15, 1
        %s2286 = scalar_select %p2285, %s15, 1
        %s2287 = smul.addr %s2286, 2
        %s2288 = smul.addr %s2287, 8
        %s2289 = scalar_lea.vmem %s3, %s2288
      $region44: #{msff_forward.1} parent=39 // pred_fallthru
        _
    $region40: #{msff_forward.1} parent=5 // pred_fallthru
      _
  $region6: #{msff_forward.1} parent=0 // loop_footer
    %s13 = sadd.s32 1, %s9
  $region7: #{msff_forward.1} parent=0 // loop_footer_branch
    %8 = sbr.rel target = $region3
  $region8: #{msff_forward.1} parent=0 // loop_exit
    _

</llo_original>
